<compile_context>
chip_gen: v5e
topology: v5e:2x2
jax: 0.10.0
libtpu: 0.0.40
codegen_flags: <defaults>
</compile_context>

<pallas_src>
import jax
import jax.numpy as jnp
from jax.experimental import pallas as pl
from jax.experimental.pallas import tpu as pltpu

D_IN = 256 * 256       # fc1 in_features (fixed by the module)
H = 128                # fc1 out_features
D_OUT = 1              # fc2 out_features
NC = 2                 # reduction split: 2 chunks -> both TCs on v7x megacore
TK = 16384             # K tile: (16384, 128) f32 = 8 MiB W1T slab per step


def fc1_partial_kernel(x_ref, w1_ref, o_ref, acc_ref):
    """Accumulates a partial x @ W1T over this chunk's K tiles."""
    k = pl.program_id(1)

    @pl.when(k == 0)
    def _():
        acc_ref[...] = jnp.zeros_like(acc_ref)

    acc_ref[...] += jnp.dot(
        x_ref[...], w1_ref[...], preferred_element_type=jnp.float32
    )

    @pl.when(k == pl.num_programs(1) - 1)
    def _():
        # o_ref block is (1, B, H); write this chunk's partial.
        o_ref[0] = acc_ref[...].astype(o_ref.dtype)


def head_kernel(p_ref, b1_ref, w2_ref, b2_ref, o_ref):
    """Combine chunk partials, bias + ReLU, fc2 as a lane-reduce, + bias."""
    h = jnp.maximum(jnp.sum(p_ref[...], axis=0) + b1_ref[...], 0.0)   # (B, H)
    out = jnp.sum(h * w2_ref[...], axis=-1, keepdims=True)            # (B, 1)
    o_ref[...] = (out + b2_ref[...]).astype(o_ref.dtype)


def yuanshe_forward(x, w1t, b1, w2t, b2):
    """x: (B, 256, 256) or (B, 1, 256, 256) float32. Returns (B, 1)."""
    B = x.shape[0]
    x2 = x.reshape(B, -1)                      # glue: torch's x.view(B, -1)
    assert x2.shape[1] == D_IN
    # NOTE: the batch is taken as a single block; fine for small B.  For large
    # batches, tile B in multiples of 8 to bound VMEM (tightest on v7x).

    KS = D_IN // (NC * TK)                     # K steps per chunk
    assert NC * TK * KS == D_IN

    b1_2d = b1.reshape(1, H)
    w2_row = w2t.reshape(1, H)                 # fc2 weight as a lane vector
    b2_2d = b2.reshape(1, D_OUT)

    cost = pl.CostEstimate(
        flops=2 * B * D_IN * H,
        transcendentals=0,
        bytes_accessed=(D_IN * H + B * D_IN + NC * B * H) * 4,
    )

    # Stage 1: HBM-streaming fc1 matmul, reduction split across NC chunks.
    partials = pl.pallas_call(
        fc1_partial_kernel,
        out_shape=jax.ShapeDtypeStruct((NC, B, H), jnp.float32),
        grid_spec=pltpu.PrefetchScalarGridSpec(
            num_scalar_prefetch=0,
            grid=(NC, KS),
            in_specs=[
                pl.BlockSpec((B, TK), lambda c, k: (0, c * KS + k)),   # x tile
                pl.BlockSpec((TK, H), lambda c, k: (c * KS + k, 0)),   # W1T tile
            ],
            out_specs=pl.BlockSpec((1, B, H), lambda c, k: (c, 0, 0)),
            scratch_shapes=[pltpu.VMEM((B, H), jnp.float32)],
        ),
        compiler_params=pltpu.CompilerParams(
            dimension_semantics=("parallel", "arbitrary"),
            vmem_limit_bytes=48 << 20,
        ),
        cost_estimate=cost,
    )(x2, w1t)

    # Stage 2: tiny epilogue (combine partials + bias + ReLU + fc2 + bias).
    return pl.pallas_call(
        head_kernel,
        out_shape=jax.ShapeDtypeStruct((B, D_OUT), x2.dtype),
        in_specs=[pl.BlockSpec(memory_space=pltpu.MemorySpace.VMEM)] * 4,
        out_specs=pl.BlockSpec(memory_space=pltpu.MemorySpace.VMEM),
    )(partials, b1_2d, w2_row, b2_2d)


def _ref_forward(x, w1t, b1, w2t, b2):
    """Plain-JAX reference mirroring the PyTorch module."""
    B = x.shape[0]
    x2 = x.reshape(B, -1)
    h = jnp.maximum(x2 @ w1t + b1, 0.0)
    return h @ w2t + b2


if __name__ == "__main__":
    key = jax.random.PRNGKey(0)
    kx, kw1, kb1, kw2, kb2 = jax.random.split(key, 5)

    B = 2
    # Input consistent with the module's forward: (B, 256, 256) images,
    # flattened to 65536 features (fc1 in_features is fixed at 256*256).
    x = jax.random.normal(kx, (B, 256, 256), dtype=jnp.float32)

    # Deterministic synthetic parameters (PyTorch shapes: W1 (128, 65536),
    # b1 (128,), W2 (1, 128), b2 (1,)).  Stored transposed for the kernel.
    w1t = jax.random.normal(kw1, (D_IN, H), dtype=jnp.float32) * 0.01
    b1 = jax.random.normal(kb1, (H,), dtype=jnp.float32) * 0.01
    w2t = jax.random.normal(kw2, (H, D_OUT), dtype=jnp.float32) * 0.1
    b2 = jax.random.normal(kb2, (D_OUT,), dtype=jnp.float32) * 0.1

    out = yuanshe_forward(x, w1t, b1, w2t, b2)
    out = jax.block_until_ready(out)
    assert out.shape == (B, 1), out.shape

    ref = _ref_forward(x, w1t, b1, w2t, b2)
    assert jnp.allclose(out, ref, atol=1e-3, rtol=1e-3), (out, ref)

    print("KERNEL_OK")
</pallas_src>

<mosaic_0001>
module attributes {stable_mosaic.version = 11 : i64} {
  func.func @fc1_partial_kernel(%arg0: i32, %arg1: i32, %arg2: memref<2x16384xf32, #tpu.memory_space<vmem>>, %arg3: memref<16384x128xf32, #tpu.memory_space<vmem>>, %arg4: memref<1x2x128xf32, #tpu.memory_space<vmem>>, %arg5: memref<2x128xf32, #tpu.memory_space<vmem>>) attributes {dimension_semantics = [#tpu.dimension_semantics<parallel>, #tpu.dimension_semantics<arbitrary>], iteration_bounds = array<i64: 2, 2>, scalar_prefetch = 0 : i64, scratch_operands = 1 : i64, tpu.core_type = #tpu.core_type<tc>, window_params = [{transform_indices = @transform_0, window_bounds = array<i64: 2, 16384>}, {transform_indices = @transform_1, window_bounds = array<i64: 16384, 128>}, {transform_indices = @transform_2, window_bounds = array<i64: 1, 2, 128>}]} {
    %c0_i32 = arith.constant 0 : i32
    %0 = arith.cmpi eq, %arg1, %c0_i32 : i32
    %1 = arith.extui %0 : i1 to i32
    %c0_i32_0 = arith.constant 0 : i32
    %2 = arith.cmpi ne, %1, %c0_i32_0 : i32
    scf.if %2 {
      %cst_9 = arith.constant 0.000000e+00 : f32
      %12 = vector.broadcast %cst_9 : f32 to vector<2x128xf32>
      %c0_10 = arith.constant 0 : index
      %c0_11 = arith.constant 0 : index
      %13 = vector.load %arg5[%c0_10, %c0_11] : memref<2x128xf32, #tpu.memory_space<vmem>>, vector<2x128xf32>
      tpu.vector_store %arg5[%c0_10, %c0_11], %12 {strides = array<i32>} : memref<2x128xf32, #tpu.memory_space<vmem>>, vector<2x128xf32>,
    } else {
    }
    %c0 = arith.constant 0 : index
    %c0_1 = arith.constant 0 : index
    %3 = vector.load %arg5[%c0, %c0_1] : memref<2x128xf32, #tpu.memory_space<vmem>>, vector<2x128xf32>
    %c0_2 = arith.constant 0 : index
    %c0_3 = arith.constant 0 : index
    %4 = vector.load %arg2[%c0_2, %c0_3] : memref<2x16384xf32, #tpu.memory_space<vmem>>, vector<2x16384xf32>
    %c0_4 = arith.constant 0 : index
    %c0_5 = arith.constant 0 : index
    %5 = vector.load %arg3[%c0_4, %c0_5] : memref<16384x128xf32, #tpu.memory_space<vmem>>, vector<16384x128xf32>
    %cst = arith.constant dense<0.000000e+00> : vector<2x128xf32>
    %6 = tpu.matmul %4, %5, %cst {dimension_numbers = #tpu.dot_dimension_numbers<[1], [0], [0], [1], [0, 0, 1, 1], [], []>} : vector<2x16384xf32>, vector<16384x128xf32>, vector<2x128xf32> -> vector<2x128xf32>
    %7 = arith.addf %3, %6 : vector<2x128xf32>
    %c0_6 = arith.constant 0 : index
    %c0_7 = arith.constant 0 : index
    %8 = vector.load %arg5[%c0_6, %c0_7] : memref<2x128xf32, #tpu.memory_space<vmem>>, vector<2x128xf32>
    tpu.vector_store %arg5[%c0_6, %c0_7], %7 {strides = array<i32>} : memref<2x128xf32, #tpu.memory_space<vmem>>, vector<2x128xf32>,
    %c1_i32 = arith.constant 1 : i32
    %9 = arith.cmpi eq, %arg1, %c1_i32 : i32
    %10 = arith.extui %9 : i1 to i32
    %c0_i32_8 = arith.constant 0 : i32
    %11 = arith.cmpi ne, %10, %c0_i32_8 : i32
    scf.if %11 {
      %c0_9 = arith.constant 0 : index
      %c0_10 = arith.constant 0 : index
      %12 = vector.load %arg5[%c0_9, %c0_10] : memref<2x128xf32, #tpu.memory_space<vmem>>, vector<2x128xf32>
      %c0_11 = arith.constant 0 : index
      %c0_12 = arith.constant 0 : index
      %c0_13 = arith.constant 0 : index
      %13 = vector.load %arg4[%c0_11, %c0_12, %c0_13] : memref<1x2x128xf32, #tpu.memory_space<vmem>>, vector<1x2x128xf32>
      %14 = vector.shape_cast %13 : vector<1x2x128xf32> to vector<2x128xf32>
      %15 = vector.shape_cast %12 : vector<2x128xf32> to vector<1x2x128xf32>
      tpu.vector_store %arg4[%c0_11, %c0_12, %c0_13], %15 {strides = array<i32>} : memref<1x2x128xf32, #tpu.memory_space<vmem>>, vector<1x2x128xf32>,
    } else {
    }
    return
  }
  func.func @transform_0(%arg0: i32, %arg1: i32) -> (i32, i32) {
    %c2_i32 = arith.constant 2 : i32
    %0 = arith.muli %arg0, %c2_i32 : i32
    %1 = arith.addi %0, %arg1 : i32
    %c0_i32 = arith.constant 0 : i32
    %c0_i32_0 = arith.constant 0 : i32
    return %c0_i32, %1 : i32, i32
  }
  func.func @transform_1(%arg0: i32, %arg1: i32) -> (i32, i32) {
    %c2_i32 = arith.constant 2 : i32
    %0 = arith.muli %arg0, %c2_i32 : i32
    %1 = arith.addi %0, %arg1 : i32
    %c0_i32 = arith.constant 0 : i32
    %c0_i32_0 = arith.constant 0 : i32
    return %1, %c0_i32 : i32, i32
  }
  func.func @transform_2(%arg0: i32, %arg1: i32) -> (i32, i32, i32) {
    %c0_i32 = arith.constant 0 : i32
    %c0_i32_0 = arith.constant 0 : i32
    %c0_i32_1 = arith.constant 0 : i32
    return %arg0, %c0_i32, %c0_i32_0 : i32, i32, i32
  }
}

</mosaic_0001>

<llo_original>
// kernel: tpu_custom_call.1
$region0: #{tpu_custom_call.1}
  #allocation0 [shape = 'u32[]', space=smem, size = 0x4, offset = 0x4, fixed_abs, tag = 'smem constant byte address 0x4 - core index']
  #allocation1 [shape = 'u32[72,128]{1,0:T(1,128)}', space=vmem, size = 0x9000, scoped, tag = 'internal scratch']
  #allocation2 [shape = 'f32[2,128]{1,0:T(2,128)}', space=vmem, size = 0x400, scoped, tag = 'scratch operand']
  %s0 = inlined_call_operand.hbm [shape: f32[2,65536], index: 0, kind: input, shape index: {}]
  %s1 = inlined_call_operand.hbm [shape: f32[65536,128], index: 1, kind: input, shape index: {}]
  %s2 = inlined_call_operand.hbm [shape: f32[2,2,128], index: 2, kind: output, shape index: {}]
  %s3 = sld [smem:[#allocation0]]
  $region57: #{tpu_custom_call.1} parent=0
    _
  %s5 = ssub.s32 1, %s3
  %s6 = scalar_select 0, %s5, %s3
  $region1: #{tpu_custom_call.1} parent=0
    #allocation3 [shape = 'u8[262144]{0}', space=vmem, size = 0x40000, scoped, tag = 'input window, operand 0']
    #allocation4 [shape = 's32[2]{0}', space=sflag, size = 0x8, scoped, tag = 'scoped memory for tpu_custom_call.1']
    #allocation5 [shape = 's32[2]{0}', space=sflag, size = 0x8, scoped, tag = 'scoped memory for tpu_custom_call.1']
    #allocation6 [shape = 'u8[16777216]{0}', space=vmem, size = 0x1000000, scoped, tag = 'input window, operand 1']
    #allocation7 [shape = 's32[2]{0}', space=sflag, size = 0x8, scoped, tag = 'scoped memory for tpu_custom_call.1']
    #allocation8 [shape = 'u8[2048]{0}', space=vmem, size = 0x800, scoped, tag = 'output window, operand 0']
    %7 = vsyncpa [#allocation4], 0
    %s8 = scalar_lea.sflag [#allocation4], 1
    %9 = vsyncpa %s8, 0
    %10 = vsyncpa [#allocation7], 0
    %s11 = scalar_lea.sflag [#allocation7], 1
    %12 = vsyncpa %s11, 0
    %13 = vsyncpa [#allocation5], 0
    %s14 = scalar_lea.sflag [#allocation5], 1
    %15 = vsyncpa %s14, 0
    loop: start=0, step=1, limit=6
    $region2: #{tpu_custom_call.1} parent=1 // loop_pre_header
      _
    $region3: #{tpu_custom_call.1} parent=1 // loop_header
      %s17 = sphi 0, %s21
      %p18 = scmp.ge.s32.totalorder %s17, 6
      %s24 = sphi 0, %s36
      %s25 = sphi 0, %s32
      %s26 = sphi 0, %s24
      %s27 = sphi 0, %s25
      %s28 = sphi 0, %s26
      %s29 = sphi 0, %s27
      %s43 = sphi 0, %s45
      %s46 = sphi 0, %s43
      %s47 = sphi 0, %s46
      %s63 = sphi 0, %s47
      %s73 = sphi 0, %s75
      %s76 = sphi 0, %s73
      %s77 = sphi 0, %s76
      %s93 = sphi 0, %s77
      %s99 = sphi 0, %s101
      %s102 = sphi 0, %s99
      %s103 = sphi 0, %s102
      %s119 = sphi 0, %s103
    $region4: #{tpu_custom_call.1} parent=1 // loop_header_branch
      %20 = sbr.rel (%p18) target = $region8
    $region5: #{tpu_custom_call.1} parent=1 // loop_body
      %s22 = ssub.s32 %s17, 1
      %s23 = ssub.s32 %s17, 2
      %s30 = sadd.s32 1, %s25
      %p31 = scmp.ge.s32.totalorder %s30, 2
      %s32 = scalar_select %p31, 0, %s30
      %s33 = sadd.s32 1, %s24
      %s34 = scalar_select %p31, %s33, %s24
      %p35 = scmp.ge.s32.totalorder %s34, 2
      %s36 = scalar_select %p35, 0, %s34
      %s37 = smul.u32 %s24, 2
      %s38 = sadd.s32 %s37, %s25
      %s39 = smul.u32 %s36, 2
      %s40 = sadd.s32 %s39, %s32
      %s41 = ssub.s32 %s38, %s40
      %p42 = scmp.eq.s32.totalorder %s41, 0
      %s44 = sadd.s32 %s43, 1
      %s45 = scalar_select %p42, %s43, %s44
      %p48 = pneg %p42
      %p49 = scmp.eq.s32.totalorder %s17, 3
      %p50 = por %p48, %p49
      %p51 = scmp.ne.s32.totalorder %s43, %s46
      %p52 = scmp.eq.s32.totalorder %s17, 0
      %p53 = por %p51, %p52
      %p54 = scmp.ne.s32.totalorder %s43, %s46
      %p55 = scmp.eq.s32.totalorder %s22, 3
      %p56 = por %p54, %p55
      %p57 = scmp.ne.s32.totalorder %s46, %s47
      %p58 = scmp.eq.s32.totalorder %s22, 0
      %p59 = por %p57, %p58
      %p60 = scmp.ne.s32.totalorder %s46, %s47
      %p61 = scmp.eq.s32.totalorder %s23, 3
      %p62 = por %p60, %p61
      %p64 = scmp.ne.s32.totalorder %s47, %s63
      %p65 = scmp.eq.s32.totalorder %s23, 0
      %p66 = por %p64, %p65
      %s67 = smul.u32 %s24, 2
      %s68 = sadd.s32 %s67, %s25
      %s69 = smul.u32 %s36, 2
      %s70 = sadd.s32 %s69, %s32
      %s71 = ssub.s32 %s68, %s70
      %p72 = scmp.eq.s32.totalorder %s71, 0
      %s74 = sadd.s32 %s73, 1
      %s75 = scalar_select %p72, %s73, %s74
      %p78 = pneg %p72
      %p79 = scmp.eq.s32.totalorder %s17, 3
      %p80 = por %p78, %p79
      %p81 = scmp.ne.s32.totalorder %s73, %s76
      %p82 = scmp.eq.s32.totalorder %s17, 0
      %p83 = por %p81, %p82
      %p84 = scmp.ne.s32.totalorder %s73, %s76
      %p85 = scmp.eq.s32.totalorder %s22, 3
      %p86 = por %p84, %p85
      %p87 = scmp.ne.s32.totalorder %s76, %s77
      %p88 = scmp.eq.s32.totalorder %s22, 0
      %p89 = por %p87, %p88
      %p90 = scmp.ne.s32.totalorder %s76, %s77
      %p91 = scmp.eq.s32.totalorder %s23, 3
      %p92 = por %p90, %p91
      %p94 = scmp.ne.s32.totalorder %s77, %s93
      %p95 = scmp.eq.s32.totalorder %s23, 0
      %p96 = por %p94, %p95
      %s97 = ssub.s32 %s24, %s36
      %p98 = scmp.eq.s32.totalorder %s97, 0
      %s100 = sadd.s32 %s99, 1
      %s101 = scalar_select %p98, %s99, %s100
      %p104 = pneg %p98
      %p105 = scmp.eq.s32.totalorder %s17, 3
      %p106 = por %p104, %p105
      %p107 = scmp.ne.s32.totalorder %s99, %s102
      %p108 = scmp.eq.s32.totalorder %s17, 0
      %p109 = por %p107, %p108
      %p110 = scmp.ne.s32.totalorder %s99, %s102
      %p111 = scmp.eq.s32.totalorder %s22, 3
      %p112 = por %p110, %p111
      %p113 = scmp.ne.s32.totalorder %s102, %s103
      %p114 = scmp.eq.s32.totalorder %s22, 0
      %p115 = por %p113, %p114
      %p116 = scmp.ne.s32.totalorder %s102, %s103
      %p117 = scmp.eq.s32.totalorder %s23, 3
      %p118 = por %p116, %p117
      %p120 = scmp.ne.s32.totalorder %s103, %s119
      %p121 = scmp.eq.s32.totalorder %s23, 0
      %p122 = por %p120, %p121
      %p123 = scmp.le.s32.totalorder 1, %s17
      %p124 = scmp.lt.s32.totalorder %s17, 5
      %p125 = pnand %p123, %p124
      %p126 = pneg %p125
      // Predicated region
      $region9: #{tpu_custom_call.1} parent=5 // pred_check
        _
      $region10: #{tpu_custom_call.1} parent=5 // pred_check_branch
        %128 = sbr.rel (%p125) target = $region12
      $region11: #{tpu_custom_call.1} parent=5 // pred_region
        %s129 = ssub.s32 %s17, 1
      $region12: #{tpu_custom_call.1} parent=5 // pred_fallthru
        _
      %p130 = scmp.lt.s32.totalorder %s17, 4
      // Predicated region
      $region13: #{tpu_custom_call.1} parent=5 // pred_check
        %p131 = pneg %p130
      $region14: #{tpu_custom_call.1} parent=5 // pred_check_branch
        %133 = sbr.rel (%p131) target = $region16
      $region15: #{tpu_custom_call.1} parent=5 // pred_region
        // Predicated region
        $region17: #{tpu_custom_call.1} parent=15 // pred_check
          %p134 = pneg %p53
        $region18: #{tpu_custom_call.1} parent=15 // pred_check_branch
          %136 = sbr.rel (%p134) target = $region20
        $region19: #{tpu_custom_call.1} parent=15 // pred_region
          %s137 = sand.u32 %s43, 1
          %s138 = scalar_lea.sflag [#allocation4], %s137
          %s139 = sand.u32 %s43, 1
          %s140 = smul.addr %s139, 256
          %s141 = scalar_lea.vmem [#allocation3], %s140
          %s142 = smul.u32 %s24, 2
          %s143 = sadd.s32 %s142, %s25
          %s144 = smul.u32 128, %s143
          %146 = vsyncadd %s138, 0
          %s147 = smul.addr %s144, 2
          %s148 = scalar_lea.hbm %s0, %s147
          %s150 = sshll.u32 %s148, 4
          %s151 = int_to_ptr.hbm [resolvable:$true] %s150
          %s152 = sshll.u32 %s141, 4
          %s153 = int_to_ptr.vmem [resolvable:$true] %s152
          %155 = dma.hbm_to_vmem [thread:$0]  %s151, 4096, %s153, %s138
        $region20: #{tpu_custom_call.1} parent=15 // pred_fallthru
          _
        // Predicated region
        $region21: #{tpu_custom_call.1} parent=15 // pred_check
          %p156 = pneg %p83
        $region22: #{tpu_custom_call.1} parent=15 // pred_check_branch
          %158 = sbr.rel (%p156) target = $region24
        $region23: #{tpu_custom_call.1} parent=15 // pred_region
          %s159 = sand.u32 %s73, 1
          %s160 = scalar_lea.sflag [#allocation7], %s159
          %s161 = sand.u32 %s73, 1
          %s162 = smul.addr %s161, 16384
          %s163 = scalar_lea.vmem [#allocation6], %s162
          %s164 = smul.u32 %s24, 2
          %s165 = sadd.s32 %s164, %s25
          %s166 = smul.u32 2048, %s165
          %168 = vsyncadd %s160, 0
          %s169 = smul.addr %s166, 8
          %s170 = scalar_lea.hbm %s1, %s169
          %s171 = sshll.u32 %s170, 4
          %s172 = int_to_ptr.hbm [resolvable:$true] %s171
          %s173 = sshll.u32 %s163, 4
          %s174 = int_to_ptr.vmem [resolvable:$true] %s173
          %179 = dma.hbm_to_vmem [thread:$0]  %s172, 262144, %s174, %s160, 128, 128, 8
        $region24: #{tpu_custom_call.1} parent=15 // pred_fallthru
          _
      $region16: #{tpu_custom_call.1} parent=5 // pred_fallthru
        _
      %p180 = scmp.le.s32.totalorder 1, %s17
      %p181 = scmp.lt.s32.totalorder %s17, 5
      %p182 = pnand %p180, %p181
      %p183 = pneg %p182
      // Predicated region
      $region25: #{tpu_custom_call.1} parent=5 // pred_check
        _
      $region26: #{tpu_custom_call.1} parent=5 // pred_check_branch
        %185 = sbr.rel (%p182) target = $region28
      $region27: #{tpu_custom_call.1} parent=5 // pred_region
        %s186 = ssub.s32 %s17, 1
        %s187 = sand.u32 %s46, 1
        %s188 = scalar_lea.sflag [#allocation4], %s187
        %s189 = sand.u32 %s46, 1
        %s190 = smul.addr %s189, 256
        %s191 = scalar_lea.vmem [#allocation3], %s190
        // Predicated region
        $region29: #{tpu_custom_call.1} parent=27 // pred_check
          %p192 = pneg %p59
        $region30: #{tpu_custom_call.1} parent=27 // pred_check_branch
          %194 = sbr.rel (%p192) target = $region32
        $region31: #{tpu_custom_call.1} parent=27 // pred_region
          %196 = dma.done %s188, 4096
        $region32: #{tpu_custom_call.1} parent=27 // pred_fallthru
          _
        %s197 = sand.u32 %s76, 1
        %s198 = scalar_lea.sflag [#allocation7], %s197
        %s199 = sand.u32 %s76, 1
        %s200 = smul.addr %s199, 16384
        %s201 = scalar_lea.vmem [#allocation6], %s200
        // Predicated region
        $region33: #{tpu_custom_call.1} parent=27 // pred_check
          %p202 = pneg %p89
        $region34: #{tpu_custom_call.1} parent=27 // pred_check_branch
          %204 = sbr.rel (%p202) target = $region36
        $region35: #{tpu_custom_call.1} parent=27 // pred_region
          %206 = dma.done %s198, 262144
        $region36: #{tpu_custom_call.1} parent=27 // pred_fallthru
          _
        %s207 = sand.u32 %s46, 1
        %s208 = scalar_lea.sflag [#allocation4], %s207
        %s209 = sand.u32 %s46, 1
        %s210 = smul.addr %s209, 256
        %s211 = scalar_lea.vmem [#allocation3], %s210
        %p212 = pneg %p59
        %p213 = pneg %p56
        %s214 = sand.u32 %s76, 1
        %s215 = scalar_lea.sflag [#allocation7], %s214
        %s216 = sand.u32 %s76, 1
        %s217 = smul.addr %s216, 16384
        %s218 = scalar_lea.vmem [#allocation6], %s217
        %p219 = pneg %p89
        %p220 = pneg %p86
        %p221 = pneg %p115
        %p222 = pneg %p112
        %s223 = sand.u32 %s102, 1
        %s224 = scalar_lea.sflag [#allocation5], %s223
        %s225 = sand.u32 %s102, 1
        %s226 = smul.addr %s225, 2
        %s227 = scalar_lea.vmem [#allocation8], %s226
        %s228 = smul.u32 %s26, 2
        %s229 = sadd.s32 %s228, %s27
        %s230 = smul.u32 128, %s229
        %s231 = smul.u32 %s26, 2
        %s232 = sadd.s32 %s231, %s27
        %s233 = smul.u32 2048, %s232
        %p234 = scmp.eq.s32.totalorder %s27, 0
        // Predicated region
        $region37: #{tpu_custom_call.1} parent=27 // pred_check
          %p235 = pneg %p234
        $region38: #{tpu_custom_call.1} parent=27 // pred_check_branch
          %237 = sbr.rel (%p235) target = $region40
        $region39: #{tpu_custom_call.1} parent=27 // pred_region
          %238 = vst [vmem:[#allocation2] sm:$0x3] 0.0
        $region40: #{tpu_custom_call.1} parent=27 // pred_fallthru
          _
        %v239 = vld [vmem:[#allocation2] sm:$0x3]
        %v240 = vld [vmem:[%s191] sm:$0xff]
        %v241 = vld [vmem:[%s191 + $0x8] sm:$0xff]
        %v242 = vld [vmem:[%s191 + $0x10] sm:$0xff]
        %v243 = vld [vmem:[%s191 + $0x18] sm:$0xff]
        %v244 = vld [vmem:[%s191 + $0x20] sm:$0xff]
        %v245 = vld [vmem:[%s191 + $0x28] sm:$0xff]
        %v246 = vld [vmem:[%s191 + $0x30] sm:$0xff]
        %v247 = vld [vmem:[%s191 + $0x38] sm:$0xff]
        %v248 = vld [vmem:[%s191 + $0x40] sm:$0xff]
        %v249 = vld [vmem:[%s191 + $0x48] sm:$0xff]
        %v250 = vld [vmem:[%s191 + $0x50] sm:$0xff]
        %v251 = vld [vmem:[%s191 + $0x58] sm:$0xff]
        %v252 = vld [vmem:[%s191 + $0x60] sm:$0xff]
        %v253 = vld [vmem:[%s191 + $0x68] sm:$0xff]
        %v254 = vld [vmem:[%s191 + $0x70] sm:$0xff]
        %v255 = vld [vmem:[%s191 + $0x78] sm:$0xff]
        %v256 = vld [vmem:[%s191 + $0x80] sm:$0xff]
        %v257 = vld [vmem:[%s191 + $0x88] sm:$0xff]
        %v258 = vld [vmem:[%s191 + $0x90] sm:$0xff]
        %v259 = vld [vmem:[%s191 + $0x98] sm:$0xff]
        %v260 = vld [vmem:[%s191 + $0xa0] sm:$0xff]
        %v261 = vld [vmem:[%s191 + $0xa8] sm:$0xff]
        %v262 = vld [vmem:[%s191 + $0xb0] sm:$0xff]
        %v263 = vld [vmem:[%s191 + $0xb8] sm:$0xff]
        %v264 = vld [vmem:[%s191 + $0xc0] sm:$0xff]
        %v265 = vld [vmem:[%s191 + $0xc8] sm:$0xff]
        %v266 = vld [vmem:[%s191 + $0xd0] sm:$0xff]
        %v267 = vld [vmem:[%s191 + $0xd8] sm:$0xff]
        %v268 = vld [vmem:[%s191 + $0xe0] sm:$0xff]
        %v269 = vld [vmem:[%s191 + $0xe8] sm:$0xff]
        %v270 = vld [vmem:[%s191 + $0xf0] sm:$0xff]
        %v271 = vld [vmem:[%s191 + $0xf8] sm:$0xff]
        %v272 = vld [vmem:[%s201] sm:$0xff]
        %v273 = vld [vmem:[%s201 + $0x8] sm:$0xff]
        %v274 = vld [vmem:[%s201 + $0x10] sm:$0xff]
        %v275 = vld [vmem:[%s201 + $0x18] sm:$0xff]
        %v276 = vld [vmem:[%s201 + $0x20] sm:$0xff]
        %v277 = vld [vmem:[%s201 + $0x28] sm:$0xff]
        %v278 = vld [vmem:[%s201 + $0x30] sm:$0xff]
        %v279 = vld [vmem:[%s201 + $0x38] sm:$0xff]
        %v280 = vld [vmem:[%s201 + $0x40] sm:$0xff]
        %v281 = vld [vmem:[%s201 + $0x48] sm:$0xff]
        %v282 = vld [vmem:[%s201 + $0x50] sm:$0xff]
        %v283 = vld [vmem:[%s201 + $0x58] sm:$0xff]
        %v284 = vld [vmem:[%s201 + $0x60] sm:$0xff]
        %v285 = vld [vmem:[%s201 + $0x68] sm:$0xff]
        %v286 = vld [vmem:[%s201 + $0x70] sm:$0xff]
        %v287 = vld [vmem:[%s201 + $0x78] sm:$0xff]
        %v288 = vld [vmem:[%s201 + $0x80] sm:$0xff]
        %v289 = vld [vmem:[%s201 + $0x88] sm:$0xff]
        %v290 = vld [vmem:[%s201 + $0x90] sm:$0xff]
        %v291 = vld [vmem:[%s201 + $0x98] sm:$0xff]
        %v292 = vld [vmem:[%s201 + $0xa0] sm:$0xff]
        %v293 = vld [vmem:[%s201 + $0xa8] sm:$0xff]
        %v294 = vld [vmem:[%s201 + $0xb0] sm:$0xff]
        %v295 = vld [vmem:[%s201 + $0xb8] sm:$0xff]
        %v296 = vld [vmem:[%s201 + $0xc0] sm:$0xff]
        %v297 = vld [vmem:[%s201 + $0xc8] sm:$0xff]
        %v298 = vld [vmem:[%s201 + $0xd0] sm:$0xff]
        %v299 = vld [vmem:[%s201 + $0xd8] sm:$0xff]
        %v300 = vld [vmem:[%s201 + $0xe0] sm:$0xff]
        %v301 = vld [vmem:[%s201 + $0xe8] sm:$0xff]
        %v302 = vld [vmem:[%s201 + $0xf0] sm:$0xff]
        %v303 = vld [vmem:[%s201 + $0xf8] sm:$0xff]
        %v304 = vld [vmem:[%s201 + $0x100] sm:$0xff]
        %v305 = vld [vmem:[%s201 + $0x108] sm:$0xff]
        %v306 = vld [vmem:[%s201 + $0x110] sm:$0xff]
        %v307 = vld [vmem:[%s201 + $0x118] sm:$0xff]
        %v308 = vld [vmem:[%s201 + $0x120] sm:$0xff]
        %v309 = vld [vmem:[%s201 + $0x128] sm:$0xff]
        %v310 = vld [vmem:[%s201 + $0x130] sm:$0xff]
        %v311 = vld [vmem:[%s201 + $0x138] sm:$0xff]
        %v312 = vld [vmem:[%s201 + $0x140] sm:$0xff]
        %v313 = vld [vmem:[%s201 + $0x148] sm:$0xff]
        %v314 = vld [vmem:[%s201 + $0x150] sm:$0xff]
        %v315 = vld [vmem:[%s201 + $0x158] sm:$0xff]
        %v316 = vld [vmem:[%s201 + $0x160] sm:$0xff]
        %v317 = vld [vmem:[%s201 + $0x168] sm:$0xff]
        %v318 = vld [vmem:[%s201 + $0x170] sm:$0xff]
        %v319 = vld [vmem:[%s201 + $0x178] sm:$0xff]
        %v320 = vld [vmem:[%s201 + $0x180] sm:$0xff]
        %v321 = vld [vmem:[%s201 + $0x188] sm:$0xff]
        %v322 = vld [vmem:[%s201 + $0x190] sm:$0xff]
        %v323 = vld [vmem:[%s201 + $0x198] sm:$0xff]
        %v324 = vld [vmem:[%s201 + $0x1a0] sm:$0xff]
        %v325 = vld [vmem:[%s201 + $0x1a8] sm:$0xff]
        %v326 = vld [vmem:[%s201 + $0x1b0] sm:$0xff]
        %v327 = vld [vmem:[%s201 + $0x1b8] sm:$0xff]
        %v328 = vld [vmem:[%s201 + $0x1c0] sm:$0xff]
        %v329 = vld [vmem:[%s201 + $0x1c8] sm:$0xff]
        %v330 = vld [vmem:[%s201 + $0x1d0] sm:$0xff]
        %v331 = vld [vmem:[%s201 + $0x1d8] sm:$0xff]
        %v332 = vld [vmem:[%s201 + $0x1e0] sm:$0xff]
        %v333 = vld [vmem:[%s201 + $0x1e8] sm:$0xff]
        %v334 = vld [vmem:[%s201 + $0x1f0] sm:$0xff]
        %v335 = vld [vmem:[%s201 + $0x1f8] sm:$0xff]
        %v336 = vld [vmem:[%s201 + $0x200] sm:$0xff]
        %v337 = vld [vmem:[%s201 + $0x208] sm:$0xff]
        %v338 = vld [vmem:[%s201 + $0x210] sm:$0xff]
        %v339 = vld [vmem:[%s201 + $0x218] sm:$0xff]
        %v340 = vld [vmem:[%s201 + $0x220] sm:$0xff]
        %v341 = vld [vmem:[%s201 + $0x228] sm:$0xff]
        %v342 = vld [vmem:[%s201 + $0x230] sm:$0xff]
        %v343 = vld [vmem:[%s201 + $0x238] sm:$0xff]
        %v344 = vld [vmem:[%s201 + $0x240] sm:$0xff]
        %v345 = vld [vmem:[%s201 + $0x248] sm:$0xff]
        %v346 = vld [vmem:[%s201 + $0x250] sm:$0xff]
        %v347 = vld [vmem:[%s201 + $0x258] sm:$0xff]
        %v348 = vld [vmem:[%s201 + $0x260] sm:$0xff]
        %v349 = vld [vmem:[%s201 + $0x268] sm:$0xff]
        %v350 = vld [vmem:[%s201 + $0x270] sm:$0xff]
        %v351 = vld [vmem:[%s201 + $0x278] sm:$0xff]
        %v352 = vld [vmem:[%s201 + $0x280] sm:$0xff]
        %v353 = vld [vmem:[%s201 + $0x288] sm:$0xff]
        %v354 = vld [vmem:[%s201 + $0x290] sm:$0xff]
        %v355 = vld [vmem:[%s201 + $0x298] sm:$0xff]
        %v356 = vld [vmem:[%s201 + $0x2a0] sm:$0xff]
        %v357 = vld [vmem:[%s201 + $0x2a8] sm:$0xff]
        %v358 = vld [vmem:[%s201 + $0x2b0] sm:$0xff]
        %v359 = vld [vmem:[%s201 + $0x2b8] sm:$0xff]
        %v360 = vld [vmem:[%s201 + $0x2c0] sm:$0xff]
        %v361 = vld [vmem:[%s201 + $0x2c8] sm:$0xff]
        %v362 = vld [vmem:[%s201 + $0x2d0] sm:$0xff]
        %v363 = vld [vmem:[%s201 + $0x2d8] sm:$0xff]
        %v364 = vld [vmem:[%s201 + $0x2e0] sm:$0xff]
        %v365 = vld [vmem:[%s201 + $0x2e8] sm:$0xff]
        %v366 = vld [vmem:[%s201 + $0x2f0] sm:$0xff]
        %v367 = vld [vmem:[%s201 + $0x2f8] sm:$0xff]
        %v368 = vld [vmem:[%s201 + $0x300] sm:$0xff]
        %v369 = vld [vmem:[%s201 + $0x308] sm:$0xff]
        %v370 = vld [vmem:[%s201 + $0x310] sm:$0xff]
        %v371 = vld [vmem:[%s201 + $0x318] sm:$0xff]
        %v372 = vld [vmem:[%s201 + $0x320] sm:$0xff]
        %v373 = vld [vmem:[%s201 + $0x328] sm:$0xff]
        %v374 = vld [vmem:[%s201 + $0x330] sm:$0xff]
        %v375 = vld [vmem:[%s201 + $0x338] sm:$0xff]
        %v376 = vld [vmem:[%s201 + $0x340] sm:$0xff]
        %v377 = vld [vmem:[%s201 + $0x348] sm:$0xff]
        %v378 = vld [vmem:[%s201 + $0x350] sm:$0xff]
        %v379 = vld [vmem:[%s201 + $0x358] sm:$0xff]
        %v380 = vld [vmem:[%s201 + $0x360] sm:$0xff]
        %v381 = vld [vmem:[%s201 + $0x368] sm:$0xff]
        %v382 = vld [vmem:[%s201 + $0x370] sm:$0xff]
        %v383 = vld [vmem:[%s201 + $0x378] sm:$0xff]
        %v384 = vld [vmem:[%s201 + $0x380] sm:$0xff]
        %v385 = vld [vmem:[%s201 + $0x388] sm:$0xff]
        %v386 = vld [vmem:[%s201 + $0x390] sm:$0xff]
        %v387 = vld [vmem:[%s201 + $0x398] sm:$0xff]
        %v388 = vld [vmem:[%s201 + $0x3a0] sm:$0xff]
        %v389 = vld [vmem:[%s201 + $0x3a8] sm:$0xff]
        %v390 = vld [vmem:[%s201 + $0x3b0] sm:$0xff]
        %v391 = vld [vmem:[%s201 + $0x3b8] sm:$0xff]
        %v392 = vld [vmem:[%s201 + $0x3c0] sm:$0xff]
        %v393 = vld [vmem:[%s201 + $0x3c8] sm:$0xff]
        %v394 = vld [vmem:[%s201 + $0x3d0] sm:$0xff]
        %v395 = vld [vmem:[%s201 + $0x3d8] sm:$0xff]
        %v396 = vld [vmem:[%s201 + $0x3e0] sm:$0xff]
        %v397 = vld [vmem:[%s201 + $0x3e8] sm:$0xff]
        %v398 = vld [vmem:[%s201 + $0x3f0] sm:$0xff]
        %v399 = vld [vmem:[%s201 + $0x3f8] sm:$0xff]
        %v400 = vld [vmem:[%s201 + $0x400] sm:$0xff]
        %v401 = vld [vmem:[%s201 + $0x408] sm:$0xff]
        %v402 = vld [vmem:[%s201 + $0x410] sm:$0xff]
        %v403 = vld [vmem:[%s201 + $0x418] sm:$0xff]
        %v404 = vld [vmem:[%s201 + $0x420] sm:$0xff]
        %v405 = vld [vmem:[%s201 + $0x428] sm:$0xff]
        %v406 = vld [vmem:[%s201 + $0x430] sm:$0xff]
        %v407 = vld [vmem:[%s201 + $0x438] sm:$0xff]
        %v408 = vld [vmem:[%s201 + $0x440] sm:$0xff]
        %v409 = vld [vmem:[%s201 + $0x448] sm:$0xff]
        %v410 = vld [vmem:[%s201 + $0x450] sm:$0xff]
        %v411 = vld [vmem:[%s201 + $0x458] sm:$0xff]
        %v412 = vld [vmem:[%s201 + $0x460] sm:$0xff]
        %v413 = vld [vmem:[%s201 + $0x468] sm:$0xff]
        %v414 = vld [vmem:[%s201 + $0x470] sm:$0xff]
        %v415 = vld [vmem:[%s201 + $0x478] sm:$0xff]
        %v416 = vld [vmem:[%s201 + $0x480] sm:$0xff]
        %v417 = vld [vmem:[%s201 + $0x488] sm:$0xff]
        %v418 = vld [vmem:[%s201 + $0x490] sm:$0xff]
        %v419 = vld [vmem:[%s201 + $0x498] sm:$0xff]
        %v420 = vld [vmem:[%s201 + $0x4a0] sm:$0xff]
        %v421 = vld [vmem:[%s201 + $0x4a8] sm:$0xff]
        %v422 = vld [vmem:[%s201 + $0x4b0] sm:$0xff]
        %v423 = vld [vmem:[%s201 + $0x4b8] sm:$0xff]
        %v424 = vld [vmem:[%s201 + $0x4c0] sm:$0xff]
        %v425 = vld [vmem:[%s201 + $0x4c8] sm:$0xff]
        %v426 = vld [vmem:[%s201 + $0x4d0] sm:$0xff]
        %v427 = vld [vmem:[%s201 + $0x4d8] sm:$0xff]
        %v428 = vld [vmem:[%s201 + $0x4e0] sm:$0xff]
        %v429 = vld [vmem:[%s201 + $0x4e8] sm:$0xff]
        %v430 = vld [vmem:[%s201 + $0x4f0] sm:$0xff]
        %v431 = vld [vmem:[%s201 + $0x4f8] sm:$0xff]
        %v432 = vld [vmem:[%s201 + $0x500] sm:$0xff]
        %v433 = vld [vmem:[%s201 + $0x508] sm:$0xff]
        %v434 = vld [vmem:[%s201 + $0x510] sm:$0xff]
        %v435 = vld [vmem:[%s201 + $0x518] sm:$0xff]
        %v436 = vld [vmem:[%s201 + $0x520] sm:$0xff]
        %v437 = vld [vmem:[%s201 + $0x528] sm:$0xff]
        %v438 = vld [vmem:[%s201 + $0x530] sm:$0xff]
        %v439 = vld [vmem:[%s201 + $0x538] sm:$0xff]
        %v440 = vld [vmem:[%s201 + $0x540] sm:$0xff]
        %v441 = vld [vmem:[%s201 + $0x548] sm:$0xff]
        %v442 = vld [vmem:[%s201 + $0x550] sm:$0xff]
        %v443 = vld [vmem:[%s201 + $0x558] sm:$0xff]
        %v444 = vld [vmem:[%s201 + $0x560] sm:$0xff]
        %v445 = vld [vmem:[%s201 + $0x568] sm:$0xff]
        %v446 = vld [vmem:[%s201 + $0x570] sm:$0xff]
        %v447 = vld [vmem:[%s201 + $0x578] sm:$0xff]
        %v448 = vld [vmem:[%s201 + $0x580] sm:$0xff]
        %v449 = vld [vmem:[%s201 + $0x588] sm:$0xff]
        %v450 = vld [vmem:[%s201 + $0x590] sm:$0xff]
        %v451 = vld [vmem:[%s201 + $0x598] sm:$0xff]
        %v452 = vld [vmem:[%s201 + $0x5a0] sm:$0xff]
        %v453 = vld [vmem:[%s201 + $0x5a8] sm:$0xff]
        %v454 = vld [vmem:[%s201 + $0x5b0] sm:$0xff]
        %v455 = vld [vmem:[%s201 + $0x5b8] sm:$0xff]
        %v456 = vld [vmem:[%s201 + $0x5c0] sm:$0xff]
        %v457 = vld [vmem:[%s201 + $0x5c8] sm:$0xff]
        %v458 = vld [vmem:[%s201 + $0x5d0] sm:$0xff]
        %v459 = vld [vmem:[%s201 + $0x5d8] sm:$0xff]
        %v460 = vld [vmem:[%s201 + $0x5e0] sm:$0xff]
        %v461 = vld [vmem:[%s201 + $0x5e8] sm:$0xff]
        %v462 = vld [vmem:[%s201 + $0x5f0] sm:$0xff]
        %v463 = vld [vmem:[%s201 + $0x5f8] sm:$0xff]
        %v464 = vld [vmem:[%s201 + $0x600] sm:$0xff]
        %v465 = vld [vmem:[%s201 + $0x608] sm:$0xff]
        %v466 = vld [vmem:[%s201 + $0x610] sm:$0xff]
        %v467 = vld [vmem:[%s201 + $0x618] sm:$0xff]
        %v468 = vld [vmem:[%s201 + $0x620] sm:$0xff]
        %v469 = vld [vmem:[%s201 + $0x628] sm:$0xff]
        %v470 = vld [vmem:[%s201 + $0x630] sm:$0xff]
        %v471 = vld [vmem:[%s201 + $0x638] sm:$0xff]
        %v472 = vld [vmem:[%s201 + $0x640] sm:$0xff]
        %v473 = vld [vmem:[%s201 + $0x648] sm:$0xff]
        %v474 = vld [vmem:[%s201 + $0x650] sm:$0xff]
        %v475 = vld [vmem:[%s201 + $0x658] sm:$0xff]
        %v476 = vld [vmem:[%s201 + $0x660] sm:$0xff]
        %v477 = vld [vmem:[%s201 + $0x668] sm:$0xff]
        %v478 = vld [vmem:[%s201 + $0x670] sm:$0xff]
        %v479 = vld [vmem:[%s201 + $0x678] sm:$0xff]
        %v480 = vld [vmem:[%s201 + $0x680] sm:$0xff]
        %v481 = vld [vmem:[%s201 + $0x688] sm:$0xff]
        %v482 = vld [vmem:[%s201 + $0x690] sm:$0xff]
        %v483 = vld [vmem:[%s201 + $0x698] sm:$0xff]
        %v484 = vld [vmem:[%s201 + $0x6a0] sm:$0xff]
        %v485 = vld [vmem:[%s201 + $0x6a8] sm:$0xff]
        %v486 = vld [vmem:[%s201 + $0x6b0] sm:$0xff]
        %v487 = vld [vmem:[%s201 + $0x6b8] sm:$0xff]
        %v488 = vld [vmem:[%s201 + $0x6c0] sm:$0xff]
        %v489 = vld [vmem:[%s201 + $0x6c8] sm:$0xff]
        %v490 = vld [vmem:[%s201 + $0x6d0] sm:$0xff]
        %v491 = vld [vmem:[%s201 + $0x6d8] sm:$0xff]
        %v492 = vld [vmem:[%s201 + $0x6e0] sm:$0xff]
        %v493 = vld [vmem:[%s201 + $0x6e8] sm:$0xff]
        %v494 = vld [vmem:[%s201 + $0x6f0] sm:$0xff]
        %v495 = vld [vmem:[%s201 + $0x6f8] sm:$0xff]
        %v496 = vld [vmem:[%s201 + $0x700] sm:$0xff]
        %v497 = vld [vmem:[%s201 + $0x708] sm:$0xff]
        %v498 = vld [vmem:[%s201 + $0x710] sm:$0xff]
        %v499 = vld [vmem:[%s201 + $0x718] sm:$0xff]
        %v500 = vld [vmem:[%s201 + $0x720] sm:$0xff]
        %v501 = vld [vmem:[%s201 + $0x728] sm:$0xff]
        %v502 = vld [vmem:[%s201 + $0x730] sm:$0xff]
        %v503 = vld [vmem:[%s201 + $0x738] sm:$0xff]
        %v504 = vld [vmem:[%s201 + $0x740] sm:$0xff]
        %v505 = vld [vmem:[%s201 + $0x748] sm:$0xff]
        %v506 = vld [vmem:[%s201 + $0x750] sm:$0xff]
        %v507 = vld [vmem:[%s201 + $0x758] sm:$0xff]
        %v508 = vld [vmem:[%s201 + $0x760] sm:$0xff]
        %v509 = vld [vmem:[%s201 + $0x768] sm:$0xff]
        %v510 = vld [vmem:[%s201 + $0x770] sm:$0xff]
        %v511 = vld [vmem:[%s201 + $0x778] sm:$0xff]
        %v512 = vld [vmem:[%s201 + $0x780] sm:$0xff]
        %v513 = vld [vmem:[%s201 + $0x788] sm:$0xff]
        %v514 = vld [vmem:[%s201 + $0x790] sm:$0xff]
        %v515 = vld [vmem:[%s201 + $0x798] sm:$0xff]
        %v516 = vld [vmem:[%s201 + $0x7a0] sm:$0xff]
        %v517 = vld [vmem:[%s201 + $0x7a8] sm:$0xff]
        %v518 = vld [vmem:[%s201 + $0x7b0] sm:$0xff]
        %v519 = vld [vmem:[%s201 + $0x7b8] sm:$0xff]
        %v520 = vld [vmem:[%s201 + $0x7c0] sm:$0xff]
        %v521 = vld [vmem:[%s201 + $0x7c8] sm:$0xff]
        %v522 = vld [vmem:[%s201 + $0x7d0] sm:$0xff]
        %v523 = vld [vmem:[%s201 + $0x7d8] sm:$0xff]
        %v524 = vld [vmem:[%s201 + $0x7e0] sm:$0xff]
        %v525 = vld [vmem:[%s201 + $0x7e8] sm:$0xff]
        %v526 = vld [vmem:[%s201 + $0x7f0] sm:$0xff]
        %v527 = vld [vmem:[%s201 + $0x7f8] sm:$0xff]
        %v528 = vld [vmem:[%s201 + $0x800] sm:$0xff]
        %v529 = vld [vmem:[%s201 + $0x808] sm:$0xff]
        %v530 = vld [vmem:[%s201 + $0x810] sm:$0xff]
        %v531 = vld [vmem:[%s201 + $0x818] sm:$0xff]
        %v532 = vld [vmem:[%s201 + $0x820] sm:$0xff]
        %v533 = vld [vmem:[%s201 + $0x828] sm:$0xff]
        %v534 = vld [vmem:[%s201 + $0x830] sm:$0xff]
        %v535 = vld [vmem:[%s201 + $0x838] sm:$0xff]
        %v536 = vld [vmem:[%s201 + $0x840] sm:$0xff]
        %v537 = vld [vmem:[%s201 + $0x848] sm:$0xff]
        %v538 = vld [vmem:[%s201 + $0x850] sm:$0xff]
        %v539 = vld [vmem:[%s201 + $0x858] sm:$0xff]
        %v540 = vld [vmem:[%s201 + $0x860] sm:$0xff]
        %v541 = vld [vmem:[%s201 + $0x868] sm:$0xff]
        %v542 = vld [vmem:[%s201 + $0x870] sm:$0xff]
        %v543 = vld [vmem:[%s201 + $0x878] sm:$0xff]
        %v544 = vld [vmem:[%s201 + $0x880] sm:$0xff]
        %v545 = vld [vmem:[%s201 + $0x888] sm:$0xff]
        %v546 = vld [vmem:[%s201 + $0x890] sm:$0xff]
        %v547 = vld [vmem:[%s201 + $0x898] sm:$0xff]
        %v548 = vld [vmem:[%s201 + $0x8a0] sm:$0xff]
        %v549 = vld [vmem:[%s201 + $0x8a8] sm:$0xff]
        %v550 = vld [vmem:[%s201 + $0x8b0] sm:$0xff]
        %v551 = vld [vmem:[%s201 + $0x8b8] sm:$0xff]
        %v552 = vld [vmem:[%s201 + $0x8c0] sm:$0xff]
        %v553 = vld [vmem:[%s201 + $0x8c8] sm:$0xff]
        %v554 = vld [vmem:[%s201 + $0x8d0] sm:$0xff]
        %v555 = vld [vmem:[%s201 + $0x8d8] sm:$0xff]
        %v556 = vld [vmem:[%s201 + $0x8e0] sm:$0xff]
        %v557 = vld [vmem:[%s201 + $0x8e8] sm:$0xff]
        %v558 = vld [vmem:[%s201 + $0x8f0] sm:$0xff]
        %v559 = vld [vmem:[%s201 + $0x8f8] sm:$0xff]
        %v560 = vld [vmem:[%s201 + $0x900] sm:$0xff]
        %v561 = vld [vmem:[%s201 + $0x908] sm:$0xff]
        %v562 = vld [vmem:[%s201 + $0x910] sm:$0xff]
        %v563 = vld [vmem:[%s201 + $0x918] sm:$0xff]
        %v564 = vld [vmem:[%s201 + $0x920] sm:$0xff]
        %v565 = vld [vmem:[%s201 + $0x928] sm:$0xff]
        %v566 = vld [vmem:[%s201 + $0x930] sm:$0xff]
        %v567 = vld [vmem:[%s201 + $0x938] sm:$0xff]
        %v568 = vld [vmem:[%s201 + $0x940] sm:$0xff]
        %v569 = vld [vmem:[%s201 + $0x948] sm:$0xff]
        %v570 = vld [vmem:[%s201 + $0x950] sm:$0xff]
        %v571 = vld [vmem:[%s201 + $0x958] sm:$0xff]
        %v572 = vld [vmem:[%s201 + $0x960] sm:$0xff]
        %v573 = vld [vmem:[%s201 + $0x968] sm:$0xff]
        %v574 = vld [vmem:[%s201 + $0x970] sm:$0xff]
        %v575 = vld [vmem:[%s201 + $0x978] sm:$0xff]
        %v576 = vld [vmem:[%s201 + $0x980] sm:$0xff]
        %v577 = vld [vmem:[%s201 + $0x988] sm:$0xff]
        %v578 = vld [vmem:[%s201 + $0x990] sm:$0xff]
        %v579 = vld [vmem:[%s201 + $0x998] sm:$0xff]
        %v580 = vld [vmem:[%s201 + $0x9a0] sm:$0xff]
        %v581 = vld [vmem:[%s201 + $0x9a8] sm:$0xff]
        %v582 = vld [vmem:[%s201 + $0x9b0] sm:$0xff]
        %v583 = vld [vmem:[%s201 + $0x9b8] sm:$0xff]
        %v584 = vld [vmem:[%s201 + $0x9c0] sm:$0xff]
        %v585 = vld [vmem:[%s201 + $0x9c8] sm:$0xff]
        %v586 = vld [vmem:[%s201 + $0x9d0] sm:$0xff]
        %v587 = vld [vmem:[%s201 + $0x9d8] sm:$0xff]
        %v588 = vld [vmem:[%s201 + $0x9e0] sm:$0xff]
        %v589 = vld [vmem:[%s201 + $0x9e8] sm:$0xff]
        %v590 = vld [vmem:[%s201 + $0x9f0] sm:$0xff]
        %v591 = vld [vmem:[%s201 + $0x9f8] sm:$0xff]
        %v592 = vld [vmem:[%s201 + $0xa00] sm:$0xff]
        %v593 = vld [vmem:[%s201 + $0xa08] sm:$0xff]
        %v594 = vld [vmem:[%s201 + $0xa10] sm:$0xff]
        %v595 = vld [vmem:[%s201 + $0xa18] sm:$0xff]
        %v596 = vld [vmem:[%s201 + $0xa20] sm:$0xff]
        %v597 = vld [vmem:[%s201 + $0xa28] sm:$0xff]
        %v598 = vld [vmem:[%s201 + $0xa30] sm:$0xff]
        %v599 = vld [vmem:[%s201 + $0xa38] sm:$0xff]
        %v600 = vld [vmem:[%s201 + $0xa40] sm:$0xff]
        %v601 = vld [vmem:[%s201 + $0xa48] sm:$0xff]
        %v602 = vld [vmem:[%s201 + $0xa50] sm:$0xff]
        %v603 = vld [vmem:[%s201 + $0xa58] sm:$0xff]
        %v604 = vld [vmem:[%s201 + $0xa60] sm:$0xff]
        %v605 = vld [vmem:[%s201 + $0xa68] sm:$0xff]
        %v606 = vld [vmem:[%s201 + $0xa70] sm:$0xff]
        %v607 = vld [vmem:[%s201 + $0xa78] sm:$0xff]
        %v608 = vld [vmem:[%s201 + $0xa80] sm:$0xff]
        %v609 = vld [vmem:[%s201 + $0xa88] sm:$0xff]
        %v610 = vld [vmem:[%s201 + $0xa90] sm:$0xff]
        %v611 = vld [vmem:[%s201 + $0xa98] sm:$0xff]
        %v612 = vld [vmem:[%s201 + $0xaa0] sm:$0xff]
        %v613 = vld [vmem:[%s201 + $0xaa8] sm:$0xff]
        %v614 = vld [vmem:[%s201 + $0xab0] sm:$0xff]
        %v615 = vld [vmem:[%s201 + $0xab8] sm:$0xff]
        %v616 = vld [vmem:[%s201 + $0xac0] sm:$0xff]
        %v617 = vld [vmem:[%s201 + $0xac8] sm:$0xff]
        %v618 = vld [vmem:[%s201 + $0xad0] sm:$0xff]
        %v619 = vld [vmem:[%s201 + $0xad8] sm:$0xff]
        %v620 = vld [vmem:[%s201 + $0xae0] sm:$0xff]
        %v621 = vld [vmem:[%s201 + $0xae8] sm:$0xff]
        %v622 = vld [vmem:[%s201 + $0xaf0] sm:$0xff]
        %v623 = vld [vmem:[%s201 + $0xaf8] sm:$0xff]
        %v624 = vld [vmem:[%s201 + $0xb00] sm:$0xff]
        %v625 = vld [vmem:[%s201 + $0xb08] sm:$0xff]
        %v626 = vld [vmem:[%s201 + $0xb10] sm:$0xff]
        %v627 = vld [vmem:[%s201 + $0xb18] sm:$0xff]
        %v628 = vld [vmem:[%s201 + $0xb20] sm:$0xff]
        %v629 = vld [vmem:[%s201 + $0xb28] sm:$0xff]
        %v630 = vld [vmem:[%s201 + $0xb30] sm:$0xff]
        %v631 = vld [vmem:[%s201 + $0xb38] sm:$0xff]
        %v632 = vld [vmem:[%s201 + $0xb40] sm:$0xff]
        %v633 = vld [vmem:[%s201 + $0xb48] sm:$0xff]
        %v634 = vld [vmem:[%s201 + $0xb50] sm:$0xff]
        %v635 = vld [vmem:[%s201 + $0xb58] sm:$0xff]
        %v636 = vld [vmem:[%s201 + $0xb60] sm:$0xff]
        %v637 = vld [vmem:[%s201 + $0xb68] sm:$0xff]
        %v638 = vld [vmem:[%s201 + $0xb70] sm:$0xff]
        %v639 = vld [vmem:[%s201 + $0xb78] sm:$0xff]
        %v640 = vld [vmem:[%s201 + $0xb80] sm:$0xff]
        %v641 = vld [vmem:[%s201 + $0xb88] sm:$0xff]
        %v642 = vld [vmem:[%s201 + $0xb90] sm:$0xff]
        %v643 = vld [vmem:[%s201 + $0xb98] sm:$0xff]
        %v644 = vld [vmem:[%s201 + $0xba0] sm:$0xff]
        %v645 = vld [vmem:[%s201 + $0xba8] sm:$0xff]
        %v646 = vld [vmem:[%s201 + $0xbb0] sm:$0xff]
        %v647 = vld [vmem:[%s201 + $0xbb8] sm:$0xff]
        %v648 = vld [vmem:[%s201 + $0xbc0] sm:$0xff]
        %v649 = vld [vmem:[%s201 + $0xbc8] sm:$0xff]
        %v650 = vld [vmem:[%s201 + $0xbd0] sm:$0xff]
        %v651 = vld [vmem:[%s201 + $0xbd8] sm:$0xff]
        %v652 = vld [vmem:[%s201 + $0xbe0] sm:$0xff]
        %v653 = vld [vmem:[%s201 + $0xbe8] sm:$0xff]
        %v654 = vld [vmem:[%s201 + $0xbf0] sm:$0xff]
        %v655 = vld [vmem:[%s201 + $0xbf8] sm:$0xff]
        %v656 = vld [vmem:[%s201 + $0xc00] sm:$0xff]
        %v657 = vld [vmem:[%s201 + $0xc08] sm:$0xff]
        %v658 = vld [vmem:[%s201 + $0xc10] sm:$0xff]
        %v659 = vld [vmem:[%s201 + $0xc18] sm:$0xff]
        %v660 = vld [vmem:[%s201 + $0xc20] sm:$0xff]
        %v661 = vld [vmem:[%s201 + $0xc28] sm:$0xff]
        %v662 = vld [vmem:[%s201 + $0xc30] sm:$0xff]
        %v663 = vld [vmem:[%s201 + $0xc38] sm:$0xff]
        %v664 = vld [vmem:[%s201 + $0xc40] sm:$0xff]
        %v665 = vld [vmem:[%s201 + $0xc48] sm:$0xff]
        %v666 = vld [vmem:[%s201 + $0xc50] sm:$0xff]
        %v667 = vld [vmem:[%s201 + $0xc58] sm:$0xff]
        %v668 = vld [vmem:[%s201 + $0xc60] sm:$0xff]
        %v669 = vld [vmem:[%s201 + $0xc68] sm:$0xff]
        %v670 = vld [vmem:[%s201 + $0xc70] sm:$0xff]
        %v671 = vld [vmem:[%s201 + $0xc78] sm:$0xff]
        %v672 = vld [vmem:[%s201 + $0xc80] sm:$0xff]
        %v673 = vld [vmem:[%s201 + $0xc88] sm:$0xff]
        %v674 = vld [vmem:[%s201 + $0xc90] sm:$0xff]
        %v675 = vld [vmem:[%s201 + $0xc98] sm:$0xff]
        %v676 = vld [vmem:[%s201 + $0xca0] sm:$0xff]
        %v677 = vld [vmem:[%s201 + $0xca8] sm:$0xff]
        %v678 = vld [vmem:[%s201 + $0xcb0] sm:$0xff]
        %v679 = vld [vmem:[%s201 + $0xcb8] sm:$0xff]
        %v680 = vld [vmem:[%s201 + $0xcc0] sm:$0xff]
        %v681 = vld [vmem:[%s201 + $0xcc8] sm:$0xff]
        %v682 = vld [vmem:[%s201 + $0xcd0] sm:$0xff]
        %v683 = vld [vmem:[%s201 + $0xcd8] sm:$0xff]
        %v684 = vld [vmem:[%s201 + $0xce0] sm:$0xff]
        %v685 = vld [vmem:[%s201 + $0xce8] sm:$0xff]
        %v686 = vld [vmem:[%s201 + $0xcf0] sm:$0xff]
        %v687 = vld [vmem:[%s201 + $0xcf8] sm:$0xff]
        %v688 = vld [vmem:[%s201 + $0xd00] sm:$0xff]
        %v689 = vld [vmem:[%s201 + $0xd08] sm:$0xff]
        %v690 = vld [vmem:[%s201 + $0xd10] sm:$0xff]
        %v691 = vld [vmem:[%s201 + $0xd18] sm:$0xff]
        %v692 = vld [vmem:[%s201 + $0xd20] sm:$0xff]
        %v693 = vld [vmem:[%s201 + $0xd28] sm:$0xff]
        %v694 = vld [vmem:[%s201 + $0xd30] sm:$0xff]
        %v695 = vld [vmem:[%s201 + $0xd38] sm:$0xff]
        %v696 = vld [vmem:[%s201 + $0xd40] sm:$0xff]
        %v697 = vld [vmem:[%s201 + $0xd48] sm:$0xff]
        %v698 = vld [vmem:[%s201 + $0xd50] sm:$0xff]
        %v699 = vld [vmem:[%s201 + $0xd58] sm:$0xff]
        %v700 = vld [vmem:[%s201 + $0xd60] sm:$0xff]
        %v701 = vld [vmem:[%s201 + $0xd68] sm:$0xff]
        %v702 = vld [vmem:[%s201 + $0xd70] sm:$0xff]
        %v703 = vld [vmem:[%s201 + $0xd78] sm:$0xff]
        %v704 = vld [vmem:[%s201 + $0xd80] sm:$0xff]
        %v705 = vld [vmem:[%s201 + $0xd88] sm:$0xff]
        %v706 = vld [vmem:[%s201 + $0xd90] sm:$0xff]
        %v707 = vld [vmem:[%s201 + $0xd98] sm:$0xff]
        %v708 = vld [vmem:[%s201 + $0xda0] sm:$0xff]
        %v709 = vld [vmem:[%s201 + $0xda8] sm:$0xff]
        %v710 = vld [vmem:[%s201 + $0xdb0] sm:$0xff]
        %v711 = vld [vmem:[%s201 + $0xdb8] sm:$0xff]
        %v712 = vld [vmem:[%s201 + $0xdc0] sm:$0xff]
        %v713 = vld [vmem:[%s201 + $0xdc8] sm:$0xff]
        %v714 = vld [vmem:[%s201 + $0xdd0] sm:$0xff]
        %v715 = vld [vmem:[%s201 + $0xdd8] sm:$0xff]
        %v716 = vld [vmem:[%s201 + $0xde0] sm:$0xff]
        %v717 = vld [vmem:[%s201 + $0xde8] sm:$0xff]
        %v718 = vld [vmem:[%s201 + $0xdf0] sm:$0xff]
        %v719 = vld [vmem:[%s201 + $0xdf8] sm:$0xff]
        %v720 = vld [vmem:[%s201 + $0xe00] sm:$0xff]
        %v721 = vld [vmem:[%s201 + $0xe08] sm:$0xff]
        %v722 = vld [vmem:[%s201 + $0xe10] sm:$0xff]
        %v723 = vld [vmem:[%s201 + $0xe18] sm:$0xff]
        %v724 = vld [vmem:[%s201 + $0xe20] sm:$0xff]
        %v725 = vld [vmem:[%s201 + $0xe28] sm:$0xff]
        %v726 = vld [vmem:[%s201 + $0xe30] sm:$0xff]
        %v727 = vld [vmem:[%s201 + $0xe38] sm:$0xff]
        %v728 = vld [vmem:[%s201 + $0xe40] sm:$0xff]
        %v729 = vld [vmem:[%s201 + $0xe48] sm:$0xff]
        %v730 = vld [vmem:[%s201 + $0xe50] sm:$0xff]
        %v731 = vld [vmem:[%s201 + $0xe58] sm:$0xff]
        %v732 = vld [vmem:[%s201 + $0xe60] sm:$0xff]
        %v733 = vld [vmem:[%s201 + $0xe68] sm:$0xff]
        %v734 = vld [vmem:[%s201 + $0xe70] sm:$0xff]
        %v735 = vld [vmem:[%s201 + $0xe78] sm:$0xff]
        %v736 = vld [vmem:[%s201 + $0xe80] sm:$0xff]
        %v737 = vld [vmem:[%s201 + $0xe88] sm:$0xff]
        %v738 = vld [vmem:[%s201 + $0xe90] sm:$0xff]
        %v739 = vld [vmem:[%s201 + $0xe98] sm:$0xff]
        %v740 = vld [vmem:[%s201 + $0xea0] sm:$0xff]
        %v741 = vld [vmem:[%s201 + $0xea8] sm:$0xff]
        %v742 = vld [vmem:[%s201 + $0xeb0] sm:$0xff]
        %v743 = vld [vmem:[%s201 + $0xeb8] sm:$0xff]
        %v744 = vld [vmem:[%s201 + $0xec0] sm:$0xff]
        %v745 = vld [vmem:[%s201 + $0xec8] sm:$0xff]
        %v746 = vld [vmem:[%s201 + $0xed0] sm:$0xff]
        %v747 = vld [vmem:[%s201 + $0xed8] sm:$0xff]
        %v748 = vld [vmem:[%s201 + $0xee0] sm:$0xff]
        %v749 = vld [vmem:[%s201 + $0xee8] sm:$0xff]
        %v750 = vld [vmem:[%s201 + $0xef0] sm:$0xff]
        %v751 = vld [vmem:[%s201 + $0xef8] sm:$0xff]
        %v752 = vld [vmem:[%s201 + $0xf00] sm:$0xff]
        %v753 = vld [vmem:[%s201 + $0xf08] sm:$0xff]
        %v754 = vld [vmem:[%s201 + $0xf10] sm:$0xff]
        %v755 = vld [vmem:[%s201 + $0xf18] sm:$0xff]
        %v756 = vld [vmem:[%s201 + $0xf20] sm:$0xff]
        %v757 = vld [vmem:[%s201 + $0xf28] sm:$0xff]
        %v758 = vld [vmem:[%s201 + $0xf30] sm:$0xff]
        %v759 = vld [vmem:[%s201 + $0xf38] sm:$0xff]
        %v760 = vld [vmem:[%s201 + $0xf40] sm:$0xff]
        %v761 = vld [vmem:[%s201 + $0xf48] sm:$0xff]
        %v762 = vld [vmem:[%s201 + $0xf50] sm:$0xff]
        %v763 = vld [vmem:[%s201 + $0xf58] sm:$0xff]
        %v764 = vld [vmem:[%s201 + $0xf60] sm:$0xff]
        %v765 = vld [vmem:[%s201 + $0xf68] sm:$0xff]
        %v766 = vld [vmem:[%s201 + $0xf70] sm:$0xff]
        %v767 = vld [vmem:[%s201 + $0xf78] sm:$0xff]
        %v768 = vld [vmem:[%s201 + $0xf80] sm:$0xff]
        %v769 = vld [vmem:[%s201 + $0xf88] sm:$0xff]
        %v770 = vld [vmem:[%s201 + $0xf90] sm:$0xff]
        %v771 = vld [vmem:[%s201 + $0xf98] sm:$0xff]
        %v772 = vld [vmem:[%s201 + $0xfa0] sm:$0xff]
        %v773 = vld [vmem:[%s201 + $0xfa8] sm:$0xff]
        %v774 = vld [vmem:[%s201 + $0xfb0] sm:$0xff]
        %v775 = vld [vmem:[%s201 + $0xfb8] sm:$0xff]
        %v776 = vld [vmem:[%s201 + $0xfc0] sm:$0xff]
        %v777 = vld [vmem:[%s201 + $0xfc8] sm:$0xff]
        %v778 = vld [vmem:[%s201 + $0xfd0] sm:$0xff]
        %v779 = vld [vmem:[%s201 + $0xfd8] sm:$0xff]
        %v780 = vld [vmem:[%s201 + $0xfe0] sm:$0xff]
        %v781 = vld [vmem:[%s201 + $0xfe8] sm:$0xff]
        %v782 = vld [vmem:[%s201 + $0xff0] sm:$0xff]
        %v783 = vld [vmem:[%s201 + $0xff8] sm:$0xff]
        %v784 = vld [vmem:[%s201 + $0x1000] sm:$0xff]
        %v785 = vld [vmem:[%s201 + $0x1008] sm:$0xff]
        %v786 = vld [vmem:[%s201 + $0x1010] sm:$0xff]
        %v787 = vld [vmem:[%s201 + $0x1018] sm:$0xff]
        %v788 = vld [vmem:[%s201 + $0x1020] sm:$0xff]
        %v789 = vld [vmem:[%s201 + $0x1028] sm:$0xff]
        %v790 = vld [vmem:[%s201 + $0x1030] sm:$0xff]
        %v791 = vld [vmem:[%s201 + $0x1038] sm:$0xff]
        %v792 = vld [vmem:[%s201 + $0x1040] sm:$0xff]
        %v793 = vld [vmem:[%s201 + $0x1048] sm:$0xff]
        %v794 = vld [vmem:[%s201 + $0x1050] sm:$0xff]
        %v795 = vld [vmem:[%s201 + $0x1058] sm:$0xff]
        %v796 = vld [vmem:[%s201 + $0x1060] sm:$0xff]
        %v797 = vld [vmem:[%s201 + $0x1068] sm:$0xff]
        %v798 = vld [vmem:[%s201 + $0x1070] sm:$0xff]
        %v799 = vld [vmem:[%s201 + $0x1078] sm:$0xff]
        %v800 = vld [vmem:[%s201 + $0x1080] sm:$0xff]
        %v801 = vld [vmem:[%s201 + $0x1088] sm:$0xff]
        %v802 = vld [vmem:[%s201 + $0x1090] sm:$0xff]
        %v803 = vld [vmem:[%s201 + $0x1098] sm:$0xff]
        %v804 = vld [vmem:[%s201 + $0x10a0] sm:$0xff]
        %v805 = vld [vmem:[%s201 + $0x10a8] sm:$0xff]
        %v806 = vld [vmem:[%s201 + $0x10b0] sm:$0xff]
        %v807 = vld [vmem:[%s201 + $0x10b8] sm:$0xff]
        %v808 = vld [vmem:[%s201 + $0x10c0] sm:$0xff]
        %v809 = vld [vmem:[%s201 + $0x10c8] sm:$0xff]
        %v810 = vld [vmem:[%s201 + $0x10d0] sm:$0xff]
        %v811 = vld [vmem:[%s201 + $0x10d8] sm:$0xff]
        %v812 = vld [vmem:[%s201 + $0x10e0] sm:$0xff]
        %v813 = vld [vmem:[%s201 + $0x10e8] sm:$0xff]
        %v814 = vld [vmem:[%s201 + $0x10f0] sm:$0xff]
        %v815 = vld [vmem:[%s201 + $0x10f8] sm:$0xff]
        %v816 = vld [vmem:[%s201 + $0x1100] sm:$0xff]
        %v817 = vld [vmem:[%s201 + $0x1108] sm:$0xff]
        %v818 = vld [vmem:[%s201 + $0x1110] sm:$0xff]
        %v819 = vld [vmem:[%s201 + $0x1118] sm:$0xff]
        %v820 = vld [vmem:[%s201 + $0x1120] sm:$0xff]
        %v821 = vld [vmem:[%s201 + $0x1128] sm:$0xff]
        %v822 = vld [vmem:[%s201 + $0x1130] sm:$0xff]
        %v823 = vld [vmem:[%s201 + $0x1138] sm:$0xff]
        %v824 = vld [vmem:[%s201 + $0x1140] sm:$0xff]
        %v825 = vld [vmem:[%s201 + $0x1148] sm:$0xff]
        %v826 = vld [vmem:[%s201 + $0x1150] sm:$0xff]
        %v827 = vld [vmem:[%s201 + $0x1158] sm:$0xff]
        %v828 = vld [vmem:[%s201 + $0x1160] sm:$0xff]
        %v829 = vld [vmem:[%s201 + $0x1168] sm:$0xff]
        %v830 = vld [vmem:[%s201 + $0x1170] sm:$0xff]
        %v831 = vld [vmem:[%s201 + $0x1178] sm:$0xff]
        %v832 = vld [vmem:[%s201 + $0x1180] sm:$0xff]
        %v833 = vld [vmem:[%s201 + $0x1188] sm:$0xff]
        %v834 = vld [vmem:[%s201 + $0x1190] sm:$0xff]
        %v835 = vld [vmem:[%s201 + $0x1198] sm:$0xff]
        %v836 = vld [vmem:[%s201 + $0x11a0] sm:$0xff]
        %v837 = vld [vmem:[%s201 + $0x11a8] sm:$0xff]
        %v838 = vld [vmem:[%s201 + $0x11b0] sm:$0xff]
        %v839 = vld [vmem:[%s201 + $0x11b8] sm:$0xff]
        %v840 = vld [vmem:[%s201 + $0x11c0] sm:$0xff]
        %v841 = vld [vmem:[%s201 + $0x11c8] sm:$0xff]
        %v842 = vld [vmem:[%s201 + $0x11d0] sm:$0xff]
        %v843 = vld [vmem:[%s201 + $0x11d8] sm:$0xff]
        %v844 = vld [vmem:[%s201 + $0x11e0] sm:$0xff]
        %v845 = vld [vmem:[%s201 + $0x11e8] sm:$0xff]
        %v846 = vld [vmem:[%s201 + $0x11f0] sm:$0xff]
        %v847 = vld [vmem:[%s201 + $0x11f8] sm:$0xff]
        %v848 = vld [vmem:[%s201 + $0x1200] sm:$0xff]
        %v849 = vld [vmem:[%s201 + $0x1208] sm:$0xff]
        %v850 = vld [vmem:[%s201 + $0x1210] sm:$0xff]
        %v851 = vld [vmem:[%s201 + $0x1218] sm:$0xff]
        %v852 = vld [vmem:[%s201 + $0x1220] sm:$0xff]
        %v853 = vld [vmem:[%s201 + $0x1228] sm:$0xff]
        %v854 = vld [vmem:[%s201 + $0x1230] sm:$0xff]
        %v855 = vld [vmem:[%s201 + $0x1238] sm:$0xff]
        %v856 = vld [vmem:[%s201 + $0x1240] sm:$0xff]
        %v857 = vld [vmem:[%s201 + $0x1248] sm:$0xff]
        %v858 = vld [vmem:[%s201 + $0x1250] sm:$0xff]
        %v859 = vld [vmem:[%s201 + $0x1258] sm:$0xff]
        %v860 = vld [vmem:[%s201 + $0x1260] sm:$0xff]
        %v861 = vld [vmem:[%s201 + $0x1268] sm:$0xff]
        %v862 = vld [vmem:[%s201 + $0x1270] sm:$0xff]
        %v863 = vld [vmem:[%s201 + $0x1278] sm:$0xff]
        %v864 = vld [vmem:[%s201 + $0x1280] sm:$0xff]
        %v865 = vld [vmem:[%s201 + $0x1288] sm:$0xff]
        %v866 = vld [vmem:[%s201 + $0x1290] sm:$0xff]
        %v867 = vld [vmem:[%s201 + $0x1298] sm:$0xff]
        %v868 = vld [vmem:[%s201 + $0x12a0] sm:$0xff]
        %v869 = vld [vmem:[%s201 + $0x12a8] sm:$0xff]
        %v870 = vld [vmem:[%s201 + $0x12b0] sm:$0xff]
        %v871 = vld [vmem:[%s201 + $0x12b8] sm:$0xff]
        %v872 = vld [vmem:[%s201 + $0x12c0] sm:$0xff]
        %v873 = vld [vmem:[%s201 + $0x12c8] sm:$0xff]
        %v874 = vld [vmem:[%s201 + $0x12d0] sm:$0xff]
        %v875 = vld [vmem:[%s201 + $0x12d8] sm:$0xff]
        %v876 = vld [vmem:[%s201 + $0x12e0] sm:$0xff]
        %v877 = vld [vmem:[%s201 + $0x12e8] sm:$0xff]
        %v878 = vld [vmem:[%s201 + $0x12f0] sm:$0xff]
        %v879 = vld [vmem:[%s201 + $0x12f8] sm:$0xff]
        %v880 = vld [vmem:[%s201 + $0x1300] sm:$0xff]
        %v881 = vld [vmem:[%s201 + $0x1308] sm:$0xff]
        %v882 = vld [vmem:[%s201 + $0x1310] sm:$0xff]
        %v883 = vld [vmem:[%s201 + $0x1318] sm:$0xff]
        %v884 = vld [vmem:[%s201 + $0x1320] sm:$0xff]
        %v885 = vld [vmem:[%s201 + $0x1328] sm:$0xff]
        %v886 = vld [vmem:[%s201 + $0x1330] sm:$0xff]
        %v887 = vld [vmem:[%s201 + $0x1338] sm:$0xff]
        %v888 = vld [vmem:[%s201 + $0x1340] sm:$0xff]
        %v889 = vld [vmem:[%s201 + $0x1348] sm:$0xff]
        %v890 = vld [vmem:[%s201 + $0x1350] sm:$0xff]
        %v891 = vld [vmem:[%s201 + $0x1358] sm:$0xff]
        %v892 = vld [vmem:[%s201 + $0x1360] sm:$0xff]
        %v893 = vld [vmem:[%s201 + $0x1368] sm:$0xff]
        %v894 = vld [vmem:[%s201 + $0x1370] sm:$0xff]
        %v895 = vld [vmem:[%s201 + $0x1378] sm:$0xff]
        %v896 = vld [vmem:[%s201 + $0x1380] sm:$0xff]
        %v897 = vld [vmem:[%s201 + $0x1388] sm:$0xff]
        %v898 = vld [vmem:[%s201 + $0x1390] sm:$0xff]
        %v899 = vld [vmem:[%s201 + $0x1398] sm:$0xff]
        %v900 = vld [vmem:[%s201 + $0x13a0] sm:$0xff]
        %v901 = vld [vmem:[%s201 + $0x13a8] sm:$0xff]
        %v902 = vld [vmem:[%s201 + $0x13b0] sm:$0xff]
        %v903 = vld [vmem:[%s201 + $0x13b8] sm:$0xff]
        %v904 = vld [vmem:[%s201 + $0x13c0] sm:$0xff]
        %v905 = vld [vmem:[%s201 + $0x13c8] sm:$0xff]
        %v906 = vld [vmem:[%s201 + $0x13d0] sm:$0xff]
        %v907 = vld [vmem:[%s201 + $0x13d8] sm:$0xff]
        %v908 = vld [vmem:[%s201 + $0x13e0] sm:$0xff]
        %v909 = vld [vmem:[%s201 + $0x13e8] sm:$0xff]
        %v910 = vld [vmem:[%s201 + $0x13f0] sm:$0xff]
        %v911 = vld [vmem:[%s201 + $0x13f8] sm:$0xff]
        %v912 = vld [vmem:[%s201 + $0x1400] sm:$0xff]
        %v913 = vld [vmem:[%s201 + $0x1408] sm:$0xff]
        %v914 = vld [vmem:[%s201 + $0x1410] sm:$0xff]
        %v915 = vld [vmem:[%s201 + $0x1418] sm:$0xff]
        %v916 = vld [vmem:[%s201 + $0x1420] sm:$0xff]
        %v917 = vld [vmem:[%s201 + $0x1428] sm:$0xff]
        %v918 = vld [vmem:[%s201 + $0x1430] sm:$0xff]
        %v919 = vld [vmem:[%s201 + $0x1438] sm:$0xff]
        %v920 = vld [vmem:[%s201 + $0x1440] sm:$0xff]
        %v921 = vld [vmem:[%s201 + $0x1448] sm:$0xff]
        %v922 = vld [vmem:[%s201 + $0x1450] sm:$0xff]
        %v923 = vld [vmem:[%s201 + $0x1458] sm:$0xff]
        %v924 = vld [vmem:[%s201 + $0x1460] sm:$0xff]
        %v925 = vld [vmem:[%s201 + $0x1468] sm:$0xff]
        %v926 = vld [vmem:[%s201 + $0x1470] sm:$0xff]
        %v927 = vld [vmem:[%s201 + $0x1478] sm:$0xff]
        %v928 = vld [vmem:[%s201 + $0x1480] sm:$0xff]
        %v929 = vld [vmem:[%s201 + $0x1488] sm:$0xff]
        %v930 = vld [vmem:[%s201 + $0x1490] sm:$0xff]
        %v931 = vld [vmem:[%s201 + $0x1498] sm:$0xff]
        %v932 = vld [vmem:[%s201 + $0x14a0] sm:$0xff]
        %v933 = vld [vmem:[%s201 + $0x14a8] sm:$0xff]
        %v934 = vld [vmem:[%s201 + $0x14b0] sm:$0xff]
        %v935 = vld [vmem:[%s201 + $0x14b8] sm:$0xff]
        %v936 = vld [vmem:[%s201 + $0x14c0] sm:$0xff]
        %v937 = vld [vmem:[%s201 + $0x14c8] sm:$0xff]
        %v938 = vld [vmem:[%s201 + $0x14d0] sm:$0xff]
        %v939 = vld [vmem:[%s201 + $0x14d8] sm:$0xff]
        %v940 = vld [vmem:[%s201 + $0x14e0] sm:$0xff]
        %v941 = vld [vmem:[%s201 + $0x14e8] sm:$0xff]
        %v942 = vld [vmem:[%s201 + $0x14f0] sm:$0xff]
        %v943 = vld [vmem:[%s201 + $0x14f8] sm:$0xff]
        %v944 = vld [vmem:[%s201 + $0x1500] sm:$0xff]
        %v945 = vld [vmem:[%s201 + $0x1508] sm:$0xff]
        %v946 = vld [vmem:[%s201 + $0x1510] sm:$0xff]
        %v947 = vld [vmem:[%s201 + $0x1518] sm:$0xff]
        %v948 = vld [vmem:[%s201 + $0x1520] sm:$0xff]
        %v949 = vld [vmem:[%s201 + $0x1528] sm:$0xff]
        %v950 = vld [vmem:[%s201 + $0x1530] sm:$0xff]
        %v951 = vld [vmem:[%s201 + $0x1538] sm:$0xff]
        %v952 = vld [vmem:[%s201 + $0x1540] sm:$0xff]
        %v953 = vld [vmem:[%s201 + $0x1548] sm:$0xff]
        %v954 = vld [vmem:[%s201 + $0x1550] sm:$0xff]
        %v955 = vld [vmem:[%s201 + $0x1558] sm:$0xff]
        %v956 = vld [vmem:[%s201 + $0x1560] sm:$0xff]
        %v957 = vld [vmem:[%s201 + $0x1568] sm:$0xff]
        %v958 = vld [vmem:[%s201 + $0x1570] sm:$0xff]
        %v959 = vld [vmem:[%s201 + $0x1578] sm:$0xff]
        %v960 = vld [vmem:[%s201 + $0x1580] sm:$0xff]
        %v961 = vld [vmem:[%s201 + $0x1588] sm:$0xff]
        %v962 = vld [vmem:[%s201 + $0x1590] sm:$0xff]
        %v963 = vld [vmem:[%s201 + $0x1598] sm:$0xff]
        %v964 = vld [vmem:[%s201 + $0x15a0] sm:$0xff]
        %v965 = vld [vmem:[%s201 + $0x15a8] sm:$0xff]
        %v966 = vld [vmem:[%s201 + $0x15b0] sm:$0xff]
        %v967 = vld [vmem:[%s201 + $0x15b8] sm:$0xff]
        %v968 = vld [vmem:[%s201 + $0x15c0] sm:$0xff]
        %v969 = vld [vmem:[%s201 + $0x15c8] sm:$0xff]
        %v970 = vld [vmem:[%s201 + $0x15d0] sm:$0xff]
        %v971 = vld [vmem:[%s201 + $0x15d8] sm:$0xff]
        %v972 = vld [vmem:[%s201 + $0x15e0] sm:$0xff]
        %v973 = vld [vmem:[%s201 + $0x15e8] sm:$0xff]
        %v974 = vld [vmem:[%s201 + $0x15f0] sm:$0xff]
        %v975 = vld [vmem:[%s201 + $0x15f8] sm:$0xff]
        %v976 = vld [vmem:[%s201 + $0x1600] sm:$0xff]
        %v977 = vld [vmem:[%s201 + $0x1608] sm:$0xff]
        %v978 = vld [vmem:[%s201 + $0x1610] sm:$0xff]
        %v979 = vld [vmem:[%s201 + $0x1618] sm:$0xff]
        %v980 = vld [vmem:[%s201 + $0x1620] sm:$0xff]
        %v981 = vld [vmem:[%s201 + $0x1628] sm:$0xff]
        %v982 = vld [vmem:[%s201 + $0x1630] sm:$0xff]
        %v983 = vld [vmem:[%s201 + $0x1638] sm:$0xff]
        %v984 = vld [vmem:[%s201 + $0x1640] sm:$0xff]
        %v985 = vld [vmem:[%s201 + $0x1648] sm:$0xff]
        %v986 = vld [vmem:[%s201 + $0x1650] sm:$0xff]
        %v987 = vld [vmem:[%s201 + $0x1658] sm:$0xff]
        %v988 = vld [vmem:[%s201 + $0x1660] sm:$0xff]
        %v989 = vld [vmem:[%s201 + $0x1668] sm:$0xff]
        %v990 = vld [vmem:[%s201 + $0x1670] sm:$0xff]
        %v991 = vld [vmem:[%s201 + $0x1678] sm:$0xff]
        %v992 = vld [vmem:[%s201 + $0x1680] sm:$0xff]
        %v993 = vld [vmem:[%s201 + $0x1688] sm:$0xff]
        %v994 = vld [vmem:[%s201 + $0x1690] sm:$0xff]
        %v995 = vld [vmem:[%s201 + $0x1698] sm:$0xff]
        %v996 = vld [vmem:[%s201 + $0x16a0] sm:$0xff]
        %v997 = vld [vmem:[%s201 + $0x16a8] sm:$0xff]
        %v998 = vld [vmem:[%s201 + $0x16b0] sm:$0xff]
        %v999 = vld [vmem:[%s201 + $0x16b8] sm:$0xff]
        %v1000 = vld [vmem:[%s201 + $0x16c0] sm:$0xff]
        %v1001 = vld [vmem:[%s201 + $0x16c8] sm:$0xff]
        %v1002 = vld [vmem:[%s201 + $0x16d0] sm:$0xff]
        %v1003 = vld [vmem:[%s201 + $0x16d8] sm:$0xff]
        %v1004 = vld [vmem:[%s201 + $0x16e0] sm:$0xff]
        %v1005 = vld [vmem:[%s201 + $0x16e8] sm:$0xff]
        %v1006 = vld [vmem:[%s201 + $0x16f0] sm:$0xff]
        %v1007 = vld [vmem:[%s201 + $0x16f8] sm:$0xff]
        %v1008 = vld [vmem:[%s201 + $0x1700] sm:$0xff]
        %v1009 = vld [vmem:[%s201 + $0x1708] sm:$0xff]
        %v1010 = vld [vmem:[%s201 + $0x1710] sm:$0xff]
        %v1011 = vld [vmem:[%s201 + $0x1718] sm:$0xff]
        %v1012 = vld [vmem:[%s201 + $0x1720] sm:$0xff]
        %v1013 = vld [vmem:[%s201 + $0x1728] sm:$0xff]
        %v1014 = vld [vmem:[%s201 + $0x1730] sm:$0xff]
        %v1015 = vld [vmem:[%s201 + $0x1738] sm:$0xff]
        %v1016 = vld [vmem:[%s201 + $0x1740] sm:$0xff]
        %v1017 = vld [vmem:[%s201 + $0x1748] sm:$0xff]
        %v1018 = vld [vmem:[%s201 + $0x1750] sm:$0xff]
        %v1019 = vld [vmem:[%s201 + $0x1758] sm:$0xff]
        %v1020 = vld [vmem:[%s201 + $0x1760] sm:$0xff]
        %v1021 = vld [vmem:[%s201 + $0x1768] sm:$0xff]
        %v1022 = vld [vmem:[%s201 + $0x1770] sm:$0xff]
        %v1023 = vld [vmem:[%s201 + $0x1778] sm:$0xff]
        %v1024 = vld [vmem:[%s201 + $0x1780] sm:$0xff]
        %v1025 = vld [vmem:[%s201 + $0x1788] sm:$0xff]
        %v1026 = vld [vmem:[%s201 + $0x1790] sm:$0xff]
        %v1027 = vld [vmem:[%s201 + $0x1798] sm:$0xff]
        %v1028 = vld [vmem:[%s201 + $0x17a0] sm:$0xff]
        %v1029 = vld [vmem:[%s201 + $0x17a8] sm:$0xff]
        %v1030 = vld [vmem:[%s201 + $0x17b0] sm:$0xff]
        %v1031 = vld [vmem:[%s201 + $0x17b8] sm:$0xff]
        %v1032 = vld [vmem:[%s201 + $0x17c0] sm:$0xff]
        %v1033 = vld [vmem:[%s201 + $0x17c8] sm:$0xff]
        %v1034 = vld [vmem:[%s201 + $0x17d0] sm:$0xff]
        %v1035 = vld [vmem:[%s201 + $0x17d8] sm:$0xff]
        %v1036 = vld [vmem:[%s201 + $0x17e0] sm:$0xff]
        %v1037 = vld [vmem:[%s201 + $0x17e8] sm:$0xff]
        %v1038 = vld [vmem:[%s201 + $0x17f0] sm:$0xff]
        %v1039 = vld [vmem:[%s201 + $0x17f8] sm:$0xff]
        %v1040 = vld [vmem:[%s201 + $0x1800] sm:$0xff]
        %v1041 = vld [vmem:[%s201 + $0x1808] sm:$0xff]
        %v1042 = vld [vmem:[%s201 + $0x1810] sm:$0xff]
        %v1043 = vld [vmem:[%s201 + $0x1818] sm:$0xff]
        %v1044 = vld [vmem:[%s201 + $0x1820] sm:$0xff]
        %v1045 = vld [vmem:[%s201 + $0x1828] sm:$0xff]
        %v1046 = vld [vmem:[%s201 + $0x1830] sm:$0xff]
        %v1047 = vld [vmem:[%s201 + $0x1838] sm:$0xff]
        %v1048 = vld [vmem:[%s201 + $0x1840] sm:$0xff]
        %v1049 = vld [vmem:[%s201 + $0x1848] sm:$0xff]
        %v1050 = vld [vmem:[%s201 + $0x1850] sm:$0xff]
        %v1051 = vld [vmem:[%s201 + $0x1858] sm:$0xff]
        %v1052 = vld [vmem:[%s201 + $0x1860] sm:$0xff]
        %v1053 = vld [vmem:[%s201 + $0x1868] sm:$0xff]
        %v1054 = vld [vmem:[%s201 + $0x1870] sm:$0xff]
        %v1055 = vld [vmem:[%s201 + $0x1878] sm:$0xff]
        %v1056 = vld [vmem:[%s201 + $0x1880] sm:$0xff]
        %v1057 = vld [vmem:[%s201 + $0x1888] sm:$0xff]
        %v1058 = vld [vmem:[%s201 + $0x1890] sm:$0xff]
        %v1059 = vld [vmem:[%s201 + $0x1898] sm:$0xff]
        %v1060 = vld [vmem:[%s201 + $0x18a0] sm:$0xff]
        %v1061 = vld [vmem:[%s201 + $0x18a8] sm:$0xff]
        %v1062 = vld [vmem:[%s201 + $0x18b0] sm:$0xff]
        %v1063 = vld [vmem:[%s201 + $0x18b8] sm:$0xff]
        %v1064 = vld [vmem:[%s201 + $0x18c0] sm:$0xff]
        %v1065 = vld [vmem:[%s201 + $0x18c8] sm:$0xff]
        %v1066 = vld [vmem:[%s201 + $0x18d0] sm:$0xff]
        %v1067 = vld [vmem:[%s201 + $0x18d8] sm:$0xff]
        %v1068 = vld [vmem:[%s201 + $0x18e0] sm:$0xff]
        %v1069 = vld [vmem:[%s201 + $0x18e8] sm:$0xff]
        %v1070 = vld [vmem:[%s201 + $0x18f0] sm:$0xff]
        %v1071 = vld [vmem:[%s201 + $0x18f8] sm:$0xff]
        %v1072 = vld [vmem:[%s201 + $0x1900] sm:$0xff]
        %v1073 = vld [vmem:[%s201 + $0x1908] sm:$0xff]
        %v1074 = vld [vmem:[%s201 + $0x1910] sm:$0xff]
        %v1075 = vld [vmem:[%s201 + $0x1918] sm:$0xff]
        %v1076 = vld [vmem:[%s201 + $0x1920] sm:$0xff]
        %v1077 = vld [vmem:[%s201 + $0x1928] sm:$0xff]
        %v1078 = vld [vmem:[%s201 + $0x1930] sm:$0xff]
        %v1079 = vld [vmem:[%s201 + $0x1938] sm:$0xff]
        %v1080 = vld [vmem:[%s201 + $0x1940] sm:$0xff]
        %v1081 = vld [vmem:[%s201 + $0x1948] sm:$0xff]
        %v1082 = vld [vmem:[%s201 + $0x1950] sm:$0xff]
        %v1083 = vld [vmem:[%s201 + $0x1958] sm:$0xff]
        %v1084 = vld [vmem:[%s201 + $0x1960] sm:$0xff]
        %v1085 = vld [vmem:[%s201 + $0x1968] sm:$0xff]
        %v1086 = vld [vmem:[%s201 + $0x1970] sm:$0xff]
        %v1087 = vld [vmem:[%s201 + $0x1978] sm:$0xff]
        %v1088 = vld [vmem:[%s201 + $0x1980] sm:$0xff]
        %v1089 = vld [vmem:[%s201 + $0x1988] sm:$0xff]
        %v1090 = vld [vmem:[%s201 + $0x1990] sm:$0xff]
        %v1091 = vld [vmem:[%s201 + $0x1998] sm:$0xff]
        %v1092 = vld [vmem:[%s201 + $0x19a0] sm:$0xff]
        %v1093 = vld [vmem:[%s201 + $0x19a8] sm:$0xff]
        %v1094 = vld [vmem:[%s201 + $0x19b0] sm:$0xff]
        %v1095 = vld [vmem:[%s201 + $0x19b8] sm:$0xff]
        %v1096 = vld [vmem:[%s201 + $0x19c0] sm:$0xff]
        %v1097 = vld [vmem:[%s201 + $0x19c8] sm:$0xff]
        %v1098 = vld [vmem:[%s201 + $0x19d0] sm:$0xff]
        %v1099 = vld [vmem:[%s201 + $0x19d8] sm:$0xff]
        %v1100 = vld [vmem:[%s201 + $0x19e0] sm:$0xff]
        %v1101 = vld [vmem:[%s201 + $0x19e8] sm:$0xff]
        %v1102 = vld [vmem:[%s201 + $0x19f0] sm:$0xff]
        %v1103 = vld [vmem:[%s201 + $0x19f8] sm:$0xff]
        %v1104 = vld [vmem:[%s201 + $0x1a00] sm:$0xff]
        %v1105 = vld [vmem:[%s201 + $0x1a08] sm:$0xff]
        %v1106 = vld [vmem:[%s201 + $0x1a10] sm:$0xff]
        %v1107 = vld [vmem:[%s201 + $0x1a18] sm:$0xff]
        %v1108 = vld [vmem:[%s201 + $0x1a20] sm:$0xff]
        %v1109 = vld [vmem:[%s201 + $0x1a28] sm:$0xff]
        %v1110 = vld [vmem:[%s201 + $0x1a30] sm:$0xff]
        %v1111 = vld [vmem:[%s201 + $0x1a38] sm:$0xff]
        %v1112 = vld [vmem:[%s201 + $0x1a40] sm:$0xff]
        %v1113 = vld [vmem:[%s201 + $0x1a48] sm:$0xff]
        %v1114 = vld [vmem:[%s201 + $0x1a50] sm:$0xff]
        %v1115 = vld [vmem:[%s201 + $0x1a58] sm:$0xff]
        %v1116 = vld [vmem:[%s201 + $0x1a60] sm:$0xff]
        %v1117 = vld [vmem:[%s201 + $0x1a68] sm:$0xff]
        %v1118 = vld [vmem:[%s201 + $0x1a70] sm:$0xff]
        %v1119 = vld [vmem:[%s201 + $0x1a78] sm:$0xff]
        %v1120 = vld [vmem:[%s201 + $0x1a80] sm:$0xff]
        %v1121 = vld [vmem:[%s201 + $0x1a88] sm:$0xff]
        %v1122 = vld [vmem:[%s201 + $0x1a90] sm:$0xff]
        %v1123 = vld [vmem:[%s201 + $0x1a98] sm:$0xff]
        %v1124 = vld [vmem:[%s201 + $0x1aa0] sm:$0xff]
        %v1125 = vld [vmem:[%s201 + $0x1aa8] sm:$0xff]
        %v1126 = vld [vmem:[%s201 + $0x1ab0] sm:$0xff]
        %v1127 = vld [vmem:[%s201 + $0x1ab8] sm:$0xff]
        %v1128 = vld [vmem:[%s201 + $0x1ac0] sm:$0xff]
        %v1129 = vld [vmem:[%s201 + $0x1ac8] sm:$0xff]
        %v1130 = vld [vmem:[%s201 + $0x1ad0] sm:$0xff]
        %v1131 = vld [vmem:[%s201 + $0x1ad8] sm:$0xff]
        %v1132 = vld [vmem:[%s201 + $0x1ae0] sm:$0xff]
        %v1133 = vld [vmem:[%s201 + $0x1ae8] sm:$0xff]
        %v1134 = vld [vmem:[%s201 + $0x1af0] sm:$0xff]
        %v1135 = vld [vmem:[%s201 + $0x1af8] sm:$0xff]
        %v1136 = vld [vmem:[%s201 + $0x1b00] sm:$0xff]
        %v1137 = vld [vmem:[%s201 + $0x1b08] sm:$0xff]
        %v1138 = vld [vmem:[%s201 + $0x1b10] sm:$0xff]
        %v1139 = vld [vmem:[%s201 + $0x1b18] sm:$0xff]
        %v1140 = vld [vmem:[%s201 + $0x1b20] sm:$0xff]
        %v1141 = vld [vmem:[%s201 + $0x1b28] sm:$0xff]
        %v1142 = vld [vmem:[%s201 + $0x1b30] sm:$0xff]
        %v1143 = vld [vmem:[%s201 + $0x1b38] sm:$0xff]
        %v1144 = vld [vmem:[%s201 + $0x1b40] sm:$0xff]
        %v1145 = vld [vmem:[%s201 + $0x1b48] sm:$0xff]
        %v1146 = vld [vmem:[%s201 + $0x1b50] sm:$0xff]
        %v1147 = vld [vmem:[%s201 + $0x1b58] sm:$0xff]
        %v1148 = vld [vmem:[%s201 + $0x1b60] sm:$0xff]
        %v1149 = vld [vmem:[%s201 + $0x1b68] sm:$0xff]
        %v1150 = vld [vmem:[%s201 + $0x1b70] sm:$0xff]
        %v1151 = vld [vmem:[%s201 + $0x1b78] sm:$0xff]
        %v1152 = vld [vmem:[%s201 + $0x1b80] sm:$0xff]
        %v1153 = vld [vmem:[%s201 + $0x1b88] sm:$0xff]
        %v1154 = vld [vmem:[%s201 + $0x1b90] sm:$0xff]
        %v1155 = vld [vmem:[%s201 + $0x1b98] sm:$0xff]
        %v1156 = vld [vmem:[%s201 + $0x1ba0] sm:$0xff]
        %v1157 = vld [vmem:[%s201 + $0x1ba8] sm:$0xff]
        %v1158 = vld [vmem:[%s201 + $0x1bb0] sm:$0xff]
        %v1159 = vld [vmem:[%s201 + $0x1bb8] sm:$0xff]
        %v1160 = vld [vmem:[%s201 + $0x1bc0] sm:$0xff]
        %v1161 = vld [vmem:[%s201 + $0x1bc8] sm:$0xff]
        %v1162 = vld [vmem:[%s201 + $0x1bd0] sm:$0xff]
        %v1163 = vld [vmem:[%s201 + $0x1bd8] sm:$0xff]
        %v1164 = vld [vmem:[%s201 + $0x1be0] sm:$0xff]
        %v1165 = vld [vmem:[%s201 + $0x1be8] sm:$0xff]
        %v1166 = vld [vmem:[%s201 + $0x1bf0] sm:$0xff]
        %v1167 = vld [vmem:[%s201 + $0x1bf8] sm:$0xff]
        %v1168 = vld [vmem:[%s201 + $0x1c00] sm:$0xff]
        %v1169 = vld [vmem:[%s201 + $0x1c08] sm:$0xff]
        %v1170 = vld [vmem:[%s201 + $0x1c10] sm:$0xff]
        %v1171 = vld [vmem:[%s201 + $0x1c18] sm:$0xff]
        %v1172 = vld [vmem:[%s201 + $0x1c20] sm:$0xff]
        %v1173 = vld [vmem:[%s201 + $0x1c28] sm:$0xff]
        %v1174 = vld [vmem:[%s201 + $0x1c30] sm:$0xff]
        %v1175 = vld [vmem:[%s201 + $0x1c38] sm:$0xff]
        %v1176 = vld [vmem:[%s201 + $0x1c40] sm:$0xff]
        %v1177 = vld [vmem:[%s201 + $0x1c48] sm:$0xff]
        %v1178 = vld [vmem:[%s201 + $0x1c50] sm:$0xff]
        %v1179 = vld [vmem:[%s201 + $0x1c58] sm:$0xff]
        %v1180 = vld [vmem:[%s201 + $0x1c60] sm:$0xff]
        %v1181 = vld [vmem:[%s201 + $0x1c68] sm:$0xff]
        %v1182 = vld [vmem:[%s201 + $0x1c70] sm:$0xff]
        %v1183 = vld [vmem:[%s201 + $0x1c78] sm:$0xff]
        %v1184 = vld [vmem:[%s201 + $0x1c80] sm:$0xff]
        %v1185 = vld [vmem:[%s201 + $0x1c88] sm:$0xff]
        %v1186 = vld [vmem:[%s201 + $0x1c90] sm:$0xff]
        %v1187 = vld [vmem:[%s201 + $0x1c98] sm:$0xff]
        %v1188 = vld [vmem:[%s201 + $0x1ca0] sm:$0xff]
        %v1189 = vld [vmem:[%s201 + $0x1ca8] sm:$0xff]
        %v1190 = vld [vmem:[%s201 + $0x1cb0] sm:$0xff]
        %v1191 = vld [vmem:[%s201 + $0x1cb8] sm:$0xff]
        %v1192 = vld [vmem:[%s201 + $0x1cc0] sm:$0xff]
        %v1193 = vld [vmem:[%s201 + $0x1cc8] sm:$0xff]
        %v1194 = vld [vmem:[%s201 + $0x1cd0] sm:$0xff]
        %v1195 = vld [vmem:[%s201 + $0x1cd8] sm:$0xff]
        %v1196 = vld [vmem:[%s201 + $0x1ce0] sm:$0xff]
        %v1197 = vld [vmem:[%s201 + $0x1ce8] sm:$0xff]
        %v1198 = vld [vmem:[%s201 + $0x1cf0] sm:$0xff]
        %v1199 = vld [vmem:[%s201 + $0x1cf8] sm:$0xff]
        %v1200 = vld [vmem:[%s201 + $0x1d00] sm:$0xff]
        %v1201 = vld [vmem:[%s201 + $0x1d08] sm:$0xff]
        %v1202 = vld [vmem:[%s201 + $0x1d10] sm:$0xff]
        %v1203 = vld [vmem:[%s201 + $0x1d18] sm:$0xff]
        %v1204 = vld [vmem:[%s201 + $0x1d20] sm:$0xff]
        %v1205 = vld [vmem:[%s201 + $0x1d28] sm:$0xff]
        %v1206 = vld [vmem:[%s201 + $0x1d30] sm:$0xff]
        %v1207 = vld [vmem:[%s201 + $0x1d38] sm:$0xff]
        %v1208 = vld [vmem:[%s201 + $0x1d40] sm:$0xff]
        %v1209 = vld [vmem:[%s201 + $0x1d48] sm:$0xff]
        %v1210 = vld [vmem:[%s201 + $0x1d50] sm:$0xff]
        %v1211 = vld [vmem:[%s201 + $0x1d58] sm:$0xff]
        %v1212 = vld [vmem:[%s201 + $0x1d60] sm:$0xff]
        %v1213 = vld [vmem:[%s201 + $0x1d68] sm:$0xff]
        %v1214 = vld [vmem:[%s201 + $0x1d70] sm:$0xff]
        %v1215 = vld [vmem:[%s201 + $0x1d78] sm:$0xff]
        %v1216 = vld [vmem:[%s201 + $0x1d80] sm:$0xff]
        %v1217 = vld [vmem:[%s201 + $0x1d88] sm:$0xff]
        %v1218 = vld [vmem:[%s201 + $0x1d90] sm:$0xff]
        %v1219 = vld [vmem:[%s201 + $0x1d98] sm:$0xff]
        %v1220 = vld [vmem:[%s201 + $0x1da0] sm:$0xff]
        %v1221 = vld [vmem:[%s201 + $0x1da8] sm:$0xff]
        %v1222 = vld [vmem:[%s201 + $0x1db0] sm:$0xff]
        %v1223 = vld [vmem:[%s201 + $0x1db8] sm:$0xff]
        %v1224 = vld [vmem:[%s201 + $0x1dc0] sm:$0xff]
        %v1225 = vld [vmem:[%s201 + $0x1dc8] sm:$0xff]
        %v1226 = vld [vmem:[%s201 + $0x1dd0] sm:$0xff]
        %v1227 = vld [vmem:[%s201 + $0x1dd8] sm:$0xff]
        %v1228 = vld [vmem:[%s201 + $0x1de0] sm:$0xff]
        %v1229 = vld [vmem:[%s201 + $0x1de8] sm:$0xff]
        %v1230 = vld [vmem:[%s201 + $0x1df0] sm:$0xff]
        %v1231 = vld [vmem:[%s201 + $0x1df8] sm:$0xff]
        %v1232 = vld [vmem:[%s201 + $0x1e00] sm:$0xff]
        %v1233 = vld [vmem:[%s201 + $0x1e08] sm:$0xff]
        %v1234 = vld [vmem:[%s201 + $0x1e10] sm:$0xff]
        %v1235 = vld [vmem:[%s201 + $0x1e18] sm:$0xff]
        %v1236 = vld [vmem:[%s201 + $0x1e20] sm:$0xff]
        %v1237 = vld [vmem:[%s201 + $0x1e28] sm:$0xff]
        %v1238 = vld [vmem:[%s201 + $0x1e30] sm:$0xff]
        %v1239 = vld [vmem:[%s201 + $0x1e38] sm:$0xff]
        %v1240 = vld [vmem:[%s201 + $0x1e40] sm:$0xff]
        %v1241 = vld [vmem:[%s201 + $0x1e48] sm:$0xff]
        %v1242 = vld [vmem:[%s201 + $0x1e50] sm:$0xff]
        %v1243 = vld [vmem:[%s201 + $0x1e58] sm:$0xff]
        %v1244 = vld [vmem:[%s201 + $0x1e60] sm:$0xff]
        %v1245 = vld [vmem:[%s201 + $0x1e68] sm:$0xff]
        %v1246 = vld [vmem:[%s201 + $0x1e70] sm:$0xff]
        %v1247 = vld [vmem:[%s201 + $0x1e78] sm:$0xff]
        %v1248 = vld [vmem:[%s201 + $0x1e80] sm:$0xff]
        %v1249 = vld [vmem:[%s201 + $0x1e88] sm:$0xff]
        %v1250 = vld [vmem:[%s201 + $0x1e90] sm:$0xff]
        %v1251 = vld [vmem:[%s201 + $0x1e98] sm:$0xff]
        %v1252 = vld [vmem:[%s201 + $0x1ea0] sm:$0xff]
        %v1253 = vld [vmem:[%s201 + $0x1ea8] sm:$0xff]
        %v1254 = vld [vmem:[%s201 + $0x1eb0] sm:$0xff]
        %v1255 = vld [vmem:[%s201 + $0x1eb8] sm:$0xff]
        %v1256 = vld [vmem:[%s201 + $0x1ec0] sm:$0xff]
        %v1257 = vld [vmem:[%s201 + $0x1ec8] sm:$0xff]
        %v1258 = vld [vmem:[%s201 + $0x1ed0] sm:$0xff]
        %v1259 = vld [vmem:[%s201 + $0x1ed8] sm:$0xff]
        %v1260 = vld [vmem:[%s201 + $0x1ee0] sm:$0xff]
        %v1261 = vld [vmem:[%s201 + $0x1ee8] sm:$0xff]
        %v1262 = vld [vmem:[%s201 + $0x1ef0] sm:$0xff]
        %v1263 = vld [vmem:[%s201 + $0x1ef8] sm:$0xff]
        %v1264 = vld [vmem:[%s201 + $0x1f00] sm:$0xff]
        %v1265 = vld [vmem:[%s201 + $0x1f08] sm:$0xff]
        %v1266 = vld [vmem:[%s201 + $0x1f10] sm:$0xff]
        %v1267 = vld [vmem:[%s201 + $0x1f18] sm:$0xff]
        %v1268 = vld [vmem:[%s201 + $0x1f20] sm:$0xff]
        %v1269 = vld [vmem:[%s201 + $0x1f28] sm:$0xff]
        %v1270 = vld [vmem:[%s201 + $0x1f30] sm:$0xff]
        %v1271 = vld [vmem:[%s201 + $0x1f38] sm:$0xff]
        %v1272 = vld [vmem:[%s201 + $0x1f40] sm:$0xff]
        %v1273 = vld [vmem:[%s201 + $0x1f48] sm:$0xff]
        %v1274 = vld [vmem:[%s201 + $0x1f50] sm:$0xff]
        %v1275 = vld [vmem:[%s201 + $0x1f58] sm:$0xff]
        %v1276 = vld [vmem:[%s201 + $0x1f60] sm:$0xff]
        %v1277 = vld [vmem:[%s201 + $0x1f68] sm:$0xff]
        %v1278 = vld [vmem:[%s201 + $0x1f70] sm:$0xff]
        %v1279 = vld [vmem:[%s201 + $0x1f78] sm:$0xff]
        %v1280 = vld [vmem:[%s201 + $0x1f80] sm:$0xff]
        %v1281 = vld [vmem:[%s201 + $0x1f88] sm:$0xff]
        %v1282 = vld [vmem:[%s201 + $0x1f90] sm:$0xff]
        %v1283 = vld [vmem:[%s201 + $0x1f98] sm:$0xff]
        %v1284 = vld [vmem:[%s201 + $0x1fa0] sm:$0xff]
        %v1285 = vld [vmem:[%s201 + $0x1fa8] sm:$0xff]
        %v1286 = vld [vmem:[%s201 + $0x1fb0] sm:$0xff]
        %v1287 = vld [vmem:[%s201 + $0x1fb8] sm:$0xff]
        %v1288 = vld [vmem:[%s201 + $0x1fc0] sm:$0xff]
        %v1289 = vld [vmem:[%s201 + $0x1fc8] sm:$0xff]
        %v1290 = vld [vmem:[%s201 + $0x1fd0] sm:$0xff]
        %v1291 = vld [vmem:[%s201 + $0x1fd8] sm:$0xff]
        %v1292 = vld [vmem:[%s201 + $0x1fe0] sm:$0xff]
        %v1293 = vld [vmem:[%s201 + $0x1fe8] sm:$0xff]
        %v1294 = vld [vmem:[%s201 + $0x1ff0] sm:$0xff]
        %v1295 = vld [vmem:[%s201 + $0x1ff8] sm:$0xff]
        %v1296 = vld [vmem:[%s201 + $0x2000] sm:$0xff]
        %v1297 = vld [vmem:[%s201 + $0x2008] sm:$0xff]
        %v1298 = vld [vmem:[%s201 + $0x2010] sm:$0xff]
        %v1299 = vld [vmem:[%s201 + $0x2018] sm:$0xff]
        %v1300 = vld [vmem:[%s201 + $0x2020] sm:$0xff]
        %v1301 = vld [vmem:[%s201 + $0x2028] sm:$0xff]
        %v1302 = vld [vmem:[%s201 + $0x2030] sm:$0xff]
        %v1303 = vld [vmem:[%s201 + $0x2038] sm:$0xff]
        %v1304 = vld [vmem:[%s201 + $0x2040] sm:$0xff]
        %v1305 = vld [vmem:[%s201 + $0x2048] sm:$0xff]
        %v1306 = vld [vmem:[%s201 + $0x2050] sm:$0xff]
        %v1307 = vld [vmem:[%s201 + $0x2058] sm:$0xff]
        %v1308 = vld [vmem:[%s201 + $0x2060] sm:$0xff]
        %v1309 = vld [vmem:[%s201 + $0x2068] sm:$0xff]
        %v1310 = vld [vmem:[%s201 + $0x2070] sm:$0xff]
        %v1311 = vld [vmem:[%s201 + $0x2078] sm:$0xff]
        %v1312 = vld [vmem:[%s201 + $0x2080] sm:$0xff]
        %v1313 = vld [vmem:[%s201 + $0x2088] sm:$0xff]
        %v1314 = vld [vmem:[%s201 + $0x2090] sm:$0xff]
        %v1315 = vld [vmem:[%s201 + $0x2098] sm:$0xff]
        %v1316 = vld [vmem:[%s201 + $0x20a0] sm:$0xff]
        %v1317 = vld [vmem:[%s201 + $0x20a8] sm:$0xff]
        %v1318 = vld [vmem:[%s201 + $0x20b0] sm:$0xff]
        %v1319 = vld [vmem:[%s201 + $0x20b8] sm:$0xff]
        %v1320 = vld [vmem:[%s201 + $0x20c0] sm:$0xff]
        %v1321 = vld [vmem:[%s201 + $0x20c8] sm:$0xff]
        %v1322 = vld [vmem:[%s201 + $0x20d0] sm:$0xff]
        %v1323 = vld [vmem:[%s201 + $0x20d8] sm:$0xff]
        %v1324 = vld [vmem:[%s201 + $0x20e0] sm:$0xff]
        %v1325 = vld [vmem:[%s201 + $0x20e8] sm:$0xff]
        %v1326 = vld [vmem:[%s201 + $0x20f0] sm:$0xff]
        %v1327 = vld [vmem:[%s201 + $0x20f8] sm:$0xff]
        %v1328 = vld [vmem:[%s201 + $0x2100] sm:$0xff]
        %v1329 = vld [vmem:[%s201 + $0x2108] sm:$0xff]
        %v1330 = vld [vmem:[%s201 + $0x2110] sm:$0xff]
        %v1331 = vld [vmem:[%s201 + $0x2118] sm:$0xff]
        %v1332 = vld [vmem:[%s201 + $0x2120] sm:$0xff]
        %v1333 = vld [vmem:[%s201 + $0x2128] sm:$0xff]
        %v1334 = vld [vmem:[%s201 + $0x2130] sm:$0xff]
        %v1335 = vld [vmem:[%s201 + $0x2138] sm:$0xff]
        %v1336 = vld [vmem:[%s201 + $0x2140] sm:$0xff]
        %v1337 = vld [vmem:[%s201 + $0x2148] sm:$0xff]
        %v1338 = vld [vmem:[%s201 + $0x2150] sm:$0xff]
        %v1339 = vld [vmem:[%s201 + $0x2158] sm:$0xff]
        %v1340 = vld [vmem:[%s201 + $0x2160] sm:$0xff]
        %v1341 = vld [vmem:[%s201 + $0x2168] sm:$0xff]
        %v1342 = vld [vmem:[%s201 + $0x2170] sm:$0xff]
        %v1343 = vld [vmem:[%s201 + $0x2178] sm:$0xff]
        %v1344 = vld [vmem:[%s201 + $0x2180] sm:$0xff]
        %v1345 = vld [vmem:[%s201 + $0x2188] sm:$0xff]
        %v1346 = vld [vmem:[%s201 + $0x2190] sm:$0xff]
        %v1347 = vld [vmem:[%s201 + $0x2198] sm:$0xff]
        %v1348 = vld [vmem:[%s201 + $0x21a0] sm:$0xff]
        %v1349 = vld [vmem:[%s201 + $0x21a8] sm:$0xff]
        %v1350 = vld [vmem:[%s201 + $0x21b0] sm:$0xff]
        %v1351 = vld [vmem:[%s201 + $0x21b8] sm:$0xff]
        %v1352 = vld [vmem:[%s201 + $0x21c0] sm:$0xff]
        %v1353 = vld [vmem:[%s201 + $0x21c8] sm:$0xff]
        %v1354 = vld [vmem:[%s201 + $0x21d0] sm:$0xff]
        %v1355 = vld [vmem:[%s201 + $0x21d8] sm:$0xff]
        %v1356 = vld [vmem:[%s201 + $0x21e0] sm:$0xff]
        %v1357 = vld [vmem:[%s201 + $0x21e8] sm:$0xff]
        %v1358 = vld [vmem:[%s201 + $0x21f0] sm:$0xff]
        %v1359 = vld [vmem:[%s201 + $0x21f8] sm:$0xff]
        %v1360 = vld [vmem:[%s201 + $0x2200] sm:$0xff]
        %v1361 = vld [vmem:[%s201 + $0x2208] sm:$0xff]
        %v1362 = vld [vmem:[%s201 + $0x2210] sm:$0xff]
        %v1363 = vld [vmem:[%s201 + $0x2218] sm:$0xff]
        %v1364 = vld [vmem:[%s201 + $0x2220] sm:$0xff]
        %v1365 = vld [vmem:[%s201 + $0x2228] sm:$0xff]
        %v1366 = vld [vmem:[%s201 + $0x2230] sm:$0xff]
        %v1367 = vld [vmem:[%s201 + $0x2238] sm:$0xff]
        %v1368 = vld [vmem:[%s201 + $0x2240] sm:$0xff]
        %v1369 = vld [vmem:[%s201 + $0x2248] sm:$0xff]
        %v1370 = vld [vmem:[%s201 + $0x2250] sm:$0xff]
        %v1371 = vld [vmem:[%s201 + $0x2258] sm:$0xff]
        %v1372 = vld [vmem:[%s201 + $0x2260] sm:$0xff]
        %v1373 = vld [vmem:[%s201 + $0x2268] sm:$0xff]
        %v1374 = vld [vmem:[%s201 + $0x2270] sm:$0xff]
        %v1375 = vld [vmem:[%s201 + $0x2278] sm:$0xff]
        %v1376 = vld [vmem:[%s201 + $0x2280] sm:$0xff]
        %v1377 = vld [vmem:[%s201 + $0x2288] sm:$0xff]
        %v1378 = vld [vmem:[%s201 + $0x2290] sm:$0xff]
        %v1379 = vld [vmem:[%s201 + $0x2298] sm:$0xff]
        %v1380 = vld [vmem:[%s201 + $0x22a0] sm:$0xff]
        %v1381 = vld [vmem:[%s201 + $0x22a8] sm:$0xff]
        %v1382 = vld [vmem:[%s201 + $0x22b0] sm:$0xff]
        %v1383 = vld [vmem:[%s201 + $0x22b8] sm:$0xff]
        %v1384 = vld [vmem:[%s201 + $0x22c0] sm:$0xff]
        %v1385 = vld [vmem:[%s201 + $0x22c8] sm:$0xff]
        %v1386 = vld [vmem:[%s201 + $0x22d0] sm:$0xff]
        %v1387 = vld [vmem:[%s201 + $0x22d8] sm:$0xff]
        %v1388 = vld [vmem:[%s201 + $0x22e0] sm:$0xff]
        %v1389 = vld [vmem:[%s201 + $0x22e8] sm:$0xff]
        %v1390 = vld [vmem:[%s201 + $0x22f0] sm:$0xff]
        %v1391 = vld [vmem:[%s201 + $0x22f8] sm:$0xff]
        %v1392 = vld [vmem:[%s201 + $0x2300] sm:$0xff]
        %v1393 = vld [vmem:[%s201 + $0x2308] sm:$0xff]
        %v1394 = vld [vmem:[%s201 + $0x2310] sm:$0xff]
        %v1395 = vld [vmem:[%s201 + $0x2318] sm:$0xff]
        %v1396 = vld [vmem:[%s201 + $0x2320] sm:$0xff]
        %v1397 = vld [vmem:[%s201 + $0x2328] sm:$0xff]
        %v1398 = vld [vmem:[%s201 + $0x2330] sm:$0xff]
        %v1399 = vld [vmem:[%s201 + $0x2338] sm:$0xff]
        %v1400 = vld [vmem:[%s201 + $0x2340] sm:$0xff]
        %v1401 = vld [vmem:[%s201 + $0x2348] sm:$0xff]
        %v1402 = vld [vmem:[%s201 + $0x2350] sm:$0xff]
        %v1403 = vld [vmem:[%s201 + $0x2358] sm:$0xff]
        %v1404 = vld [vmem:[%s201 + $0x2360] sm:$0xff]
        %v1405 = vld [vmem:[%s201 + $0x2368] sm:$0xff]
        %v1406 = vld [vmem:[%s201 + $0x2370] sm:$0xff]
        %v1407 = vld [vmem:[%s201 + $0x2378] sm:$0xff]
        %v1408 = vld [vmem:[%s201 + $0x2380] sm:$0xff]
        %v1409 = vld [vmem:[%s201 + $0x2388] sm:$0xff]
        %v1410 = vld [vmem:[%s201 + $0x2390] sm:$0xff]
        %v1411 = vld [vmem:[%s201 + $0x2398] sm:$0xff]
        %v1412 = vld [vmem:[%s201 + $0x23a0] sm:$0xff]
        %v1413 = vld [vmem:[%s201 + $0x23a8] sm:$0xff]
        %v1414 = vld [vmem:[%s201 + $0x23b0] sm:$0xff]
        %v1415 = vld [vmem:[%s201 + $0x23b8] sm:$0xff]
        %v1416 = vld [vmem:[%s201 + $0x23c0] sm:$0xff]
        %v1417 = vld [vmem:[%s201 + $0x23c8] sm:$0xff]
        %v1418 = vld [vmem:[%s201 + $0x23d0] sm:$0xff]
        %v1419 = vld [vmem:[%s201 + $0x23d8] sm:$0xff]
        %v1420 = vld [vmem:[%s201 + $0x23e0] sm:$0xff]
        %v1421 = vld [vmem:[%s201 + $0x23e8] sm:$0xff]
        %v1422 = vld [vmem:[%s201 + $0x23f0] sm:$0xff]
        %v1423 = vld [vmem:[%s201 + $0x23f8] sm:$0xff]
        %v1424 = vld [vmem:[%s201 + $0x2400] sm:$0xff]
        %v1425 = vld [vmem:[%s201 + $0x2408] sm:$0xff]
        %v1426 = vld [vmem:[%s201 + $0x2410] sm:$0xff]
        %v1427 = vld [vmem:[%s201 + $0x2418] sm:$0xff]
        %v1428 = vld [vmem:[%s201 + $0x2420] sm:$0xff]
        %v1429 = vld [vmem:[%s201 + $0x2428] sm:$0xff]
        %v1430 = vld [vmem:[%s201 + $0x2430] sm:$0xff]
        %v1431 = vld [vmem:[%s201 + $0x2438] sm:$0xff]
        %v1432 = vld [vmem:[%s201 + $0x2440] sm:$0xff]
        %v1433 = vld [vmem:[%s201 + $0x2448] sm:$0xff]
        %v1434 = vld [vmem:[%s201 + $0x2450] sm:$0xff]
        %v1435 = vld [vmem:[%s201 + $0x2458] sm:$0xff]
        %v1436 = vld [vmem:[%s201 + $0x2460] sm:$0xff]
        %v1437 = vld [vmem:[%s201 + $0x2468] sm:$0xff]
        %v1438 = vld [vmem:[%s201 + $0x2470] sm:$0xff]
        %v1439 = vld [vmem:[%s201 + $0x2478] sm:$0xff]
        %v1440 = vld [vmem:[%s201 + $0x2480] sm:$0xff]
        %v1441 = vld [vmem:[%s201 + $0x2488] sm:$0xff]
        %v1442 = vld [vmem:[%s201 + $0x2490] sm:$0xff]
        %v1443 = vld [vmem:[%s201 + $0x2498] sm:$0xff]
        %v1444 = vld [vmem:[%s201 + $0x24a0] sm:$0xff]
        %v1445 = vld [vmem:[%s201 + $0x24a8] sm:$0xff]
        %v1446 = vld [vmem:[%s201 + $0x24b0] sm:$0xff]
        %v1447 = vld [vmem:[%s201 + $0x24b8] sm:$0xff]
        %v1448 = vld [vmem:[%s201 + $0x24c0] sm:$0xff]
        %v1449 = vld [vmem:[%s201 + $0x24c8] sm:$0xff]
        %v1450 = vld [vmem:[%s201 + $0x24d0] sm:$0xff]
        %v1451 = vld [vmem:[%s201 + $0x24d8] sm:$0xff]
        %v1452 = vld [vmem:[%s201 + $0x24e0] sm:$0xff]
        %v1453 = vld [vmem:[%s201 + $0x24e8] sm:$0xff]
        %v1454 = vld [vmem:[%s201 + $0x24f0] sm:$0xff]
        %v1455 = vld [vmem:[%s201 + $0x24f8] sm:$0xff]
        %v1456 = vld [vmem:[%s201 + $0x2500] sm:$0xff]
        %v1457 = vld [vmem:[%s201 + $0x2508] sm:$0xff]
        %v1458 = vld [vmem:[%s201 + $0x2510] sm:$0xff]
        %v1459 = vld [vmem:[%s201 + $0x2518] sm:$0xff]
        %v1460 = vld [vmem:[%s201 + $0x2520] sm:$0xff]
        %v1461 = vld [vmem:[%s201 + $0x2528] sm:$0xff]
        %v1462 = vld [vmem:[%s201 + $0x2530] sm:$0xff]
        %v1463 = vld [vmem:[%s201 + $0x2538] sm:$0xff]
        %v1464 = vld [vmem:[%s201 + $0x2540] sm:$0xff]
        %v1465 = vld [vmem:[%s201 + $0x2548] sm:$0xff]
        %v1466 = vld [vmem:[%s201 + $0x2550] sm:$0xff]
        %v1467 = vld [vmem:[%s201 + $0x2558] sm:$0xff]
        %v1468 = vld [vmem:[%s201 + $0x2560] sm:$0xff]
        %v1469 = vld [vmem:[%s201 + $0x2568] sm:$0xff]
        %v1470 = vld [vmem:[%s201 + $0x2570] sm:$0xff]
        %v1471 = vld [vmem:[%s201 + $0x2578] sm:$0xff]
        %v1472 = vld [vmem:[%s201 + $0x2580] sm:$0xff]
        %v1473 = vld [vmem:[%s201 + $0x2588] sm:$0xff]
        %v1474 = vld [vmem:[%s201 + $0x2590] sm:$0xff]
        %v1475 = vld [vmem:[%s201 + $0x2598] sm:$0xff]
        %v1476 = vld [vmem:[%s201 + $0x25a0] sm:$0xff]
        %v1477 = vld [vmem:[%s201 + $0x25a8] sm:$0xff]
        %v1478 = vld [vmem:[%s201 + $0x25b0] sm:$0xff]
        %v1479 = vld [vmem:[%s201 + $0x25b8] sm:$0xff]
        %v1480 = vld [vmem:[%s201 + $0x25c0] sm:$0xff]
        %v1481 = vld [vmem:[%s201 + $0x25c8] sm:$0xff]
        %v1482 = vld [vmem:[%s201 + $0x25d0] sm:$0xff]
        %v1483 = vld [vmem:[%s201 + $0x25d8] sm:$0xff]
        %v1484 = vld [vmem:[%s201 + $0x25e0] sm:$0xff]
        %v1485 = vld [vmem:[%s201 + $0x25e8] sm:$0xff]
        %v1486 = vld [vmem:[%s201 + $0x25f0] sm:$0xff]
        %v1487 = vld [vmem:[%s201 + $0x25f8] sm:$0xff]
        %v1488 = vld [vmem:[%s201 + $0x2600] sm:$0xff]
        %v1489 = vld [vmem:[%s201 + $0x2608] sm:$0xff]
        %v1490 = vld [vmem:[%s201 + $0x2610] sm:$0xff]
        %v1491 = vld [vmem:[%s201 + $0x2618] sm:$0xff]
        %v1492 = vld [vmem:[%s201 + $0x2620] sm:$0xff]
        %v1493 = vld [vmem:[%s201 + $0x2628] sm:$0xff]
        %v1494 = vld [vmem:[%s201 + $0x2630] sm:$0xff]
        %v1495 = vld [vmem:[%s201 + $0x2638] sm:$0xff]
        %v1496 = vld [vmem:[%s201 + $0x2640] sm:$0xff]
        %v1497 = vld [vmem:[%s201 + $0x2648] sm:$0xff]
        %v1498 = vld [vmem:[%s201 + $0x2650] sm:$0xff]
        %v1499 = vld [vmem:[%s201 + $0x2658] sm:$0xff]
        %v1500 = vld [vmem:[%s201 + $0x2660] sm:$0xff]
        %v1501 = vld [vmem:[%s201 + $0x2668] sm:$0xff]
        %v1502 = vld [vmem:[%s201 + $0x2670] sm:$0xff]
        %v1503 = vld [vmem:[%s201 + $0x2678] sm:$0xff]
        %v1504 = vld [vmem:[%s201 + $0x2680] sm:$0xff]
        %v1505 = vld [vmem:[%s201 + $0x2688] sm:$0xff]
        %v1506 = vld [vmem:[%s201 + $0x2690] sm:$0xff]
        %v1507 = vld [vmem:[%s201 + $0x2698] sm:$0xff]
        %v1508 = vld [vmem:[%s201 + $0x26a0] sm:$0xff]
        %v1509 = vld [vmem:[%s201 + $0x26a8] sm:$0xff]
        %v1510 = vld [vmem:[%s201 + $0x26b0] sm:$0xff]
        %v1511 = vld [vmem:[%s201 + $0x26b8] sm:$0xff]
        %v1512 = vld [vmem:[%s201 + $0x26c0] sm:$0xff]
        %v1513 = vld [vmem:[%s201 + $0x26c8] sm:$0xff]
        %v1514 = vld [vmem:[%s201 + $0x26d0] sm:$0xff]
        %v1515 = vld [vmem:[%s201 + $0x26d8] sm:$0xff]
        %v1516 = vld [vmem:[%s201 + $0x26e0] sm:$0xff]
        %v1517 = vld [vmem:[%s201 + $0x26e8] sm:$0xff]
        %v1518 = vld [vmem:[%s201 + $0x26f0] sm:$0xff]
        %v1519 = vld [vmem:[%s201 + $0x26f8] sm:$0xff]
        %v1520 = vld [vmem:[%s201 + $0x2700] sm:$0xff]
        %v1521 = vld [vmem:[%s201 + $0x2708] sm:$0xff]
        %v1522 = vld [vmem:[%s201 + $0x2710] sm:$0xff]
        %v1523 = vld [vmem:[%s201 + $0x2718] sm:$0xff]
        %v1524 = vld [vmem:[%s201 + $0x2720] sm:$0xff]
        %v1525 = vld [vmem:[%s201 + $0x2728] sm:$0xff]
        %v1526 = vld [vmem:[%s201 + $0x2730] sm:$0xff]
        %v1527 = vld [vmem:[%s201 + $0x2738] sm:$0xff]
        %v1528 = vld [vmem:[%s201 + $0x2740] sm:$0xff]
        %v1529 = vld [vmem:[%s201 + $0x2748] sm:$0xff]
        %v1530 = vld [vmem:[%s201 + $0x2750] sm:$0xff]
        %v1531 = vld [vmem:[%s201 + $0x2758] sm:$0xff]
        %v1532 = vld [vmem:[%s201 + $0x2760] sm:$0xff]
        %v1533 = vld [vmem:[%s201 + $0x2768] sm:$0xff]
        %v1534 = vld [vmem:[%s201 + $0x2770] sm:$0xff]
        %v1535 = vld [vmem:[%s201 + $0x2778] sm:$0xff]
        %v1536 = vld [vmem:[%s201 + $0x2780] sm:$0xff]
        %v1537 = vld [vmem:[%s201 + $0x2788] sm:$0xff]
        %v1538 = vld [vmem:[%s201 + $0x2790] sm:$0xff]
        %v1539 = vld [vmem:[%s201 + $0x2798] sm:$0xff]
        %v1540 = vld [vmem:[%s201 + $0x27a0] sm:$0xff]
        %v1541 = vld [vmem:[%s201 + $0x27a8] sm:$0xff]
        %v1542 = vld [vmem:[%s201 + $0x27b0] sm:$0xff]
        %v1543 = vld [vmem:[%s201 + $0x27b8] sm:$0xff]
        %v1544 = vld [vmem:[%s201 + $0x27c0] sm:$0xff]
        %v1545 = vld [vmem:[%s201 + $0x27c8] sm:$0xff]
        %v1546 = vld [vmem:[%s201 + $0x27d0] sm:$0xff]
        %v1547 = vld [vmem:[%s201 + $0x27d8] sm:$0xff]
        %v1548 = vld [vmem:[%s201 + $0x27e0] sm:$0xff]
        %v1549 = vld [vmem:[%s201 + $0x27e8] sm:$0xff]
        %v1550 = vld [vmem:[%s201 + $0x27f0] sm:$0xff]
        %v1551 = vld [vmem:[%s201 + $0x27f8] sm:$0xff]
        %v1552 = vld [vmem:[%s201 + $0x2800] sm:$0xff]
        %v1553 = vld [vmem:[%s201 + $0x2808] sm:$0xff]
        %v1554 = vld [vmem:[%s201 + $0x2810] sm:$0xff]
        %v1555 = vld [vmem:[%s201 + $0x2818] sm:$0xff]
        %v1556 = vld [vmem:[%s201 + $0x2820] sm:$0xff]
        %v1557 = vld [vmem:[%s201 + $0x2828] sm:$0xff]
        %v1558 = vld [vmem:[%s201 + $0x2830] sm:$0xff]
        %v1559 = vld [vmem:[%s201 + $0x2838] sm:$0xff]
        %v1560 = vld [vmem:[%s201 + $0x2840] sm:$0xff]
        %v1561 = vld [vmem:[%s201 + $0x2848] sm:$0xff]
        %v1562 = vld [vmem:[%s201 + $0x2850] sm:$0xff]
        %v1563 = vld [vmem:[%s201 + $0x2858] sm:$0xff]
        %v1564 = vld [vmem:[%s201 + $0x2860] sm:$0xff]
        %v1565 = vld [vmem:[%s201 + $0x2868] sm:$0xff]
        %v1566 = vld [vmem:[%s201 + $0x2870] sm:$0xff]
        %v1567 = vld [vmem:[%s201 + $0x2878] sm:$0xff]
        %v1568 = vld [vmem:[%s201 + $0x2880] sm:$0xff]
        %v1569 = vld [vmem:[%s201 + $0x2888] sm:$0xff]
        %v1570 = vld [vmem:[%s201 + $0x2890] sm:$0xff]
        %v1571 = vld [vmem:[%s201 + $0x2898] sm:$0xff]
        %v1572 = vld [vmem:[%s201 + $0x28a0] sm:$0xff]
        %v1573 = vld [vmem:[%s201 + $0x28a8] sm:$0xff]
        %v1574 = vld [vmem:[%s201 + $0x28b0] sm:$0xff]
        %v1575 = vld [vmem:[%s201 + $0x28b8] sm:$0xff]
        %v1576 = vld [vmem:[%s201 + $0x28c0] sm:$0xff]
        %v1577 = vld [vmem:[%s201 + $0x28c8] sm:$0xff]
        %v1578 = vld [vmem:[%s201 + $0x28d0] sm:$0xff]
        %v1579 = vld [vmem:[%s201 + $0x28d8] sm:$0xff]
        %v1580 = vld [vmem:[%s201 + $0x28e0] sm:$0xff]
        %v1581 = vld [vmem:[%s201 + $0x28e8] sm:$0xff]
        %v1582 = vld [vmem:[%s201 + $0x28f0] sm:$0xff]
        %v1583 = vld [vmem:[%s201 + $0x28f8] sm:$0xff]
        %v1584 = vld [vmem:[%s201 + $0x2900] sm:$0xff]
        %v1585 = vld [vmem:[%s201 + $0x2908] sm:$0xff]
        %v1586 = vld [vmem:[%s201 + $0x2910] sm:$0xff]
        %v1587 = vld [vmem:[%s201 + $0x2918] sm:$0xff]
        %v1588 = vld [vmem:[%s201 + $0x2920] sm:$0xff]
        %v1589 = vld [vmem:[%s201 + $0x2928] sm:$0xff]
        %v1590 = vld [vmem:[%s201 + $0x2930] sm:$0xff]
        %v1591 = vld [vmem:[%s201 + $0x2938] sm:$0xff]
        %v1592 = vld [vmem:[%s201 + $0x2940] sm:$0xff]
        %v1593 = vld [vmem:[%s201 + $0x2948] sm:$0xff]
        %v1594 = vld [vmem:[%s201 + $0x2950] sm:$0xff]
        %v1595 = vld [vmem:[%s201 + $0x2958] sm:$0xff]
        %v1596 = vld [vmem:[%s201 + $0x2960] sm:$0xff]
        %v1597 = vld [vmem:[%s201 + $0x2968] sm:$0xff]
        %v1598 = vld [vmem:[%s201 + $0x2970] sm:$0xff]
        %v1599 = vld [vmem:[%s201 + $0x2978] sm:$0xff]
        %v1600 = vld [vmem:[%s201 + $0x2980] sm:$0xff]
        %v1601 = vld [vmem:[%s201 + $0x2988] sm:$0xff]
        %v1602 = vld [vmem:[%s201 + $0x2990] sm:$0xff]
        %v1603 = vld [vmem:[%s201 + $0x2998] sm:$0xff]
        %v1604 = vld [vmem:[%s201 + $0x29a0] sm:$0xff]
        %v1605 = vld [vmem:[%s201 + $0x29a8] sm:$0xff]
        %v1606 = vld [vmem:[%s201 + $0x29b0] sm:$0xff]
        %v1607 = vld [vmem:[%s201 + $0x29b8] sm:$0xff]
        %v1608 = vld [vmem:[%s201 + $0x29c0] sm:$0xff]
        %v1609 = vld [vmem:[%s201 + $0x29c8] sm:$0xff]
        %v1610 = vld [vmem:[%s201 + $0x29d0] sm:$0xff]
        %v1611 = vld [vmem:[%s201 + $0x29d8] sm:$0xff]
        %v1612 = vld [vmem:[%s201 + $0x29e0] sm:$0xff]
        %v1613 = vld [vmem:[%s201 + $0x29e8] sm:$0xff]
        %v1614 = vld [vmem:[%s201 + $0x29f0] sm:$0xff]
        %v1615 = vld [vmem:[%s201 + $0x29f8] sm:$0xff]
        %v1616 = vld [vmem:[%s201 + $0x2a00] sm:$0xff]
        %v1617 = vld [vmem:[%s201 + $0x2a08] sm:$0xff]
        %v1618 = vld [vmem:[%s201 + $0x2a10] sm:$0xff]
        %v1619 = vld [vmem:[%s201 + $0x2a18] sm:$0xff]
        %v1620 = vld [vmem:[%s201 + $0x2a20] sm:$0xff]
        %v1621 = vld [vmem:[%s201 + $0x2a28] sm:$0xff]
        %v1622 = vld [vmem:[%s201 + $0x2a30] sm:$0xff]
        %v1623 = vld [vmem:[%s201 + $0x2a38] sm:$0xff]
        %v1624 = vld [vmem:[%s201 + $0x2a40] sm:$0xff]
        %v1625 = vld [vmem:[%s201 + $0x2a48] sm:$0xff]
        %v1626 = vld [vmem:[%s201 + $0x2a50] sm:$0xff]
        %v1627 = vld [vmem:[%s201 + $0x2a58] sm:$0xff]
        %v1628 = vld [vmem:[%s201 + $0x2a60] sm:$0xff]
        %v1629 = vld [vmem:[%s201 + $0x2a68] sm:$0xff]
        %v1630 = vld [vmem:[%s201 + $0x2a70] sm:$0xff]
        %v1631 = vld [vmem:[%s201 + $0x2a78] sm:$0xff]
        %v1632 = vld [vmem:[%s201 + $0x2a80] sm:$0xff]
        %v1633 = vld [vmem:[%s201 + $0x2a88] sm:$0xff]
        %v1634 = vld [vmem:[%s201 + $0x2a90] sm:$0xff]
        %v1635 = vld [vmem:[%s201 + $0x2a98] sm:$0xff]
        %v1636 = vld [vmem:[%s201 + $0x2aa0] sm:$0xff]
        %v1637 = vld [vmem:[%s201 + $0x2aa8] sm:$0xff]
        %v1638 = vld [vmem:[%s201 + $0x2ab0] sm:$0xff]
        %v1639 = vld [vmem:[%s201 + $0x2ab8] sm:$0xff]
        %v1640 = vld [vmem:[%s201 + $0x2ac0] sm:$0xff]
        %v1641 = vld [vmem:[%s201 + $0x2ac8] sm:$0xff]
        %v1642 = vld [vmem:[%s201 + $0x2ad0] sm:$0xff]
        %v1643 = vld [vmem:[%s201 + $0x2ad8] sm:$0xff]
        %v1644 = vld [vmem:[%s201 + $0x2ae0] sm:$0xff]
        %v1645 = vld [vmem:[%s201 + $0x2ae8] sm:$0xff]
        %v1646 = vld [vmem:[%s201 + $0x2af0] sm:$0xff]
        %v1647 = vld [vmem:[%s201 + $0x2af8] sm:$0xff]
        %v1648 = vld [vmem:[%s201 + $0x2b00] sm:$0xff]
        %v1649 = vld [vmem:[%s201 + $0x2b08] sm:$0xff]
        %v1650 = vld [vmem:[%s201 + $0x2b10] sm:$0xff]
        %v1651 = vld [vmem:[%s201 + $0x2b18] sm:$0xff]
        %v1652 = vld [vmem:[%s201 + $0x2b20] sm:$0xff]
        %v1653 = vld [vmem:[%s201 + $0x2b28] sm:$0xff]
        %v1654 = vld [vmem:[%s201 + $0x2b30] sm:$0xff]
        %v1655 = vld [vmem:[%s201 + $0x2b38] sm:$0xff]
        %v1656 = vld [vmem:[%s201 + $0x2b40] sm:$0xff]
        %v1657 = vld [vmem:[%s201 + $0x2b48] sm:$0xff]
        %v1658 = vld [vmem:[%s201 + $0x2b50] sm:$0xff]
        %v1659 = vld [vmem:[%s201 + $0x2b58] sm:$0xff]
        %v1660 = vld [vmem:[%s201 + $0x2b60] sm:$0xff]
        %v1661 = vld [vmem:[%s201 + $0x2b68] sm:$0xff]
        %v1662 = vld [vmem:[%s201 + $0x2b70] sm:$0xff]
        %v1663 = vld [vmem:[%s201 + $0x2b78] sm:$0xff]
        %v1664 = vld [vmem:[%s201 + $0x2b80] sm:$0xff]
        %v1665 = vld [vmem:[%s201 + $0x2b88] sm:$0xff]
        %v1666 = vld [vmem:[%s201 + $0x2b90] sm:$0xff]
        %v1667 = vld [vmem:[%s201 + $0x2b98] sm:$0xff]
        %v1668 = vld [vmem:[%s201 + $0x2ba0] sm:$0xff]
        %v1669 = vld [vmem:[%s201 + $0x2ba8] sm:$0xff]
        %v1670 = vld [vmem:[%s201 + $0x2bb0] sm:$0xff]
        %v1671 = vld [vmem:[%s201 + $0x2bb8] sm:$0xff]
        %v1672 = vld [vmem:[%s201 + $0x2bc0] sm:$0xff]
        %v1673 = vld [vmem:[%s201 + $0x2bc8] sm:$0xff]
        %v1674 = vld [vmem:[%s201 + $0x2bd0] sm:$0xff]
        %v1675 = vld [vmem:[%s201 + $0x2bd8] sm:$0xff]
        %v1676 = vld [vmem:[%s201 + $0x2be0] sm:$0xff]
        %v1677 = vld [vmem:[%s201 + $0x2be8] sm:$0xff]
        %v1678 = vld [vmem:[%s201 + $0x2bf0] sm:$0xff]
        %v1679 = vld [vmem:[%s201 + $0x2bf8] sm:$0xff]
        %v1680 = vld [vmem:[%s201 + $0x2c00] sm:$0xff]
        %v1681 = vld [vmem:[%s201 + $0x2c08] sm:$0xff]
        %v1682 = vld [vmem:[%s201 + $0x2c10] sm:$0xff]
        %v1683 = vld [vmem:[%s201 + $0x2c18] sm:$0xff]
        %v1684 = vld [vmem:[%s201 + $0x2c20] sm:$0xff]
        %v1685 = vld [vmem:[%s201 + $0x2c28] sm:$0xff]
        %v1686 = vld [vmem:[%s201 + $0x2c30] sm:$0xff]
        %v1687 = vld [vmem:[%s201 + $0x2c38] sm:$0xff]
        %v1688 = vld [vmem:[%s201 + $0x2c40] sm:$0xff]
        %v1689 = vld [vmem:[%s201 + $0x2c48] sm:$0xff]
        %v1690 = vld [vmem:[%s201 + $0x2c50] sm:$0xff]
        %v1691 = vld [vmem:[%s201 + $0x2c58] sm:$0xff]
        %v1692 = vld [vmem:[%s201 + $0x2c60] sm:$0xff]
        %v1693 = vld [vmem:[%s201 + $0x2c68] sm:$0xff]
        %v1694 = vld [vmem:[%s201 + $0x2c70] sm:$0xff]
        %v1695 = vld [vmem:[%s201 + $0x2c78] sm:$0xff]
        %v1696 = vld [vmem:[%s201 + $0x2c80] sm:$0xff]
        %v1697 = vld [vmem:[%s201 + $0x2c88] sm:$0xff]
        %v1698 = vld [vmem:[%s201 + $0x2c90] sm:$0xff]
        %v1699 = vld [vmem:[%s201 + $0x2c98] sm:$0xff]
        %v1700 = vld [vmem:[%s201 + $0x2ca0] sm:$0xff]
        %v1701 = vld [vmem:[%s201 + $0x2ca8] sm:$0xff]
        %v1702 = vld [vmem:[%s201 + $0x2cb0] sm:$0xff]
        %v1703 = vld [vmem:[%s201 + $0x2cb8] sm:$0xff]
        %v1704 = vld [vmem:[%s201 + $0x2cc0] sm:$0xff]
        %v1705 = vld [vmem:[%s201 + $0x2cc8] sm:$0xff]
        %v1706 = vld [vmem:[%s201 + $0x2cd0] sm:$0xff]
        %v1707 = vld [vmem:[%s201 + $0x2cd8] sm:$0xff]
        %v1708 = vld [vmem:[%s201 + $0x2ce0] sm:$0xff]
        %v1709 = vld [vmem:[%s201 + $0x2ce8] sm:$0xff]
        %v1710 = vld [vmem:[%s201 + $0x2cf0] sm:$0xff]
        %v1711 = vld [vmem:[%s201 + $0x2cf8] sm:$0xff]
        %v1712 = vld [vmem:[%s201 + $0x2d00] sm:$0xff]
        %v1713 = vld [vmem:[%s201 + $0x2d08] sm:$0xff]
        %v1714 = vld [vmem:[%s201 + $0x2d10] sm:$0xff]
        %v1715 = vld [vmem:[%s201 + $0x2d18] sm:$0xff]
        %v1716 = vld [vmem:[%s201 + $0x2d20] sm:$0xff]
        %v1717 = vld [vmem:[%s201 + $0x2d28] sm:$0xff]
        %v1718 = vld [vmem:[%s201 + $0x2d30] sm:$0xff]
        %v1719 = vld [vmem:[%s201 + $0x2d38] sm:$0xff]
        %v1720 = vld [vmem:[%s201 + $0x2d40] sm:$0xff]
        %v1721 = vld [vmem:[%s201 + $0x2d48] sm:$0xff]
        %v1722 = vld [vmem:[%s201 + $0x2d50] sm:$0xff]
        %v1723 = vld [vmem:[%s201 + $0x2d58] sm:$0xff]
        %v1724 = vld [vmem:[%s201 + $0x2d60] sm:$0xff]
        %v1725 = vld [vmem:[%s201 + $0x2d68] sm:$0xff]
        %v1726 = vld [vmem:[%s201 + $0x2d70] sm:$0xff]
        %v1727 = vld [vmem:[%s201 + $0x2d78] sm:$0xff]
        %v1728 = vld [vmem:[%s201 + $0x2d80] sm:$0xff]
        %v1729 = vld [vmem:[%s201 + $0x2d88] sm:$0xff]
        %v1730 = vld [vmem:[%s201 + $0x2d90] sm:$0xff]
        %v1731 = vld [vmem:[%s201 + $0x2d98] sm:$0xff]
        %v1732 = vld [vmem:[%s201 + $0x2da0] sm:$0xff]
        %v1733 = vld [vmem:[%s201 + $0x2da8] sm:$0xff]
        %v1734 = vld [vmem:[%s201 + $0x2db0] sm:$0xff]
        %v1735 = vld [vmem:[%s201 + $0x2db8] sm:$0xff]
        %v1736 = vld [vmem:[%s201 + $0x2dc0] sm:$0xff]
        %v1737 = vld [vmem:[%s201 + $0x2dc8] sm:$0xff]
        %v1738 = vld [vmem:[%s201 + $0x2dd0] sm:$0xff]
        %v1739 = vld [vmem:[%s201 + $0x2dd8] sm:$0xff]
        %v1740 = vld [vmem:[%s201 + $0x2de0] sm:$0xff]
        %v1741 = vld [vmem:[%s201 + $0x2de8] sm:$0xff]
        %v1742 = vld [vmem:[%s201 + $0x2df0] sm:$0xff]
        %v1743 = vld [vmem:[%s201 + $0x2df8] sm:$0xff]
        %v1744 = vld [vmem:[%s201 + $0x2e00] sm:$0xff]
        %v1745 = vld [vmem:[%s201 + $0x2e08] sm:$0xff]
        %v1746 = vld [vmem:[%s201 + $0x2e10] sm:$0xff]
        %v1747 = vld [vmem:[%s201 + $0x2e18] sm:$0xff]
        %v1748 = vld [vmem:[%s201 + $0x2e20] sm:$0xff]
        %v1749 = vld [vmem:[%s201 + $0x2e28] sm:$0xff]
        %v1750 = vld [vmem:[%s201 + $0x2e30] sm:$0xff]
        %v1751 = vld [vmem:[%s201 + $0x2e38] sm:$0xff]
        %v1752 = vld [vmem:[%s201 + $0x2e40] sm:$0xff]
        %v1753 = vld [vmem:[%s201 + $0x2e48] sm:$0xff]
        %v1754 = vld [vmem:[%s201 + $0x2e50] sm:$0xff]
        %v1755 = vld [vmem:[%s201 + $0x2e58] sm:$0xff]
        %v1756 = vld [vmem:[%s201 + $0x2e60] sm:$0xff]
        %v1757 = vld [vmem:[%s201 + $0x2e68] sm:$0xff]
        %v1758 = vld [vmem:[%s201 + $0x2e70] sm:$0xff]
        %v1759 = vld [vmem:[%s201 + $0x2e78] sm:$0xff]
        %v1760 = vld [vmem:[%s201 + $0x2e80] sm:$0xff]
        %v1761 = vld [vmem:[%s201 + $0x2e88] sm:$0xff]
        %v1762 = vld [vmem:[%s201 + $0x2e90] sm:$0xff]
        %v1763 = vld [vmem:[%s201 + $0x2e98] sm:$0xff]
        %v1764 = vld [vmem:[%s201 + $0x2ea0] sm:$0xff]
        %v1765 = vld [vmem:[%s201 + $0x2ea8] sm:$0xff]
        %v1766 = vld [vmem:[%s201 + $0x2eb0] sm:$0xff]
        %v1767 = vld [vmem:[%s201 + $0x2eb8] sm:$0xff]
        %v1768 = vld [vmem:[%s201 + $0x2ec0] sm:$0xff]
        %v1769 = vld [vmem:[%s201 + $0x2ec8] sm:$0xff]
        %v1770 = vld [vmem:[%s201 + $0x2ed0] sm:$0xff]
        %v1771 = vld [vmem:[%s201 + $0x2ed8] sm:$0xff]
        %v1772 = vld [vmem:[%s201 + $0x2ee0] sm:$0xff]
        %v1773 = vld [vmem:[%s201 + $0x2ee8] sm:$0xff]
        %v1774 = vld [vmem:[%s201 + $0x2ef0] sm:$0xff]
        %v1775 = vld [vmem:[%s201 + $0x2ef8] sm:$0xff]
        %v1776 = vld [vmem:[%s201 + $0x2f00] sm:$0xff]
        %v1777 = vld [vmem:[%s201 + $0x2f08] sm:$0xff]
        %v1778 = vld [vmem:[%s201 + $0x2f10] sm:$0xff]
        %v1779 = vld [vmem:[%s201 + $0x2f18] sm:$0xff]
        %v1780 = vld [vmem:[%s201 + $0x2f20] sm:$0xff]
        %v1781 = vld [vmem:[%s201 + $0x2f28] sm:$0xff]
        %v1782 = vld [vmem:[%s201 + $0x2f30] sm:$0xff]
        %v1783 = vld [vmem:[%s201 + $0x2f38] sm:$0xff]
        %v1784 = vld [vmem:[%s201 + $0x2f40] sm:$0xff]
        %v1785 = vld [vmem:[%s201 + $0x2f48] sm:$0xff]
        %v1786 = vld [vmem:[%s201 + $0x2f50] sm:$0xff]
        %v1787 = vld [vmem:[%s201 + $0x2f58] sm:$0xff]
        %v1788 = vld [vmem:[%s201 + $0x2f60] sm:$0xff]
        %v1789 = vld [vmem:[%s201 + $0x2f68] sm:$0xff]
        %v1790 = vld [vmem:[%s201 + $0x2f70] sm:$0xff]
        %v1791 = vld [vmem:[%s201 + $0x2f78] sm:$0xff]
        %v1792 = vld [vmem:[%s201 + $0x2f80] sm:$0xff]
        %v1793 = vld [vmem:[%s201 + $0x2f88] sm:$0xff]
        %v1794 = vld [vmem:[%s201 + $0x2f90] sm:$0xff]
        %v1795 = vld [vmem:[%s201 + $0x2f98] sm:$0xff]
        %v1796 = vld [vmem:[%s201 + $0x2fa0] sm:$0xff]
        %v1797 = vld [vmem:[%s201 + $0x2fa8] sm:$0xff]
        %v1798 = vld [vmem:[%s201 + $0x2fb0] sm:$0xff]
        %v1799 = vld [vmem:[%s201 + $0x2fb8] sm:$0xff]
        %v1800 = vld [vmem:[%s201 + $0x2fc0] sm:$0xff]
        %v1801 = vld [vmem:[%s201 + $0x2fc8] sm:$0xff]
        %v1802 = vld [vmem:[%s201 + $0x2fd0] sm:$0xff]
        %v1803 = vld [vmem:[%s201 + $0x2fd8] sm:$0xff]
        %v1804 = vld [vmem:[%s201 + $0x2fe0] sm:$0xff]
        %v1805 = vld [vmem:[%s201 + $0x2fe8] sm:$0xff]
        %v1806 = vld [vmem:[%s201 + $0x2ff0] sm:$0xff]
        %v1807 = vld [vmem:[%s201 + $0x2ff8] sm:$0xff]
        %v1808 = vld [vmem:[%s201 + $0x3000] sm:$0xff]
        %v1809 = vld [vmem:[%s201 + $0x3008] sm:$0xff]
        %v1810 = vld [vmem:[%s201 + $0x3010] sm:$0xff]
        %v1811 = vld [vmem:[%s201 + $0x3018] sm:$0xff]
        %v1812 = vld [vmem:[%s201 + $0x3020] sm:$0xff]
        %v1813 = vld [vmem:[%s201 + $0x3028] sm:$0xff]
        %v1814 = vld [vmem:[%s201 + $0x3030] sm:$0xff]
        %v1815 = vld [vmem:[%s201 + $0x3038] sm:$0xff]
        %v1816 = vld [vmem:[%s201 + $0x3040] sm:$0xff]
        %v1817 = vld [vmem:[%s201 + $0x3048] sm:$0xff]
        %v1818 = vld [vmem:[%s201 + $0x3050] sm:$0xff]
        %v1819 = vld [vmem:[%s201 + $0x3058] sm:$0xff]
        %v1820 = vld [vmem:[%s201 + $0x3060] sm:$0xff]
        %v1821 = vld [vmem:[%s201 + $0x3068] sm:$0xff]
        %v1822 = vld [vmem:[%s201 + $0x3070] sm:$0xff]
        %v1823 = vld [vmem:[%s201 + $0x3078] sm:$0xff]
        %v1824 = vld [vmem:[%s201 + $0x3080] sm:$0xff]
        %v1825 = vld [vmem:[%s201 + $0x3088] sm:$0xff]
        %v1826 = vld [vmem:[%s201 + $0x3090] sm:$0xff]
        %v1827 = vld [vmem:[%s201 + $0x3098] sm:$0xff]
        %v1828 = vld [vmem:[%s201 + $0x30a0] sm:$0xff]
        %v1829 = vld [vmem:[%s201 + $0x30a8] sm:$0xff]
        %v1830 = vld [vmem:[%s201 + $0x30b0] sm:$0xff]
        %v1831 = vld [vmem:[%s201 + $0x30b8] sm:$0xff]
        %v1832 = vld [vmem:[%s201 + $0x30c0] sm:$0xff]
        %v1833 = vld [vmem:[%s201 + $0x30c8] sm:$0xff]
        %v1834 = vld [vmem:[%s201 + $0x30d0] sm:$0xff]
        %v1835 = vld [vmem:[%s201 + $0x30d8] sm:$0xff]
        %v1836 = vld [vmem:[%s201 + $0x30e0] sm:$0xff]
        %v1837 = vld [vmem:[%s201 + $0x30e8] sm:$0xff]
        %v1838 = vld [vmem:[%s201 + $0x30f0] sm:$0xff]
        %v1839 = vld [vmem:[%s201 + $0x30f8] sm:$0xff]
        %v1840 = vld [vmem:[%s201 + $0x3100] sm:$0xff]
        %v1841 = vld [vmem:[%s201 + $0x3108] sm:$0xff]
        %v1842 = vld [vmem:[%s201 + $0x3110] sm:$0xff]
        %v1843 = vld [vmem:[%s201 + $0x3118] sm:$0xff]
        %v1844 = vld [vmem:[%s201 + $0x3120] sm:$0xff]
        %v1845 = vld [vmem:[%s201 + $0x3128] sm:$0xff]
        %v1846 = vld [vmem:[%s201 + $0x3130] sm:$0xff]
        %v1847 = vld [vmem:[%s201 + $0x3138] sm:$0xff]
        %v1848 = vld [vmem:[%s201 + $0x3140] sm:$0xff]
        %v1849 = vld [vmem:[%s201 + $0x3148] sm:$0xff]
        %v1850 = vld [vmem:[%s201 + $0x3150] sm:$0xff]
        %v1851 = vld [vmem:[%s201 + $0x3158] sm:$0xff]
        %v1852 = vld [vmem:[%s201 + $0x3160] sm:$0xff]
        %v1853 = vld [vmem:[%s201 + $0x3168] sm:$0xff]
        %v1854 = vld [vmem:[%s201 + $0x3170] sm:$0xff]
        %v1855 = vld [vmem:[%s201 + $0x3178] sm:$0xff]
        %v1856 = vld [vmem:[%s201 + $0x3180] sm:$0xff]
        %v1857 = vld [vmem:[%s201 + $0x3188] sm:$0xff]
        %v1858 = vld [vmem:[%s201 + $0x3190] sm:$0xff]
        %v1859 = vld [vmem:[%s201 + $0x3198] sm:$0xff]
        %v1860 = vld [vmem:[%s201 + $0x31a0] sm:$0xff]
        %v1861 = vld [vmem:[%s201 + $0x31a8] sm:$0xff]
        %v1862 = vld [vmem:[%s201 + $0x31b0] sm:$0xff]
        %v1863 = vld [vmem:[%s201 + $0x31b8] sm:$0xff]
        %v1864 = vld [vmem:[%s201 + $0x31c0] sm:$0xff]
        %v1865 = vld [vmem:[%s201 + $0x31c8] sm:$0xff]
        %v1866 = vld [vmem:[%s201 + $0x31d0] sm:$0xff]
        %v1867 = vld [vmem:[%s201 + $0x31d8] sm:$0xff]
        %v1868 = vld [vmem:[%s201 + $0x31e0] sm:$0xff]
        %v1869 = vld [vmem:[%s201 + $0x31e8] sm:$0xff]
        %v1870 = vld [vmem:[%s201 + $0x31f0] sm:$0xff]
        %v1871 = vld [vmem:[%s201 + $0x31f8] sm:$0xff]
        %v1872 = vld [vmem:[%s201 + $0x3200] sm:$0xff]
        %v1873 = vld [vmem:[%s201 + $0x3208] sm:$0xff]
        %v1874 = vld [vmem:[%s201 + $0x3210] sm:$0xff]
        %v1875 = vld [vmem:[%s201 + $0x3218] sm:$0xff]
        %v1876 = vld [vmem:[%s201 + $0x3220] sm:$0xff]
        %v1877 = vld [vmem:[%s201 + $0x3228] sm:$0xff]
        %v1878 = vld [vmem:[%s201 + $0x3230] sm:$0xff]
        %v1879 = vld [vmem:[%s201 + $0x3238] sm:$0xff]
        %v1880 = vld [vmem:[%s201 + $0x3240] sm:$0xff]
        %v1881 = vld [vmem:[%s201 + $0x3248] sm:$0xff]
        %v1882 = vld [vmem:[%s201 + $0x3250] sm:$0xff]
        %v1883 = vld [vmem:[%s201 + $0x3258] sm:$0xff]
        %v1884 = vld [vmem:[%s201 + $0x3260] sm:$0xff]
        %v1885 = vld [vmem:[%s201 + $0x3268] sm:$0xff]
        %v1886 = vld [vmem:[%s201 + $0x3270] sm:$0xff]
        %v1887 = vld [vmem:[%s201 + $0x3278] sm:$0xff]
        %v1888 = vld [vmem:[%s201 + $0x3280] sm:$0xff]
        %v1889 = vld [vmem:[%s201 + $0x3288] sm:$0xff]
        %v1890 = vld [vmem:[%s201 + $0x3290] sm:$0xff]
        %v1891 = vld [vmem:[%s201 + $0x3298] sm:$0xff]
        %v1892 = vld [vmem:[%s201 + $0x32a0] sm:$0xff]
        %v1893 = vld [vmem:[%s201 + $0x32a8] sm:$0xff]
        %v1894 = vld [vmem:[%s201 + $0x32b0] sm:$0xff]
        %v1895 = vld [vmem:[%s201 + $0x32b8] sm:$0xff]
        %v1896 = vld [vmem:[%s201 + $0x32c0] sm:$0xff]
        %v1897 = vld [vmem:[%s201 + $0x32c8] sm:$0xff]
        %v1898 = vld [vmem:[%s201 + $0x32d0] sm:$0xff]
        %v1899 = vld [vmem:[%s201 + $0x32d8] sm:$0xff]
        %v1900 = vld [vmem:[%s201 + $0x32e0] sm:$0xff]
        %v1901 = vld [vmem:[%s201 + $0x32e8] sm:$0xff]
        %v1902 = vld [vmem:[%s201 + $0x32f0] sm:$0xff]
        %v1903 = vld [vmem:[%s201 + $0x32f8] sm:$0xff]
        %v1904 = vld [vmem:[%s201 + $0x3300] sm:$0xff]
        %v1905 = vld [vmem:[%s201 + $0x3308] sm:$0xff]
        %v1906 = vld [vmem:[%s201 + $0x3310] sm:$0xff]
        %v1907 = vld [vmem:[%s201 + $0x3318] sm:$0xff]
        %v1908 = vld [vmem:[%s201 + $0x3320] sm:$0xff]
        %v1909 = vld [vmem:[%s201 + $0x3328] sm:$0xff]
        %v1910 = vld [vmem:[%s201 + $0x3330] sm:$0xff]
        %v1911 = vld [vmem:[%s201 + $0x3338] sm:$0xff]
        %v1912 = vld [vmem:[%s201 + $0x3340] sm:$0xff]
        %v1913 = vld [vmem:[%s201 + $0x3348] sm:$0xff]
        %v1914 = vld [vmem:[%s201 + $0x3350] sm:$0xff]
        %v1915 = vld [vmem:[%s201 + $0x3358] sm:$0xff]
        %v1916 = vld [vmem:[%s201 + $0x3360] sm:$0xff]
        %v1917 = vld [vmem:[%s201 + $0x3368] sm:$0xff]
        %v1918 = vld [vmem:[%s201 + $0x3370] sm:$0xff]
        %v1919 = vld [vmem:[%s201 + $0x3378] sm:$0xff]
        %v1920 = vld [vmem:[%s201 + $0x3380] sm:$0xff]
        %v1921 = vld [vmem:[%s201 + $0x3388] sm:$0xff]
        %v1922 = vld [vmem:[%s201 + $0x3390] sm:$0xff]
        %v1923 = vld [vmem:[%s201 + $0x3398] sm:$0xff]
        %v1924 = vld [vmem:[%s201 + $0x33a0] sm:$0xff]
        %v1925 = vld [vmem:[%s201 + $0x33a8] sm:$0xff]
        %v1926 = vld [vmem:[%s201 + $0x33b0] sm:$0xff]
        %v1927 = vld [vmem:[%s201 + $0x33b8] sm:$0xff]
        %v1928 = vld [vmem:[%s201 + $0x33c0] sm:$0xff]
        %v1929 = vld [vmem:[%s201 + $0x33c8] sm:$0xff]
        %v1930 = vld [vmem:[%s201 + $0x33d0] sm:$0xff]
        %v1931 = vld [vmem:[%s201 + $0x33d8] sm:$0xff]
        %v1932 = vld [vmem:[%s201 + $0x33e0] sm:$0xff]
        %v1933 = vld [vmem:[%s201 + $0x33e8] sm:$0xff]
        %v1934 = vld [vmem:[%s201 + $0x33f0] sm:$0xff]
        %v1935 = vld [vmem:[%s201 + $0x33f8] sm:$0xff]
        %v1936 = vld [vmem:[%s201 + $0x3400] sm:$0xff]
        %v1937 = vld [vmem:[%s201 + $0x3408] sm:$0xff]
        %v1938 = vld [vmem:[%s201 + $0x3410] sm:$0xff]
        %v1939 = vld [vmem:[%s201 + $0x3418] sm:$0xff]
        %v1940 = vld [vmem:[%s201 + $0x3420] sm:$0xff]
        %v1941 = vld [vmem:[%s201 + $0x3428] sm:$0xff]
        %v1942 = vld [vmem:[%s201 + $0x3430] sm:$0xff]
        %v1943 = vld [vmem:[%s201 + $0x3438] sm:$0xff]
        %v1944 = vld [vmem:[%s201 + $0x3440] sm:$0xff]
        %v1945 = vld [vmem:[%s201 + $0x3448] sm:$0xff]
        %v1946 = vld [vmem:[%s201 + $0x3450] sm:$0xff]
        %v1947 = vld [vmem:[%s201 + $0x3458] sm:$0xff]
        %v1948 = vld [vmem:[%s201 + $0x3460] sm:$0xff]
        %v1949 = vld [vmem:[%s201 + $0x3468] sm:$0xff]
        %v1950 = vld [vmem:[%s201 + $0x3470] sm:$0xff]
        %v1951 = vld [vmem:[%s201 + $0x3478] sm:$0xff]
        %v1952 = vld [vmem:[%s201 + $0x3480] sm:$0xff]
        %v1953 = vld [vmem:[%s201 + $0x3488] sm:$0xff]
        %v1954 = vld [vmem:[%s201 + $0x3490] sm:$0xff]
        %v1955 = vld [vmem:[%s201 + $0x3498] sm:$0xff]
        %v1956 = vld [vmem:[%s201 + $0x34a0] sm:$0xff]
        %v1957 = vld [vmem:[%s201 + $0x34a8] sm:$0xff]
        %v1958 = vld [vmem:[%s201 + $0x34b0] sm:$0xff]
        %v1959 = vld [vmem:[%s201 + $0x34b8] sm:$0xff]
        %v1960 = vld [vmem:[%s201 + $0x34c0] sm:$0xff]
        %v1961 = vld [vmem:[%s201 + $0x34c8] sm:$0xff]
        %v1962 = vld [vmem:[%s201 + $0x34d0] sm:$0xff]
        %v1963 = vld [vmem:[%s201 + $0x34d8] sm:$0xff]
        %v1964 = vld [vmem:[%s201 + $0x34e0] sm:$0xff]
        %v1965 = vld [vmem:[%s201 + $0x34e8] sm:$0xff]
        %v1966 = vld [vmem:[%s201 + $0x34f0] sm:$0xff]
        %v1967 = vld [vmem:[%s201 + $0x34f8] sm:$0xff]
        %v1968 = vld [vmem:[%s201 + $0x3500] sm:$0xff]
        %v1969 = vld [vmem:[%s201 + $0x3508] sm:$0xff]
        %v1970 = vld [vmem:[%s201 + $0x3510] sm:$0xff]
        %v1971 = vld [vmem:[%s201 + $0x3518] sm:$0xff]
        %v1972 = vld [vmem:[%s201 + $0x3520] sm:$0xff]
        %v1973 = vld [vmem:[%s201 + $0x3528] sm:$0xff]
        %v1974 = vld [vmem:[%s201 + $0x3530] sm:$0xff]
        %v1975 = vld [vmem:[%s201 + $0x3538] sm:$0xff]
        %v1976 = vld [vmem:[%s201 + $0x3540] sm:$0xff]
        %v1977 = vld [vmem:[%s201 + $0x3548] sm:$0xff]
        %v1978 = vld [vmem:[%s201 + $0x3550] sm:$0xff]
        %v1979 = vld [vmem:[%s201 + $0x3558] sm:$0xff]
        %v1980 = vld [vmem:[%s201 + $0x3560] sm:$0xff]
        %v1981 = vld [vmem:[%s201 + $0x3568] sm:$0xff]
        %v1982 = vld [vmem:[%s201 + $0x3570] sm:$0xff]
        %v1983 = vld [vmem:[%s201 + $0x3578] sm:$0xff]
        %v1984 = vld [vmem:[%s201 + $0x3580] sm:$0xff]
        %v1985 = vld [vmem:[%s201 + $0x3588] sm:$0xff]
        %v1986 = vld [vmem:[%s201 + $0x3590] sm:$0xff]
        %v1987 = vld [vmem:[%s201 + $0x3598] sm:$0xff]
        %v1988 = vld [vmem:[%s201 + $0x35a0] sm:$0xff]
        %v1989 = vld [vmem:[%s201 + $0x35a8] sm:$0xff]
        %v1990 = vld [vmem:[%s201 + $0x35b0] sm:$0xff]
        %v1991 = vld [vmem:[%s201 + $0x35b8] sm:$0xff]
        %v1992 = vld [vmem:[%s201 + $0x35c0] sm:$0xff]
        %v1993 = vld [vmem:[%s201 + $0x35c8] sm:$0xff]
        %v1994 = vld [vmem:[%s201 + $0x35d0] sm:$0xff]
        %v1995 = vld [vmem:[%s201 + $0x35d8] sm:$0xff]
        %v1996 = vld [vmem:[%s201 + $0x35e0] sm:$0xff]
        %v1997 = vld [vmem:[%s201 + $0x35e8] sm:$0xff]
        %v1998 = vld [vmem:[%s201 + $0x35f0] sm:$0xff]
        %v1999 = vld [vmem:[%s201 + $0x35f8] sm:$0xff]
        %v2000 = vld [vmem:[%s201 + $0x3600] sm:$0xff]
        %v2001 = vld [vmem:[%s201 + $0x3608] sm:$0xff]
        %v2002 = vld [vmem:[%s201 + $0x3610] sm:$0xff]
        %v2003 = vld [vmem:[%s201 + $0x3618] sm:$0xff]
        %v2004 = vld [vmem:[%s201 + $0x3620] sm:$0xff]
        %v2005 = vld [vmem:[%s201 + $0x3628] sm:$0xff]
        %v2006 = vld [vmem:[%s201 + $0x3630] sm:$0xff]
        %v2007 = vld [vmem:[%s201 + $0x3638] sm:$0xff]
        %v2008 = vld [vmem:[%s201 + $0x3640] sm:$0xff]
        %v2009 = vld [vmem:[%s201 + $0x3648] sm:$0xff]
        %v2010 = vld [vmem:[%s201 + $0x3650] sm:$0xff]
        %v2011 = vld [vmem:[%s201 + $0x3658] sm:$0xff]
        %v2012 = vld [vmem:[%s201 + $0x3660] sm:$0xff]
        %v2013 = vld [vmem:[%s201 + $0x3668] sm:$0xff]
        %v2014 = vld [vmem:[%s201 + $0x3670] sm:$0xff]
        %v2015 = vld [vmem:[%s201 + $0x3678] sm:$0xff]
        %v2016 = vld [vmem:[%s201 + $0x3680] sm:$0xff]
        %v2017 = vld [vmem:[%s201 + $0x3688] sm:$0xff]
        %v2018 = vld [vmem:[%s201 + $0x3690] sm:$0xff]
        %v2019 = vld [vmem:[%s201 + $0x3698] sm:$0xff]
        %v2020 = vld [vmem:[%s201 + $0x36a0] sm:$0xff]
        %v2021 = vld [vmem:[%s201 + $0x36a8] sm:$0xff]
        %v2022 = vld [vmem:[%s201 + $0x36b0] sm:$0xff]
        %v2023 = vld [vmem:[%s201 + $0x36b8] sm:$0xff]
        %v2024 = vld [vmem:[%s201 + $0x36c0] sm:$0xff]
        %v2025 = vld [vmem:[%s201 + $0x36c8] sm:$0xff]
        %v2026 = vld [vmem:[%s201 + $0x36d0] sm:$0xff]
        %v2027 = vld [vmem:[%s201 + $0x36d8] sm:$0xff]
        %v2028 = vld [vmem:[%s201 + $0x36e0] sm:$0xff]
        %v2029 = vld [vmem:[%s201 + $0x36e8] sm:$0xff]
        %v2030 = vld [vmem:[%s201 + $0x36f0] sm:$0xff]
        %v2031 = vld [vmem:[%s201 + $0x36f8] sm:$0xff]
        %v2032 = vld [vmem:[%s201 + $0x3700] sm:$0xff]
        %v2033 = vld [vmem:[%s201 + $0x3708] sm:$0xff]
        %v2034 = vld [vmem:[%s201 + $0x3710] sm:$0xff]
        %v2035 = vld [vmem:[%s201 + $0x3718] sm:$0xff]
        %v2036 = vld [vmem:[%s201 + $0x3720] sm:$0xff]
        %v2037 = vld [vmem:[%s201 + $0x3728] sm:$0xff]
        %v2038 = vld [vmem:[%s201 + $0x3730] sm:$0xff]
        %v2039 = vld [vmem:[%s201 + $0x3738] sm:$0xff]
        %v2040 = vld [vmem:[%s201 + $0x3740] sm:$0xff]
        %v2041 = vld [vmem:[%s201 + $0x3748] sm:$0xff]
        %v2042 = vld [vmem:[%s201 + $0x3750] sm:$0xff]
        %v2043 = vld [vmem:[%s201 + $0x3758] sm:$0xff]
        %v2044 = vld [vmem:[%s201 + $0x3760] sm:$0xff]
        %v2045 = vld [vmem:[%s201 + $0x3768] sm:$0xff]
        %v2046 = vld [vmem:[%s201 + $0x3770] sm:$0xff]
        %v2047 = vld [vmem:[%s201 + $0x3778] sm:$0xff]
        %v2048 = vld [vmem:[%s201 + $0x3780] sm:$0xff]
        %v2049 = vld [vmem:[%s201 + $0x3788] sm:$0xff]
        %v2050 = vld [vmem:[%s201 + $0x3790] sm:$0xff]
        %v2051 = vld [vmem:[%s201 + $0x3798] sm:$0xff]
        %v2052 = vld [vmem:[%s201 + $0x37a0] sm:$0xff]
        %v2053 = vld [vmem:[%s201 + $0x37a8] sm:$0xff]
        %v2054 = vld [vmem:[%s201 + $0x37b0] sm:$0xff]
        %v2055 = vld [vmem:[%s201 + $0x37b8] sm:$0xff]
        %v2056 = vld [vmem:[%s201 + $0x37c0] sm:$0xff]
        %v2057 = vld [vmem:[%s201 + $0x37c8] sm:$0xff]
        %v2058 = vld [vmem:[%s201 + $0x37d0] sm:$0xff]
        %v2059 = vld [vmem:[%s201 + $0x37d8] sm:$0xff]
        %v2060 = vld [vmem:[%s201 + $0x37e0] sm:$0xff]
        %v2061 = vld [vmem:[%s201 + $0x37e8] sm:$0xff]
        %v2062 = vld [vmem:[%s201 + $0x37f0] sm:$0xff]
        %v2063 = vld [vmem:[%s201 + $0x37f8] sm:$0xff]
        %v2064 = vld [vmem:[%s201 + $0x3800] sm:$0xff]
        %v2065 = vld [vmem:[%s201 + $0x3808] sm:$0xff]
        %v2066 = vld [vmem:[%s201 + $0x3810] sm:$0xff]
        %v2067 = vld [vmem:[%s201 + $0x3818] sm:$0xff]
        %v2068 = vld [vmem:[%s201 + $0x3820] sm:$0xff]
        %v2069 = vld [vmem:[%s201 + $0x3828] sm:$0xff]
        %v2070 = vld [vmem:[%s201 + $0x3830] sm:$0xff]
        %v2071 = vld [vmem:[%s201 + $0x3838] sm:$0xff]
        %v2072 = vld [vmem:[%s201 + $0x3840] sm:$0xff]
        %v2073 = vld [vmem:[%s201 + $0x3848] sm:$0xff]
        %v2074 = vld [vmem:[%s201 + $0x3850] sm:$0xff]
        %v2075 = vld [vmem:[%s201 + $0x3858] sm:$0xff]
        %v2076 = vld [vmem:[%s201 + $0x3860] sm:$0xff]
        %v2077 = vld [vmem:[%s201 + $0x3868] sm:$0xff]
        %v2078 = vld [vmem:[%s201 + $0x3870] sm:$0xff]
        %v2079 = vld [vmem:[%s201 + $0x3878] sm:$0xff]
        %v2080 = vld [vmem:[%s201 + $0x3880] sm:$0xff]
        %v2081 = vld [vmem:[%s201 + $0x3888] sm:$0xff]
        %v2082 = vld [vmem:[%s201 + $0x3890] sm:$0xff]
        %v2083 = vld [vmem:[%s201 + $0x3898] sm:$0xff]
        %v2084 = vld [vmem:[%s201 + $0x38a0] sm:$0xff]
        %v2085 = vld [vmem:[%s201 + $0x38a8] sm:$0xff]
        %v2086 = vld [vmem:[%s201 + $0x38b0] sm:$0xff]
        %v2087 = vld [vmem:[%s201 + $0x38b8] sm:$0xff]
        %v2088 = vld [vmem:[%s201 + $0x38c0] sm:$0xff]
        %v2089 = vld [vmem:[%s201 + $0x38c8] sm:$0xff]
        %v2090 = vld [vmem:[%s201 + $0x38d0] sm:$0xff]
        %v2091 = vld [vmem:[%s201 + $0x38d8] sm:$0xff]
        %v2092 = vld [vmem:[%s201 + $0x38e0] sm:$0xff]
        %v2093 = vld [vmem:[%s201 + $0x38e8] sm:$0xff]
        %v2094 = vld [vmem:[%s201 + $0x38f0] sm:$0xff]
        %v2095 = vld [vmem:[%s201 + $0x38f8] sm:$0xff]
        %v2096 = vld [vmem:[%s201 + $0x3900] sm:$0xff]
        %v2097 = vld [vmem:[%s201 + $0x3908] sm:$0xff]
        %v2098 = vld [vmem:[%s201 + $0x3910] sm:$0xff]
        %v2099 = vld [vmem:[%s201 + $0x3918] sm:$0xff]
        %v2100 = vld [vmem:[%s201 + $0x3920] sm:$0xff]
        %v2101 = vld [vmem:[%s201 + $0x3928] sm:$0xff]
        %v2102 = vld [vmem:[%s201 + $0x3930] sm:$0xff]
        %v2103 = vld [vmem:[%s201 + $0x3938] sm:$0xff]
        %v2104 = vld [vmem:[%s201 + $0x3940] sm:$0xff]
        %v2105 = vld [vmem:[%s201 + $0x3948] sm:$0xff]
        %v2106 = vld [vmem:[%s201 + $0x3950] sm:$0xff]
        %v2107 = vld [vmem:[%s201 + $0x3958] sm:$0xff]
        %v2108 = vld [vmem:[%s201 + $0x3960] sm:$0xff]
        %v2109 = vld [vmem:[%s201 + $0x3968] sm:$0xff]
        %v2110 = vld [vmem:[%s201 + $0x3970] sm:$0xff]
        %v2111 = vld [vmem:[%s201 + $0x3978] sm:$0xff]
        %v2112 = vld [vmem:[%s201 + $0x3980] sm:$0xff]
        %v2113 = vld [vmem:[%s201 + $0x3988] sm:$0xff]
        %v2114 = vld [vmem:[%s201 + $0x3990] sm:$0xff]
        %v2115 = vld [vmem:[%s201 + $0x3998] sm:$0xff]
        %v2116 = vld [vmem:[%s201 + $0x39a0] sm:$0xff]
        %v2117 = vld [vmem:[%s201 + $0x39a8] sm:$0xff]
        %v2118 = vld [vmem:[%s201 + $0x39b0] sm:$0xff]
        %v2119 = vld [vmem:[%s201 + $0x39b8] sm:$0xff]
        %v2120 = vld [vmem:[%s201 + $0x39c0] sm:$0xff]
        %v2121 = vld [vmem:[%s201 + $0x39c8] sm:$0xff]
        %v2122 = vld [vmem:[%s201 + $0x39d0] sm:$0xff]
        %v2123 = vld [vmem:[%s201 + $0x39d8] sm:$0xff]
        %v2124 = vld [vmem:[%s201 + $0x39e0] sm:$0xff]
        %v2125 = vld [vmem:[%s201 + $0x39e8] sm:$0xff]
        %v2126 = vld [vmem:[%s201 + $0x39f0] sm:$0xff]
        %v2127 = vld [vmem:[%s201 + $0x39f8] sm:$0xff]
        %v2128 = vld [vmem:[%s201 + $0x3a00] sm:$0xff]
        %v2129 = vld [vmem:[%s201 + $0x3a08] sm:$0xff]
        %v2130 = vld [vmem:[%s201 + $0x3a10] sm:$0xff]
        %v2131 = vld [vmem:[%s201 + $0x3a18] sm:$0xff]
        %v2132 = vld [vmem:[%s201 + $0x3a20] sm:$0xff]
        %v2133 = vld [vmem:[%s201 + $0x3a28] sm:$0xff]
        %v2134 = vld [vmem:[%s201 + $0x3a30] sm:$0xff]
        %v2135 = vld [vmem:[%s201 + $0x3a38] sm:$0xff]
        %v2136 = vld [vmem:[%s201 + $0x3a40] sm:$0xff]
        %v2137 = vld [vmem:[%s201 + $0x3a48] sm:$0xff]
        %v2138 = vld [vmem:[%s201 + $0x3a50] sm:$0xff]
        %v2139 = vld [vmem:[%s201 + $0x3a58] sm:$0xff]
        %v2140 = vld [vmem:[%s201 + $0x3a60] sm:$0xff]
        %v2141 = vld [vmem:[%s201 + $0x3a68] sm:$0xff]
        %v2142 = vld [vmem:[%s201 + $0x3a70] sm:$0xff]
        %v2143 = vld [vmem:[%s201 + $0x3a78] sm:$0xff]
        %v2144 = vld [vmem:[%s201 + $0x3a80] sm:$0xff]
        %v2145 = vld [vmem:[%s201 + $0x3a88] sm:$0xff]
        %v2146 = vld [vmem:[%s201 + $0x3a90] sm:$0xff]
        %v2147 = vld [vmem:[%s201 + $0x3a98] sm:$0xff]
        %v2148 = vld [vmem:[%s201 + $0x3aa0] sm:$0xff]
        %v2149 = vld [vmem:[%s201 + $0x3aa8] sm:$0xff]
        %v2150 = vld [vmem:[%s201 + $0x3ab0] sm:$0xff]
        %v2151 = vld [vmem:[%s201 + $0x3ab8] sm:$0xff]
        %v2152 = vld [vmem:[%s201 + $0x3ac0] sm:$0xff]
        %v2153 = vld [vmem:[%s201 + $0x3ac8] sm:$0xff]
        %v2154 = vld [vmem:[%s201 + $0x3ad0] sm:$0xff]
        %v2155 = vld [vmem:[%s201 + $0x3ad8] sm:$0xff]
        %v2156 = vld [vmem:[%s201 + $0x3ae0] sm:$0xff]
        %v2157 = vld [vmem:[%s201 + $0x3ae8] sm:$0xff]
        %v2158 = vld [vmem:[%s201 + $0x3af0] sm:$0xff]
        %v2159 = vld [vmem:[%s201 + $0x3af8] sm:$0xff]
        %v2160 = vld [vmem:[%s201 + $0x3b00] sm:$0xff]
        %v2161 = vld [vmem:[%s201 + $0x3b08] sm:$0xff]
        %v2162 = vld [vmem:[%s201 + $0x3b10] sm:$0xff]
        %v2163 = vld [vmem:[%s201 + $0x3b18] sm:$0xff]
        %v2164 = vld [vmem:[%s201 + $0x3b20] sm:$0xff]
        %v2165 = vld [vmem:[%s201 + $0x3b28] sm:$0xff]
        %v2166 = vld [vmem:[%s201 + $0x3b30] sm:$0xff]
        %v2167 = vld [vmem:[%s201 + $0x3b38] sm:$0xff]
        %v2168 = vld [vmem:[%s201 + $0x3b40] sm:$0xff]
        %v2169 = vld [vmem:[%s201 + $0x3b48] sm:$0xff]
        %v2170 = vld [vmem:[%s201 + $0x3b50] sm:$0xff]
        %v2171 = vld [vmem:[%s201 + $0x3b58] sm:$0xff]
        %v2172 = vld [vmem:[%s201 + $0x3b60] sm:$0xff]
        %v2173 = vld [vmem:[%s201 + $0x3b68] sm:$0xff]
        %v2174 = vld [vmem:[%s201 + $0x3b70] sm:$0xff]
        %v2175 = vld [vmem:[%s201 + $0x3b78] sm:$0xff]
        %v2176 = vld [vmem:[%s201 + $0x3b80] sm:$0xff]
        %v2177 = vld [vmem:[%s201 + $0x3b88] sm:$0xff]
        %v2178 = vld [vmem:[%s201 + $0x3b90] sm:$0xff]
        %v2179 = vld [vmem:[%s201 + $0x3b98] sm:$0xff]
        %v2180 = vld [vmem:[%s201 + $0x3ba0] sm:$0xff]
        %v2181 = vld [vmem:[%s201 + $0x3ba8] sm:$0xff]
        %v2182 = vld [vmem:[%s201 + $0x3bb0] sm:$0xff]
        %v2183 = vld [vmem:[%s201 + $0x3bb8] sm:$0xff]
        %v2184 = vld [vmem:[%s201 + $0x3bc0] sm:$0xff]
        %v2185 = vld [vmem:[%s201 + $0x3bc8] sm:$0xff]
        %v2186 = vld [vmem:[%s201 + $0x3bd0] sm:$0xff]
        %v2187 = vld [vmem:[%s201 + $0x3bd8] sm:$0xff]
        %v2188 = vld [vmem:[%s201 + $0x3be0] sm:$0xff]
        %v2189 = vld [vmem:[%s201 + $0x3be8] sm:$0xff]
        %v2190 = vld [vmem:[%s201 + $0x3bf0] sm:$0xff]
        %v2191 = vld [vmem:[%s201 + $0x3bf8] sm:$0xff]
        %v2192 = vld [vmem:[%s201 + $0x3c00] sm:$0xff]
        %v2193 = vld [vmem:[%s201 + $0x3c08] sm:$0xff]
        %v2194 = vld [vmem:[%s201 + $0x3c10] sm:$0xff]
        %v2195 = vld [vmem:[%s201 + $0x3c18] sm:$0xff]
        %v2196 = vld [vmem:[%s201 + $0x3c20] sm:$0xff]
        %v2197 = vld [vmem:[%s201 + $0x3c28] sm:$0xff]
        %v2198 = vld [vmem:[%s201 + $0x3c30] sm:$0xff]
        %v2199 = vld [vmem:[%s201 + $0x3c38] sm:$0xff]
        %v2200 = vld [vmem:[%s201 + $0x3c40] sm:$0xff]
        %v2201 = vld [vmem:[%s201 + $0x3c48] sm:$0xff]
        %v2202 = vld [vmem:[%s201 + $0x3c50] sm:$0xff]
        %v2203 = vld [vmem:[%s201 + $0x3c58] sm:$0xff]
        %v2204 = vld [vmem:[%s201 + $0x3c60] sm:$0xff]
        %v2205 = vld [vmem:[%s201 + $0x3c68] sm:$0xff]
        %v2206 = vld [vmem:[%s201 + $0x3c70] sm:$0xff]
        %v2207 = vld [vmem:[%s201 + $0x3c78] sm:$0xff]
        %v2208 = vld [vmem:[%s201 + $0x3c80] sm:$0xff]
        %v2209 = vld [vmem:[%s201 + $0x3c88] sm:$0xff]
        %v2210 = vld [vmem:[%s201 + $0x3c90] sm:$0xff]
        %v2211 = vld [vmem:[%s201 + $0x3c98] sm:$0xff]
        %v2212 = vld [vmem:[%s201 + $0x3ca0] sm:$0xff]
        %v2213 = vld [vmem:[%s201 + $0x3ca8] sm:$0xff]
        %v2214 = vld [vmem:[%s201 + $0x3cb0] sm:$0xff]
        %v2215 = vld [vmem:[%s201 + $0x3cb8] sm:$0xff]
        %v2216 = vld [vmem:[%s201 + $0x3cc0] sm:$0xff]
        %v2217 = vld [vmem:[%s201 + $0x3cc8] sm:$0xff]
        %v2218 = vld [vmem:[%s201 + $0x3cd0] sm:$0xff]
        %v2219 = vld [vmem:[%s201 + $0x3cd8] sm:$0xff]
        %v2220 = vld [vmem:[%s201 + $0x3ce0] sm:$0xff]
        %v2221 = vld [vmem:[%s201 + $0x3ce8] sm:$0xff]
        %v2222 = vld [vmem:[%s201 + $0x3cf0] sm:$0xff]
        %v2223 = vld [vmem:[%s201 + $0x3cf8] sm:$0xff]
        %v2224 = vld [vmem:[%s201 + $0x3d00] sm:$0xff]
        %v2225 = vld [vmem:[%s201 + $0x3d08] sm:$0xff]
        %v2226 = vld [vmem:[%s201 + $0x3d10] sm:$0xff]
        %v2227 = vld [vmem:[%s201 + $0x3d18] sm:$0xff]
        %v2228 = vld [vmem:[%s201 + $0x3d20] sm:$0xff]
        %v2229 = vld [vmem:[%s201 + $0x3d28] sm:$0xff]
        %v2230 = vld [vmem:[%s201 + $0x3d30] sm:$0xff]
        %v2231 = vld [vmem:[%s201 + $0x3d38] sm:$0xff]
        %v2232 = vld [vmem:[%s201 + $0x3d40] sm:$0xff]
        %v2233 = vld [vmem:[%s201 + $0x3d48] sm:$0xff]
        %v2234 = vld [vmem:[%s201 + $0x3d50] sm:$0xff]
        %v2235 = vld [vmem:[%s201 + $0x3d58] sm:$0xff]
        %v2236 = vld [vmem:[%s201 + $0x3d60] sm:$0xff]
        %v2237 = vld [vmem:[%s201 + $0x3d68] sm:$0xff]
        %v2238 = vld [vmem:[%s201 + $0x3d70] sm:$0xff]
        %v2239 = vld [vmem:[%s201 + $0x3d78] sm:$0xff]
        %v2240 = vld [vmem:[%s201 + $0x3d80] sm:$0xff]
        %v2241 = vld [vmem:[%s201 + $0x3d88] sm:$0xff]
        %v2242 = vld [vmem:[%s201 + $0x3d90] sm:$0xff]
        %v2243 = vld [vmem:[%s201 + $0x3d98] sm:$0xff]
        %v2244 = vld [vmem:[%s201 + $0x3da0] sm:$0xff]
        %v2245 = vld [vmem:[%s201 + $0x3da8] sm:$0xff]
        %v2246 = vld [vmem:[%s201 + $0x3db0] sm:$0xff]
        %v2247 = vld [vmem:[%s201 + $0x3db8] sm:$0xff]
        %v2248 = vld [vmem:[%s201 + $0x3dc0] sm:$0xff]
        %v2249 = vld [vmem:[%s201 + $0x3dc8] sm:$0xff]
        %v2250 = vld [vmem:[%s201 + $0x3dd0] sm:$0xff]
        %v2251 = vld [vmem:[%s201 + $0x3dd8] sm:$0xff]
        %v2252 = vld [vmem:[%s201 + $0x3de0] sm:$0xff]
        %v2253 = vld [vmem:[%s201 + $0x3de8] sm:$0xff]
        %v2254 = vld [vmem:[%s201 + $0x3df0] sm:$0xff]
        %v2255 = vld [vmem:[%s201 + $0x3df8] sm:$0xff]
        %v2256 = vld [vmem:[%s201 + $0x3e00] sm:$0xff]
        %v2257 = vld [vmem:[%s201 + $0x3e08] sm:$0xff]
        %v2258 = vld [vmem:[%s201 + $0x3e10] sm:$0xff]
        %v2259 = vld [vmem:[%s201 + $0x3e18] sm:$0xff]
        %v2260 = vld [vmem:[%s201 + $0x3e20] sm:$0xff]
        %v2261 = vld [vmem:[%s201 + $0x3e28] sm:$0xff]
        %v2262 = vld [vmem:[%s201 + $0x3e30] sm:$0xff]
        %v2263 = vld [vmem:[%s201 + $0x3e38] sm:$0xff]
        %v2264 = vld [vmem:[%s201 + $0x3e40] sm:$0xff]
        %v2265 = vld [vmem:[%s201 + $0x3e48] sm:$0xff]
        %v2266 = vld [vmem:[%s201 + $0x3e50] sm:$0xff]
        %v2267 = vld [vmem:[%s201 + $0x3e58] sm:$0xff]
        %v2268 = vld [vmem:[%s201 + $0x3e60] sm:$0xff]
        %v2269 = vld [vmem:[%s201 + $0x3e68] sm:$0xff]
        %v2270 = vld [vmem:[%s201 + $0x3e70] sm:$0xff]
        %v2271 = vld [vmem:[%s201 + $0x3e78] sm:$0xff]
        %v2272 = vld [vmem:[%s201 + $0x3e80] sm:$0xff]
        %v2273 = vld [vmem:[%s201 + $0x3e88] sm:$0xff]
        %v2274 = vld [vmem:[%s201 + $0x3e90] sm:$0xff]
        %v2275 = vld [vmem:[%s201 + $0x3e98] sm:$0xff]
        %v2276 = vld [vmem:[%s201 + $0x3ea0] sm:$0xff]
        %v2277 = vld [vmem:[%s201 + $0x3ea8] sm:$0xff]
        %v2278 = vld [vmem:[%s201 + $0x3eb0] sm:$0xff]
        %v2279 = vld [vmem:[%s201 + $0x3eb8] sm:$0xff]
        %v2280 = vld [vmem:[%s201 + $0x3ec0] sm:$0xff]
        %v2281 = vld [vmem:[%s201 + $0x3ec8] sm:$0xff]
        %v2282 = vld [vmem:[%s201 + $0x3ed0] sm:$0xff]
        %v2283 = vld [vmem:[%s201 + $0x3ed8] sm:$0xff]
        %v2284 = vld [vmem:[%s201 + $0x3ee0] sm:$0xff]
        %v2285 = vld [vmem:[%s201 + $0x3ee8] sm:$0xff]
        %v2286 = vld [vmem:[%s201 + $0x3ef0] sm:$0xff]
        %v2287 = vld [vmem:[%s201 + $0x3ef8] sm:$0xff]
        %v2288 = vld [vmem:[%s201 + $0x3f00] sm:$0xff]
        %v2289 = vld [vmem:[%s201 + $0x3f08] sm:$0xff]
        %v2290 = vld [vmem:[%s201 + $0x3f10] sm:$0xff]
        %v2291 = vld [vmem:[%s201 + $0x3f18] sm:$0xff]
        %v2292 = vld [vmem:[%s201 + $0x3f20] sm:$0xff]
        %v2293 = vld [vmem:[%s201 + $0x3f28] sm:$0xff]
        %v2294 = vld [vmem:[%s201 + $0x3f30] sm:$0xff]
        %v2295 = vld [vmem:[%s201 + $0x3f38] sm:$0xff]
        %v2296 = vld [vmem:[%s201 + $0x3f40] sm:$0xff]
        %v2297 = vld [vmem:[%s201 + $0x3f48] sm:$0xff]
        %v2298 = vld [vmem:[%s201 + $0x3f50] sm:$0xff]
        %v2299 = vld [vmem:[%s201 + $0x3f58] sm:$0xff]
        %v2300 = vld [vmem:[%s201 + $0x3f60] sm:$0xff]
        %v2301 = vld [vmem:[%s201 + $0x3f68] sm:$0xff]
        %v2302 = vld [vmem:[%s201 + $0x3f70] sm:$0xff]
        %v2303 = vld [vmem:[%s201 + $0x3f78] sm:$0xff]
        %v2304 = vld [vmem:[%s201 + $0x3f80] sm:$0xff]
        %v2305 = vld [vmem:[%s201 + $0x3f88] sm:$0xff]
        %v2306 = vld [vmem:[%s201 + $0x3f90] sm:$0xff]
        %v2307 = vld [vmem:[%s201 + $0x3f98] sm:$0xff]
        %v2308 = vld [vmem:[%s201 + $0x3fa0] sm:$0xff]
        %v2309 = vld [vmem:[%s201 + $0x3fa8] sm:$0xff]
        %v2310 = vld [vmem:[%s201 + $0x3fb0] sm:$0xff]
        %v2311 = vld [vmem:[%s201 + $0x3fb8] sm:$0xff]
        %v2312 = vld [vmem:[%s201 + $0x3fc0] sm:$0xff]
        %v2313 = vld [vmem:[%s201 + $0x3fc8] sm:$0xff]
        %v2314 = vld [vmem:[%s201 + $0x3fd0] sm:$0xff]
        %v2315 = vld [vmem:[%s201 + $0x3fd8] sm:$0xff]
        %v2316 = vld [vmem:[%s201 + $0x3fe0] sm:$0xff]
        %v2317 = vld [vmem:[%s201 + $0x3fe8] sm:$0xff]
        %v2318 = vld [vmem:[%s201 + $0x3ff0] sm:$0xff]
        %v2319 = vld [vmem:[%s201 + $0x3ff8] sm:$0xff]
        %2352 = vst [vmem:[#allocation1] ss:$4 sm:$0xff] %v240
        %s2353 = scalar_lea.vmem [#allocation1], 32
        %2354 = vst [vmem:[%s2353] ss:$4 sm:$0xff] %v241
        %v2355 = vld.sshfl [vmem:[#allocation1] sm:$0xff pattern:$0x73625140]
        %v2356 = vld.sshfl [vmem:[#allocation1 + $0x8] sm:$0xff pattern:$0x73625140]
        %v2357 = vld.sshfl [vmem:[#allocation1 + $0x10] sm:$0xff pattern:$0x73625140]
        %v2358 = vld.sshfl [vmem:[#allocation1 + $0x18] sm:$0xff pattern:$0x73625140]
        %v2359 = vld.sshfl [vmem:[#allocation1 + $0x20] sm:$0xff pattern:$0x73625140]
        %v2360 = vld.sshfl [vmem:[#allocation1 + $0x28] sm:$0xff pattern:$0x73625140]
        %v2361 = vld.sshfl [vmem:[#allocation1 + $0x30] sm:$0xff pattern:$0x73625140]
        %v2362 = vld.sshfl [vmem:[#allocation1 + $0x38] sm:$0xff pattern:$0x73625140]
        %2363 = vst [vmem:[#allocation1] ss:$4 sm:$0xff] %v242
        %2364 = vst [vmem:[%s2353] ss:$4 sm:$0xff] %v243
        %v2365 = vld.sshfl [vmem:[#allocation1] sm:$0xff pattern:$0x73625140]
        %v2366 = vld.sshfl [vmem:[#allocation1 + $0x8] sm:$0xff pattern:$0x73625140]
        %v2367 = vld.sshfl [vmem:[#allocation1 + $0x10] sm:$0xff pattern:$0x73625140]
        %v2368 = vld.sshfl [vmem:[#allocation1 + $0x18] sm:$0xff pattern:$0x73625140]
        %v2369 = vld.sshfl [vmem:[#allocation1 + $0x20] sm:$0xff pattern:$0x73625140]
        %v2370 = vld.sshfl [vmem:[#allocation1 + $0x28] sm:$0xff pattern:$0x73625140]
        %v2371 = vld.sshfl [vmem:[#allocation1 + $0x30] sm:$0xff pattern:$0x73625140]
        %v2372 = vld.sshfl [vmem:[#allocation1 + $0x38] sm:$0xff pattern:$0x73625140]
        %2373 = vst [vmem:[#allocation1] ss:$4 sm:$0xff] %v244
        %2374 = vst [vmem:[%s2353] ss:$4 sm:$0xff] %v245
        %v2375 = vld.sshfl [vmem:[#allocation1] sm:$0xff pattern:$0x73625140]
        %v2376 = vld.sshfl [vmem:[#allocation1 + $0x8] sm:$0xff pattern:$0x73625140]
        %v2377 = vld.sshfl [vmem:[#allocation1 + $0x10] sm:$0xff pattern:$0x73625140]
        %v2378 = vld.sshfl [vmem:[#allocation1 + $0x18] sm:$0xff pattern:$0x73625140]
        %v2379 = vld.sshfl [vmem:[#allocation1 + $0x20] sm:$0xff pattern:$0x73625140]
        %v2380 = vld.sshfl [vmem:[#allocation1 + $0x28] sm:$0xff pattern:$0x73625140]
        %v2381 = vld.sshfl [vmem:[#allocation1 + $0x30] sm:$0xff pattern:$0x73625140]
        %v2382 = vld.sshfl [vmem:[#allocation1 + $0x38] sm:$0xff pattern:$0x73625140]
        %2383 = vst [vmem:[#allocation1] ss:$4 sm:$0xff] %v246
        %2384 = vst [vmem:[%s2353] ss:$4 sm:$0xff] %v247
        %v2385 = vld.sshfl [vmem:[#allocation1] sm:$0xff pattern:$0x73625140]
        %v2386 = vld.sshfl [vmem:[#allocation1 + $0x8] sm:$0xff pattern:$0x73625140]
        %v2387 = vld.sshfl [vmem:[#allocation1 + $0x10] sm:$0xff pattern:$0x73625140]
        %v2388 = vld.sshfl [vmem:[#allocation1 + $0x18] sm:$0xff pattern:$0x73625140]
        %v2389 = vld.sshfl [vmem:[#allocation1 + $0x20] sm:$0xff pattern:$0x73625140]
        %v2390 = vld.sshfl [vmem:[#allocation1 + $0x28] sm:$0xff pattern:$0x73625140]
        %v2391 = vld.sshfl [vmem:[#allocation1 + $0x30] sm:$0xff pattern:$0x73625140]
        %v2392 = vld.sshfl [vmem:[#allocation1 + $0x38] sm:$0xff pattern:$0x73625140]
        %2393 = vst [vmem:[#allocation1] ss:$4 sm:$0xff] %v248
        %2394 = vst [vmem:[%s2353] ss:$4 sm:$0xff] %v249
        %v2395 = vld.sshfl [vmem:[#allocation1] sm:$0xff pattern:$0x73625140]
        %v2396 = vld.sshfl [vmem:[#allocation1 + $0x8] sm:$0xff pattern:$0x73625140]
        %v2397 = vld.sshfl [vmem:[#allocation1 + $0x10] sm:$0xff pattern:$0x73625140]
        %v2398 = vld.sshfl [vmem:[#allocation1 + $0x18] sm:$0xff pattern:$0x73625140]
        %v2399 = vld.sshfl [vmem:[#allocation1 + $0x20] sm:$0xff pattern:$0x73625140]
        %v2400 = vld.sshfl [vmem:[#allocation1 + $0x28] sm:$0xff pattern:$0x73625140]
        %v2401 = vld.sshfl [vmem:[#allocation1 + $0x30] sm:$0xff pattern:$0x73625140]
        %v2402 = vld.sshfl [vmem:[#allocation1 + $0x38] sm:$0xff pattern:$0x73625140]
        %2403 = vst [vmem:[#allocation1] ss:$4 sm:$0xff] %v250
        %2404 = vst [vmem:[%s2353] ss:$4 sm:$0xff] %v251
        %v2405 = vld.sshfl [vmem:[#allocation1] sm:$0xff pattern:$0x73625140]
        %v2406 = vld.sshfl [vmem:[#allocation1 + $0x8] sm:$0xff pattern:$0x73625140]
        %v2407 = vld.sshfl [vmem:[#allocation1 + $0x10] sm:$0xff pattern:$0x73625140]
        %v2408 = vld.sshfl [vmem:[#allocation1 + $0x18] sm:$0xff pattern:$0x73625140]
        %v2409 = vld.sshfl [vmem:[#allocation1 + $0x20] sm:$0xff pattern:$0x73625140]
        %v2410 = vld.sshfl [vmem:[#allocation1 + $0x28] sm:$0xff pattern:$0x73625140]
        %v2411 = vld.sshfl [vmem:[#allocation1 + $0x30] sm:$0xff pattern:$0x73625140]
        %v2412 = vld.sshfl [vmem:[#allocation1 + $0x38] sm:$0xff pattern:$0x73625140]
        %2413 = vst [vmem:[#allocation1] ss:$4 sm:$0xff] %v252
        %2414 = vst [vmem:[%s2353] ss:$4 sm:$0xff] %v253
        %v2415 = vld.sshfl [vmem:[#allocation1] sm:$0xff pattern:$0x73625140]
        %v2416 = vld.sshfl [vmem:[#allocation1 + $0x8] sm:$0xff pattern:$0x73625140]
        %v2417 = vld.sshfl [vmem:[#allocation1 + $0x10] sm:$0xff pattern:$0x73625140]
        %v2418 = vld.sshfl [vmem:[#allocation1 + $0x18] sm:$0xff pattern:$0x73625140]
        %v2419 = vld.sshfl [vmem:[#allocation1 + $0x20] sm:$0xff pattern:$0x73625140]
        %v2420 = vld.sshfl [vmem:[#allocation1 + $0x28] sm:$0xff pattern:$0x73625140]
        %v2421 = vld.sshfl [vmem:[#allocation1 + $0x30] sm:$0xff pattern:$0x73625140]
        %v2422 = vld.sshfl [vmem:[#allocation1 + $0x38] sm:$0xff pattern:$0x73625140]
        %2423 = vst [vmem:[#allocation1] ss:$4 sm:$0xff] %v254
        %2424 = vst [vmem:[%s2353] ss:$4 sm:$0xff] %v255
        %v2425 = vld.sshfl [vmem:[#allocation1] sm:$0xff pattern:$0x73625140]
        %v2426 = vld.sshfl [vmem:[#allocation1 + $0x8] sm:$0xff pattern:$0x73625140]
        %v2427 = vld.sshfl [vmem:[#allocation1 + $0x10] sm:$0xff pattern:$0x73625140]
        %v2428 = vld.sshfl [vmem:[#allocation1 + $0x18] sm:$0xff pattern:$0x73625140]
        %v2429 = vld.sshfl [vmem:[#allocation1 + $0x20] sm:$0xff pattern:$0x73625140]
        %v2430 = vld.sshfl [vmem:[#allocation1 + $0x28] sm:$0xff pattern:$0x73625140]
        %v2431 = vld.sshfl [vmem:[#allocation1 + $0x30] sm:$0xff pattern:$0x73625140]
        %v2432 = vld.sshfl [vmem:[#allocation1 + $0x38] sm:$0xff pattern:$0x73625140]
        %2433 = vst [vmem:[#allocation1] ss:$4 sm:$0xff] %v256
        %2434 = vst [vmem:[%s2353] ss:$4 sm:$0xff] %v257
        %v2435 = vld.sshfl [vmem:[#allocation1] sm:$0xff pattern:$0x73625140]
        %v2436 = vld.sshfl [vmem:[#allocation1 + $0x8] sm:$0xff pattern:$0x73625140]
        %v2437 = vld.sshfl [vmem:[#allocation1 + $0x10] sm:$0xff pattern:$0x73625140]
        %v2438 = vld.sshfl [vmem:[#allocation1 + $0x18] sm:$0xff pattern:$0x73625140]
        %v2439 = vld.sshfl [vmem:[#allocation1 + $0x20] sm:$0xff pattern:$0x73625140]
        %v2440 = vld.sshfl [vmem:[#allocation1 + $0x28] sm:$0xff pattern:$0x73625140]
        %v2441 = vld.sshfl [vmem:[#allocation1 + $0x30] sm:$0xff pattern:$0x73625140]
        %v2442 = vld.sshfl [vmem:[#allocation1 + $0x38] sm:$0xff pattern:$0x73625140]
        %2443 = vst [vmem:[#allocation1] ss:$4 sm:$0xff] %v258
        %2444 = vst [vmem:[%s2353] ss:$4 sm:$0xff] %v259
        %v2445 = vld.sshfl [vmem:[#allocation1] sm:$0xff pattern:$0x73625140]
        %v2446 = vld.sshfl [vmem:[#allocation1 + $0x8] sm:$0xff pattern:$0x73625140]
        %v2447 = vld.sshfl [vmem:[#allocation1 + $0x10] sm:$0xff pattern:$0x73625140]
        %v2448 = vld.sshfl [vmem:[#allocation1 + $0x18] sm:$0xff pattern:$0x73625140]
        %v2449 = vld.sshfl [vmem:[#allocation1 + $0x20] sm:$0xff pattern:$0x73625140]
        %v2450 = vld.sshfl [vmem:[#allocation1 + $0x28] sm:$0xff pattern:$0x73625140]
        %v2451 = vld.sshfl [vmem:[#allocation1 + $0x30] sm:$0xff pattern:$0x73625140]
        %v2452 = vld.sshfl [vmem:[#allocation1 + $0x38] sm:$0xff pattern:$0x73625140]
        %2453 = vst [vmem:[#allocation1] ss:$4 sm:$0xff] %v260
        %2454 = vst [vmem:[%s2353] ss:$4 sm:$0xff] %v261
        %v2455 = vld.sshfl [vmem:[#allocation1] sm:$0xff pattern:$0x73625140]
        %v2456 = vld.sshfl [vmem:[#allocation1 + $0x8] sm:$0xff pattern:$0x73625140]
        %v2457 = vld.sshfl [vmem:[#allocation1 + $0x10] sm:$0xff pattern:$0x73625140]
        %v2458 = vld.sshfl [vmem:[#allocation1 + $0x18] sm:$0xff pattern:$0x73625140]
        %v2459 = vld.sshfl [vmem:[#allocation1 + $0x20] sm:$0xff pattern:$0x73625140]
        %v2460 = vld.sshfl [vmem:[#allocation1 + $0x28] sm:$0xff pattern:$0x73625140]
        %v2461 = vld.sshfl [vmem:[#allocation1 + $0x30] sm:$0xff pattern:$0x73625140]
        %v2462 = vld.sshfl [vmem:[#allocation1 + $0x38] sm:$0xff pattern:$0x73625140]
        %2463 = vst [vmem:[#allocation1] ss:$4 sm:$0xff] %v262
        %2464 = vst [vmem:[%s2353] ss:$4 sm:$0xff] %v263
        %v2465 = vld.sshfl [vmem:[#allocation1] sm:$0xff pattern:$0x73625140]
        %v2466 = vld.sshfl [vmem:[#allocation1 + $0x8] sm:$0xff pattern:$0x73625140]
        %v2467 = vld.sshfl [vmem:[#allocation1 + $0x10] sm:$0xff pattern:$0x73625140]
        %v2468 = vld.sshfl [vmem:[#allocation1 + $0x18] sm:$0xff pattern:$0x73625140]
        %v2469 = vld.sshfl [vmem:[#allocation1 + $0x20] sm:$0xff pattern:$0x73625140]
        %v2470 = vld.sshfl [vmem:[#allocation1 + $0x28] sm:$0xff pattern:$0x73625140]
        %v2471 = vld.sshfl [vmem:[#allocation1 + $0x30] sm:$0xff pattern:$0x73625140]
        %v2472 = vld.sshfl [vmem:[#allocation1 + $0x38] sm:$0xff pattern:$0x73625140]
        %2473 = vst [vmem:[#allocation1] ss:$4 sm:$0xff] %v264
        %2474 = vst [vmem:[%s2353] ss:$4 sm:$0xff] %v265
        %v2475 = vld.sshfl [vmem:[#allocation1] sm:$0xff pattern:$0x73625140]
        %v2476 = vld.sshfl [vmem:[#allocation1 + $0x8] sm:$0xff pattern:$0x73625140]
        %v2477 = vld.sshfl [vmem:[#allocation1 + $0x10] sm:$0xff pattern:$0x73625140]
        %v2478 = vld.sshfl [vmem:[#allocation1 + $0x18] sm:$0xff pattern:$0x73625140]
        %v2479 = vld.sshfl [vmem:[#allocation1 + $0x20] sm:$0xff pattern:$0x73625140]
        %v2480 = vld.sshfl [vmem:[#allocation1 + $0x28] sm:$0xff pattern:$0x73625140]
        %v2481 = vld.sshfl [vmem:[#allocation1 + $0x30] sm:$0xff pattern:$0x73625140]
        %v2482 = vld.sshfl [vmem:[#allocation1 + $0x38] sm:$0xff pattern:$0x73625140]
        %2483 = vst [vmem:[#allocation1] ss:$4 sm:$0xff] %v266
        %2484 = vst [vmem:[%s2353] ss:$4 sm:$0xff] %v267
        %v2485 = vld.sshfl [vmem:[#allocation1] sm:$0xff pattern:$0x73625140]
        %v2486 = vld.sshfl [vmem:[#allocation1 + $0x8] sm:$0xff pattern:$0x73625140]
        %v2487 = vld.sshfl [vmem:[#allocation1 + $0x10] sm:$0xff pattern:$0x73625140]
        %v2488 = vld.sshfl [vmem:[#allocation1 + $0x18] sm:$0xff pattern:$0x73625140]
        %v2489 = vld.sshfl [vmem:[#allocation1 + $0x20] sm:$0xff pattern:$0x73625140]
        %v2490 = vld.sshfl [vmem:[#allocation1 + $0x28] sm:$0xff pattern:$0x73625140]
        %v2491 = vld.sshfl [vmem:[#allocation1 + $0x30] sm:$0xff pattern:$0x73625140]
        %v2492 = vld.sshfl [vmem:[#allocation1 + $0x38] sm:$0xff pattern:$0x73625140]
        %2493 = vst [vmem:[#allocation1] ss:$4 sm:$0xff] %v268
        %2494 = vst [vmem:[%s2353] ss:$4 sm:$0xff] %v269
        %v2495 = vld.sshfl [vmem:[#allocation1] sm:$0xff pattern:$0x73625140]
        %v2496 = vld.sshfl [vmem:[#allocation1 + $0x8] sm:$0xff pattern:$0x73625140]
        %v2497 = vld.sshfl [vmem:[#allocation1 + $0x10] sm:$0xff pattern:$0x73625140]
        %v2498 = vld.sshfl [vmem:[#allocation1 + $0x18] sm:$0xff pattern:$0x73625140]
        %v2499 = vld.sshfl [vmem:[#allocation1 + $0x20] sm:$0xff pattern:$0x73625140]
        %v2500 = vld.sshfl [vmem:[#allocation1 + $0x28] sm:$0xff pattern:$0x73625140]
        %v2501 = vld.sshfl [vmem:[#allocation1 + $0x30] sm:$0xff pattern:$0x73625140]
        %v2502 = vld.sshfl [vmem:[#allocation1 + $0x38] sm:$0xff pattern:$0x73625140]
        %2503 = vst [vmem:[#allocation1] ss:$4 sm:$0xff] %v270
        %2504 = vst [vmem:[%s2353] ss:$4 sm:$0xff] %v271
        %v2505 = vld.sshfl [vmem:[#allocation1] sm:$0xff pattern:$0x73625140]
        %v2506 = vld.sshfl [vmem:[#allocation1 + $0x8] sm:$0xff pattern:$0x73625140]
        %v2507 = vld.sshfl [vmem:[#allocation1 + $0x10] sm:$0xff pattern:$0x73625140]
        %v2508 = vld.sshfl [vmem:[#allocation1 + $0x18] sm:$0xff pattern:$0x73625140]
        %v2509 = vld.sshfl [vmem:[#allocation1 + $0x20] sm:$0xff pattern:$0x73625140]
        %v2510 = vld.sshfl [vmem:[#allocation1 + $0x28] sm:$0xff pattern:$0x73625140]
        %v2511 = vld.sshfl [vmem:[#allocation1 + $0x30] sm:$0xff pattern:$0x73625140]
        %v2512 = vld.sshfl [vmem:[#allocation1 + $0x38] sm:$0xff pattern:$0x73625140]
        %2641 = vmatpush.msra.mxu0 %v287
        %2642 = vmatpush.msra.mxu0 %v286
        %2643 = vmatpush.msra.mxu0 %v285
        %2644 = vmatpush.msra.mxu0 %v284
        %2645 = vmatpush.msra.mxu0 %v283
        %2646 = vmatpush.msra.mxu0 %v282
        %2647 = vmatpush.msra.mxu0 %v281
        %2648 = vmatpush.msra.mxu0 %v280
        %2649 = vmatpush.msra.mxu0 %v279
        %2650 = vmatpush.msra.mxu0 %v278
        %2651 = vmatpush.msra.mxu0 %v277
        %2652 = vmatpush.msra.mxu0 %v276
        %2653 = vmatpush.msra.mxu0 %v275
        %2654 = vmatpush.msra.mxu0 %v274
        %2655 = vmatpush.msra.mxu0 %v273
        %2656 = vmatpush.msra.mxu0 %v272
        %2657 = vmatmul.f32.gmra.mxu0 %v2355
        %v2658 = vpop.f32.mrf.mxu0
        %v2659 = vadd.f32 0.0, %v2658
        %2660 = vdwg.mxu0
        %2661 = vmatpush.msra.mxu0 %v303
        %2662 = vmatpush.msra.mxu0 %v302
        %2663 = vmatpush.msra.mxu0 %v301
        %2664 = vmatpush.msra.mxu0 %v300
        %2665 = vmatpush.msra.mxu0 %v299
        %2666 = vmatpush.msra.mxu0 %v298
        %2667 = vmatpush.msra.mxu0 %v297
        %2668 = vmatpush.msra.mxu0 %v296
        %2669 = vmatpush.msra.mxu0 %v295
        %2670 = vmatpush.msra.mxu0 %v294
        %2671 = vmatpush.msra.mxu0 %v293
        %2672 = vmatpush.msra.mxu0 %v292
        %2673 = vmatpush.msra.mxu0 %v291
        %2674 = vmatpush.msra.mxu0 %v290
        %2675 = vmatpush.msra.mxu0 %v289
        %2676 = vmatpush.msra.mxu0 %v288
        %2677 = vmatmul.f32.gmra.mxu0 %v2356
        %v2678 = vpop.f32.mrf.mxu0
        %v2679 = vadd.f32 %v2659, %v2678
        %2680 = vdwg.mxu0
        %2681 = vmatpush.msra.mxu0 %v319
        %2682 = vmatpush.msra.mxu0 %v318
        %2683 = vmatpush.msra.mxu0 %v317
        %2684 = vmatpush.msra.mxu0 %v316
        %2685 = vmatpush.msra.mxu0 %v315
        %2686 = vmatpush.msra.mxu0 %v314
        %2687 = vmatpush.msra.mxu0 %v313
        %2688 = vmatpush.msra.mxu0 %v312
        %2689 = vmatpush.msra.mxu0 %v311
        %2690 = vmatpush.msra.mxu0 %v310
        %2691 = vmatpush.msra.mxu0 %v309
        %2692 = vmatpush.msra.mxu0 %v308
        %2693 = vmatpush.msra.mxu0 %v307
        %2694 = vmatpush.msra.mxu0 %v306
        %2695 = vmatpush.msra.mxu0 %v305
        %2696 = vmatpush.msra.mxu0 %v304
        %2697 = vmatmul.f32.gmra.mxu0 %v2357
        %v2698 = vpop.f32.mrf.mxu0
        %v2699 = vadd.f32 %v2679, %v2698
        %2700 = vdwg.mxu0
        %2701 = vmatpush.msra.mxu0 %v335
        %2702 = vmatpush.msra.mxu0 %v334
        %2703 = vmatpush.msra.mxu0 %v333
        %2704 = vmatpush.msra.mxu0 %v332
        %2705 = vmatpush.msra.mxu0 %v331
        %2706 = vmatpush.msra.mxu0 %v330
        %2707 = vmatpush.msra.mxu0 %v329
        %2708 = vmatpush.msra.mxu0 %v328
        %2709 = vmatpush.msra.mxu0 %v327
        %2710 = vmatpush.msra.mxu0 %v326
        %2711 = vmatpush.msra.mxu0 %v325
        %2712 = vmatpush.msra.mxu0 %v324
        %2713 = vmatpush.msra.mxu0 %v323
        %2714 = vmatpush.msra.mxu0 %v322
        %2715 = vmatpush.msra.mxu0 %v321
        %2716 = vmatpush.msra.mxu0 %v320
        %2717 = vmatmul.f32.gmra.mxu0 %v2358
        %v2718 = vpop.f32.mrf.mxu0
        %v2719 = vadd.f32 %v2699, %v2718
        %2720 = vdwg.mxu0
        %2721 = vmatpush.msra.mxu0 %v351
        %2722 = vmatpush.msra.mxu0 %v350
        %2723 = vmatpush.msra.mxu0 %v349
        %2724 = vmatpush.msra.mxu0 %v348
        %2725 = vmatpush.msra.mxu0 %v347
        %2726 = vmatpush.msra.mxu0 %v346
        %2727 = vmatpush.msra.mxu0 %v345
        %2728 = vmatpush.msra.mxu0 %v344
        %2729 = vmatpush.msra.mxu0 %v343
        %2730 = vmatpush.msra.mxu0 %v342
        %2731 = vmatpush.msra.mxu0 %v341
        %2732 = vmatpush.msra.mxu0 %v340
        %2733 = vmatpush.msra.mxu0 %v339
        %2734 = vmatpush.msra.mxu0 %v338
        %2735 = vmatpush.msra.mxu0 %v337
        %2736 = vmatpush.msra.mxu0 %v336
        %2737 = vmatmul.f32.gmra.mxu0 %v2359
        %v2738 = vpop.f32.mrf.mxu0
        %v2739 = vadd.f32 %v2719, %v2738
        %2740 = vdwg.mxu0
        %2741 = vmatpush.msra.mxu0 %v367
        %2742 = vmatpush.msra.mxu0 %v366
        %2743 = vmatpush.msra.mxu0 %v365
        %2744 = vmatpush.msra.mxu0 %v364
        %2745 = vmatpush.msra.mxu0 %v363
        %2746 = vmatpush.msra.mxu0 %v362
        %2747 = vmatpush.msra.mxu0 %v361
        %2748 = vmatpush.msra.mxu0 %v360
        %2749 = vmatpush.msra.mxu0 %v359
        %2750 = vmatpush.msra.mxu0 %v358
        %2751 = vmatpush.msra.mxu0 %v357
        %2752 = vmatpush.msra.mxu0 %v356
        %2753 = vmatpush.msra.mxu0 %v355
        %2754 = vmatpush.msra.mxu0 %v354
        %2755 = vmatpush.msra.mxu0 %v353
        %2756 = vmatpush.msra.mxu0 %v352
        %2757 = vmatmul.f32.gmra.mxu0 %v2360
        %v2758 = vpop.f32.mrf.mxu0
        %v2759 = vadd.f32 %v2739, %v2758
        %2760 = vdwg.mxu0
        %2761 = vmatpush.msra.mxu0 %v383
        %2762 = vmatpush.msra.mxu0 %v382
        %2763 = vmatpush.msra.mxu0 %v381
        %2764 = vmatpush.msra.mxu0 %v380
        %2765 = vmatpush.msra.mxu0 %v379
        %2766 = vmatpush.msra.mxu0 %v378
        %2767 = vmatpush.msra.mxu0 %v377
        %2768 = vmatpush.msra.mxu0 %v376
        %2769 = vmatpush.msra.mxu0 %v375
        %2770 = vmatpush.msra.mxu0 %v374
        %2771 = vmatpush.msra.mxu0 %v373
        %2772 = vmatpush.msra.mxu0 %v372
        %2773 = vmatpush.msra.mxu0 %v371
        %2774 = vmatpush.msra.mxu0 %v370
        %2775 = vmatpush.msra.mxu0 %v369
        %2776 = vmatpush.msra.mxu0 %v368
        %2777 = vmatmul.f32.gmra.mxu0 %v2361
        %v2778 = vpop.f32.mrf.mxu0
        %v2779 = vadd.f32 %v2759, %v2778
        %2780 = vdwg.mxu0
        %2781 = vmatpush.msra.mxu0 %v399
        %2782 = vmatpush.msra.mxu0 %v398
        %2783 = vmatpush.msra.mxu0 %v397
        %2784 = vmatpush.msra.mxu0 %v396
        %2785 = vmatpush.msra.mxu0 %v395
        %2786 = vmatpush.msra.mxu0 %v394
        %2787 = vmatpush.msra.mxu0 %v393
        %2788 = vmatpush.msra.mxu0 %v392
        %2789 = vmatpush.msra.mxu0 %v391
        %2790 = vmatpush.msra.mxu0 %v390
        %2791 = vmatpush.msra.mxu0 %v389
        %2792 = vmatpush.msra.mxu0 %v388
        %2793 = vmatpush.msra.mxu0 %v387
        %2794 = vmatpush.msra.mxu0 %v386
        %2795 = vmatpush.msra.mxu0 %v385
        %2796 = vmatpush.msra.mxu0 %v384
        %2797 = vmatmul.f32.gmra.mxu0 %v2362
        %v2798 = vpop.f32.mrf.mxu0
        %v2799 = vadd.f32 %v2779, %v2798
        %2800 = vdwg.mxu0
        %2801 = vmatpush.msra.mxu0 %v415
        %2802 = vmatpush.msra.mxu0 %v414
        %2803 = vmatpush.msra.mxu0 %v413
        %2804 = vmatpush.msra.mxu0 %v412
        %2805 = vmatpush.msra.mxu0 %v411
        %2806 = vmatpush.msra.mxu0 %v410
        %2807 = vmatpush.msra.mxu0 %v409
        %2808 = vmatpush.msra.mxu0 %v408
        %2809 = vmatpush.msra.mxu0 %v407
        %2810 = vmatpush.msra.mxu0 %v406
        %2811 = vmatpush.msra.mxu0 %v405
        %2812 = vmatpush.msra.mxu0 %v404
        %2813 = vmatpush.msra.mxu0 %v403
        %2814 = vmatpush.msra.mxu0 %v402
        %2815 = vmatpush.msra.mxu0 %v401
        %2816 = vmatpush.msra.mxu0 %v400
        %2817 = vmatmul.f32.gmra.mxu0 %v2365
        %v2818 = vpop.f32.mrf.mxu0
        %v2819 = vadd.f32 %v2799, %v2818
        %2820 = vdwg.mxu0
        %2821 = vmatpush.msra.mxu0 %v431
        %2822 = vmatpush.msra.mxu0 %v430
        %2823 = vmatpush.msra.mxu0 %v429
        %2824 = vmatpush.msra.mxu0 %v428
        %2825 = vmatpush.msra.mxu0 %v427
        %2826 = vmatpush.msra.mxu0 %v426
        %2827 = vmatpush.msra.mxu0 %v425
        %2828 = vmatpush.msra.mxu0 %v424
        %2829 = vmatpush.msra.mxu0 %v423
        %2830 = vmatpush.msra.mxu0 %v422
        %2831 = vmatpush.msra.mxu0 %v421
        %2832 = vmatpush.msra.mxu0 %v420
        %2833 = vmatpush.msra.mxu0 %v419
        %2834 = vmatpush.msra.mxu0 %v418
        %2835 = vmatpush.msra.mxu0 %v417
        %2836 = vmatpush.msra.mxu0 %v416
        %2837 = vmatmul.f32.gmra.mxu0 %v2366
        %v2838 = vpop.f32.mrf.mxu0
        %v2839 = vadd.f32 %v2819, %v2838
        %2840 = vdwg.mxu0
        %2841 = vmatpush.msra.mxu0 %v447
        %2842 = vmatpush.msra.mxu0 %v446
        %2843 = vmatpush.msra.mxu0 %v445
        %2844 = vmatpush.msra.mxu0 %v444
        %2845 = vmatpush.msra.mxu0 %v443
        %2846 = vmatpush.msra.mxu0 %v442
        %2847 = vmatpush.msra.mxu0 %v441
        %2848 = vmatpush.msra.mxu0 %v440
        %2849 = vmatpush.msra.mxu0 %v439
        %2850 = vmatpush.msra.mxu0 %v438
        %2851 = vmatpush.msra.mxu0 %v437
        %2852 = vmatpush.msra.mxu0 %v436
        %2853 = vmatpush.msra.mxu0 %v435
        %2854 = vmatpush.msra.mxu0 %v434
        %2855 = vmatpush.msra.mxu0 %v433
        %2856 = vmatpush.msra.mxu0 %v432
        %2857 = vmatmul.f32.gmra.mxu0 %v2367
        %v2858 = vpop.f32.mrf.mxu0
        %v2859 = vadd.f32 %v2839, %v2858
        %2860 = vdwg.mxu0
        %2861 = vmatpush.msra.mxu0 %v463
        %2862 = vmatpush.msra.mxu0 %v462
        %2863 = vmatpush.msra.mxu0 %v461
        %2864 = vmatpush.msra.mxu0 %v460
        %2865 = vmatpush.msra.mxu0 %v459
        %2866 = vmatpush.msra.mxu0 %v458
        %2867 = vmatpush.msra.mxu0 %v457
        %2868 = vmatpush.msra.mxu0 %v456
        %2869 = vmatpush.msra.mxu0 %v455
        %2870 = vmatpush.msra.mxu0 %v454
        %2871 = vmatpush.msra.mxu0 %v453
        %2872 = vmatpush.msra.mxu0 %v452
        %2873 = vmatpush.msra.mxu0 %v451
        %2874 = vmatpush.msra.mxu0 %v450
        %2875 = vmatpush.msra.mxu0 %v449
        %2876 = vmatpush.msra.mxu0 %v448
        %2877 = vmatmul.f32.gmra.mxu0 %v2368
        %v2878 = vpop.f32.mrf.mxu0
        %v2879 = vadd.f32 %v2859, %v2878
        %2880 = vdwg.mxu0
        %2881 = vmatpush.msra.mxu0 %v479
        %2882 = vmatpush.msra.mxu0 %v478
        %2883 = vmatpush.msra.mxu0 %v477
        %2884 = vmatpush.msra.mxu0 %v476
        %2885 = vmatpush.msra.mxu0 %v475
        %2886 = vmatpush.msra.mxu0 %v474
        %2887 = vmatpush.msra.mxu0 %v473
        %2888 = vmatpush.msra.mxu0 %v472
        %2889 = vmatpush.msra.mxu0 %v471
        %2890 = vmatpush.msra.mxu0 %v470
        %2891 = vmatpush.msra.mxu0 %v469
        %2892 = vmatpush.msra.mxu0 %v468
        %2893 = vmatpush.msra.mxu0 %v467
        %2894 = vmatpush.msra.mxu0 %v466
        %2895 = vmatpush.msra.mxu0 %v465
        %2896 = vmatpush.msra.mxu0 %v464
        %2897 = vmatmul.f32.gmra.mxu0 %v2369
        %v2898 = vpop.f32.mrf.mxu0
        %v2899 = vadd.f32 %v2879, %v2898
        %2900 = vdwg.mxu0
        %2901 = vmatpush.msra.mxu0 %v495
        %2902 = vmatpush.msra.mxu0 %v494
        %2903 = vmatpush.msra.mxu0 %v493
        %2904 = vmatpush.msra.mxu0 %v492
        %2905 = vmatpush.msra.mxu0 %v491
        %2906 = vmatpush.msra.mxu0 %v490
        %2907 = vmatpush.msra.mxu0 %v489
        %2908 = vmatpush.msra.mxu0 %v488
        %2909 = vmatpush.msra.mxu0 %v487
        %2910 = vmatpush.msra.mxu0 %v486
        %2911 = vmatpush.msra.mxu0 %v485
        %2912 = vmatpush.msra.mxu0 %v484
        %2913 = vmatpush.msra.mxu0 %v483
        %2914 = vmatpush.msra.mxu0 %v482
        %2915 = vmatpush.msra.mxu0 %v481
        %2916 = vmatpush.msra.mxu0 %v480
        %2917 = vmatmul.f32.gmra.mxu0 %v2370
        %v2918 = vpop.f32.mrf.mxu0
        %v2919 = vadd.f32 %v2899, %v2918
        %2920 = vdwg.mxu0
        %2921 = vmatpush.msra.mxu0 %v511
        %2922 = vmatpush.msra.mxu0 %v510
        %2923 = vmatpush.msra.mxu0 %v509
        %2924 = vmatpush.msra.mxu0 %v508
        %2925 = vmatpush.msra.mxu0 %v507
        %2926 = vmatpush.msra.mxu0 %v506
        %2927 = vmatpush.msra.mxu0 %v505
        %2928 = vmatpush.msra.mxu0 %v504
        %2929 = vmatpush.msra.mxu0 %v503
        %2930 = vmatpush.msra.mxu0 %v502
        %2931 = vmatpush.msra.mxu0 %v501
        %2932 = vmatpush.msra.mxu0 %v500
        %2933 = vmatpush.msra.mxu0 %v499
        %2934 = vmatpush.msra.mxu0 %v498
        %2935 = vmatpush.msra.mxu0 %v497
        %2936 = vmatpush.msra.mxu0 %v496
        %2937 = vmatmul.f32.gmra.mxu0 %v2371
        %v2938 = vpop.f32.mrf.mxu0
        %v2939 = vadd.f32 %v2919, %v2938
        %2940 = vdwg.mxu0
        %2941 = vmatpush.msra.mxu0 %v527
        %2942 = vmatpush.msra.mxu0 %v526
        %2943 = vmatpush.msra.mxu0 %v525
        %2944 = vmatpush.msra.mxu0 %v524
        %2945 = vmatpush.msra.mxu0 %v523
        %2946 = vmatpush.msra.mxu0 %v522
        %2947 = vmatpush.msra.mxu0 %v521
        %2948 = vmatpush.msra.mxu0 %v520
        %2949 = vmatpush.msra.mxu0 %v519
        %2950 = vmatpush.msra.mxu0 %v518
        %2951 = vmatpush.msra.mxu0 %v517
        %2952 = vmatpush.msra.mxu0 %v516
        %2953 = vmatpush.msra.mxu0 %v515
        %2954 = vmatpush.msra.mxu0 %v514
        %2955 = vmatpush.msra.mxu0 %v513
        %2956 = vmatpush.msra.mxu0 %v512
        %2957 = vmatmul.f32.gmra.mxu0 %v2372
        %v2958 = vpop.f32.mrf.mxu0
        %v2959 = vadd.f32 %v2939, %v2958
        %2960 = vdwg.mxu0
        %2961 = vmatpush.msra.mxu0 %v543
        %2962 = vmatpush.msra.mxu0 %v542
        %2963 = vmatpush.msra.mxu0 %v541
        %2964 = vmatpush.msra.mxu0 %v540
        %2965 = vmatpush.msra.mxu0 %v539
        %2966 = vmatpush.msra.mxu0 %v538
        %2967 = vmatpush.msra.mxu0 %v537
        %2968 = vmatpush.msra.mxu0 %v536
        %2969 = vmatpush.msra.mxu0 %v535
        %2970 = vmatpush.msra.mxu0 %v534
        %2971 = vmatpush.msra.mxu0 %v533
        %2972 = vmatpush.msra.mxu0 %v532
        %2973 = vmatpush.msra.mxu0 %v531
        %2974 = vmatpush.msra.mxu0 %v530
        %2975 = vmatpush.msra.mxu0 %v529
        %2976 = vmatpush.msra.mxu0 %v528
        %2977 = vmatmul.f32.gmra.mxu0 %v2375
        %v2978 = vpop.f32.mrf.mxu0
        %v2979 = vadd.f32 %v2959, %v2978
        %2980 = vdwg.mxu0
        %2981 = vmatpush.msra.mxu0 %v559
        %2982 = vmatpush.msra.mxu0 %v558
        %2983 = vmatpush.msra.mxu0 %v557
        %2984 = vmatpush.msra.mxu0 %v556
        %2985 = vmatpush.msra.mxu0 %v555
        %2986 = vmatpush.msra.mxu0 %v554
        %2987 = vmatpush.msra.mxu0 %v553
        %2988 = vmatpush.msra.mxu0 %v552
        %2989 = vmatpush.msra.mxu0 %v551
        %2990 = vmatpush.msra.mxu0 %v550
        %2991 = vmatpush.msra.mxu0 %v549
        %2992 = vmatpush.msra.mxu0 %v548
        %2993 = vmatpush.msra.mxu0 %v547
        %2994 = vmatpush.msra.mxu0 %v546
        %2995 = vmatpush.msra.mxu0 %v545
        %2996 = vmatpush.msra.mxu0 %v544
        %2997 = vmatmul.f32.gmra.mxu0 %v2376
        %v2998 = vpop.f32.mrf.mxu0
        %v2999 = vadd.f32 %v2979, %v2998
        %3000 = vdwg.mxu0
        %3001 = vmatpush.msra.mxu0 %v575
        %3002 = vmatpush.msra.mxu0 %v574
        %3003 = vmatpush.msra.mxu0 %v573
        %3004 = vmatpush.msra.mxu0 %v572
        %3005 = vmatpush.msra.mxu0 %v571
        %3006 = vmatpush.msra.mxu0 %v570
        %3007 = vmatpush.msra.mxu0 %v569
        %3008 = vmatpush.msra.mxu0 %v568
        %3009 = vmatpush.msra.mxu0 %v567
        %3010 = vmatpush.msra.mxu0 %v566
        %3011 = vmatpush.msra.mxu0 %v565
        %3012 = vmatpush.msra.mxu0 %v564
        %3013 = vmatpush.msra.mxu0 %v563
        %3014 = vmatpush.msra.mxu0 %v562
        %3015 = vmatpush.msra.mxu0 %v561
        %3016 = vmatpush.msra.mxu0 %v560
        %3017 = vmatmul.f32.gmra.mxu0 %v2377
        %v3018 = vpop.f32.mrf.mxu0
        %v3019 = vadd.f32 %v2999, %v3018
        %3020 = vdwg.mxu0
        %3021 = vmatpush.msra.mxu0 %v591
        %3022 = vmatpush.msra.mxu0 %v590
        %3023 = vmatpush.msra.mxu0 %v589
        %3024 = vmatpush.msra.mxu0 %v588
        %3025 = vmatpush.msra.mxu0 %v587
        %3026 = vmatpush.msra.mxu0 %v586
        %3027 = vmatpush.msra.mxu0 %v585
        %3028 = vmatpush.msra.mxu0 %v584
        %3029 = vmatpush.msra.mxu0 %v583
        %3030 = vmatpush.msra.mxu0 %v582
        %3031 = vmatpush.msra.mxu0 %v581
        %3032 = vmatpush.msra.mxu0 %v580
        %3033 = vmatpush.msra.mxu0 %v579
        %3034 = vmatpush.msra.mxu0 %v578
        %3035 = vmatpush.msra.mxu0 %v577
        %3036 = vmatpush.msra.mxu0 %v576
        %3037 = vmatmul.f32.gmra.mxu0 %v2378
        %v3038 = vpop.f32.mrf.mxu0
        %v3039 = vadd.f32 %v3019, %v3038
        %3040 = vdwg.mxu0
        %3041 = vmatpush.msra.mxu0 %v607
        %3042 = vmatpush.msra.mxu0 %v606
        %3043 = vmatpush.msra.mxu0 %v605
        %3044 = vmatpush.msra.mxu0 %v604
        %3045 = vmatpush.msra.mxu0 %v603
        %3046 = vmatpush.msra.mxu0 %v602
        %3047 = vmatpush.msra.mxu0 %v601
        %3048 = vmatpush.msra.mxu0 %v600
        %3049 = vmatpush.msra.mxu0 %v599
        %3050 = vmatpush.msra.mxu0 %v598
        %3051 = vmatpush.msra.mxu0 %v597
        %3052 = vmatpush.msra.mxu0 %v596
        %3053 = vmatpush.msra.mxu0 %v595
        %3054 = vmatpush.msra.mxu0 %v594
        %3055 = vmatpush.msra.mxu0 %v593
        %3056 = vmatpush.msra.mxu0 %v592
        %3057 = vmatmul.f32.gmra.mxu0 %v2379
        %v3058 = vpop.f32.mrf.mxu0
        %v3059 = vadd.f32 %v3039, %v3058
        %3060 = vdwg.mxu0
        %3061 = vmatpush.msra.mxu0 %v623
        %3062 = vmatpush.msra.mxu0 %v622
        %3063 = vmatpush.msra.mxu0 %v621
        %3064 = vmatpush.msra.mxu0 %v620
        %3065 = vmatpush.msra.mxu0 %v619
        %3066 = vmatpush.msra.mxu0 %v618
        %3067 = vmatpush.msra.mxu0 %v617
        %3068 = vmatpush.msra.mxu0 %v616
        %3069 = vmatpush.msra.mxu0 %v615
        %3070 = vmatpush.msra.mxu0 %v614
        %3071 = vmatpush.msra.mxu0 %v613
        %3072 = vmatpush.msra.mxu0 %v612
        %3073 = vmatpush.msra.mxu0 %v611
        %3074 = vmatpush.msra.mxu0 %v610
        %3075 = vmatpush.msra.mxu0 %v609
        %3076 = vmatpush.msra.mxu0 %v608
        %3077 = vmatmul.f32.gmra.mxu0 %v2380
        %v3078 = vpop.f32.mrf.mxu0
        %v3079 = vadd.f32 %v3059, %v3078
        %3080 = vdwg.mxu0
        %3081 = vmatpush.msra.mxu0 %v639
        %3082 = vmatpush.msra.mxu0 %v638
        %3083 = vmatpush.msra.mxu0 %v637
        %3084 = vmatpush.msra.mxu0 %v636
        %3085 = vmatpush.msra.mxu0 %v635
        %3086 = vmatpush.msra.mxu0 %v634
        %3087 = vmatpush.msra.mxu0 %v633
        %3088 = vmatpush.msra.mxu0 %v632
        %3089 = vmatpush.msra.mxu0 %v631
        %3090 = vmatpush.msra.mxu0 %v630
        %3091 = vmatpush.msra.mxu0 %v629
        %3092 = vmatpush.msra.mxu0 %v628
        %3093 = vmatpush.msra.mxu0 %v627
        %3094 = vmatpush.msra.mxu0 %v626
        %3095 = vmatpush.msra.mxu0 %v625
        %3096 = vmatpush.msra.mxu0 %v624
        %3097 = vmatmul.f32.gmra.mxu0 %v2381
        %v3098 = vpop.f32.mrf.mxu0
        %v3099 = vadd.f32 %v3079, %v3098
        %3100 = vdwg.mxu0
        %3101 = vmatpush.msra.mxu0 %v655
        %3102 = vmatpush.msra.mxu0 %v654
        %3103 = vmatpush.msra.mxu0 %v653
        %3104 = vmatpush.msra.mxu0 %v652
        %3105 = vmatpush.msra.mxu0 %v651
        %3106 = vmatpush.msra.mxu0 %v650
        %3107 = vmatpush.msra.mxu0 %v649
        %3108 = vmatpush.msra.mxu0 %v648
        %3109 = vmatpush.msra.mxu0 %v647
        %3110 = vmatpush.msra.mxu0 %v646
        %3111 = vmatpush.msra.mxu0 %v645
        %3112 = vmatpush.msra.mxu0 %v644
        %3113 = vmatpush.msra.mxu0 %v643
        %3114 = vmatpush.msra.mxu0 %v642
        %3115 = vmatpush.msra.mxu0 %v641
        %3116 = vmatpush.msra.mxu0 %v640
        %3117 = vmatmul.f32.gmra.mxu0 %v2382
        %v3118 = vpop.f32.mrf.mxu0
        %v3119 = vadd.f32 %v3099, %v3118
        %3120 = vdwg.mxu0
        %3121 = vmatpush.msra.mxu0 %v671
        %3122 = vmatpush.msra.mxu0 %v670
        %3123 = vmatpush.msra.mxu0 %v669
        %3124 = vmatpush.msra.mxu0 %v668
        %3125 = vmatpush.msra.mxu0 %v667
        %3126 = vmatpush.msra.mxu0 %v666
        %3127 = vmatpush.msra.mxu0 %v665
        %3128 = vmatpush.msra.mxu0 %v664
        %3129 = vmatpush.msra.mxu0 %v663
        %3130 = vmatpush.msra.mxu0 %v662
        %3131 = vmatpush.msra.mxu0 %v661
        %3132 = vmatpush.msra.mxu0 %v660
        %3133 = vmatpush.msra.mxu0 %v659
        %3134 = vmatpush.msra.mxu0 %v658
        %3135 = vmatpush.msra.mxu0 %v657
        %3136 = vmatpush.msra.mxu0 %v656
        %3137 = vmatmul.f32.gmra.mxu0 %v2385
        %v3138 = vpop.f32.mrf.mxu0
        %v3139 = vadd.f32 %v3119, %v3138
        %3140 = vdwg.mxu0
        %3141 = vmatpush.msra.mxu0 %v687
        %3142 = vmatpush.msra.mxu0 %v686
        %3143 = vmatpush.msra.mxu0 %v685
        %3144 = vmatpush.msra.mxu0 %v684
        %3145 = vmatpush.msra.mxu0 %v683
        %3146 = vmatpush.msra.mxu0 %v682
        %3147 = vmatpush.msra.mxu0 %v681
        %3148 = vmatpush.msra.mxu0 %v680
        %3149 = vmatpush.msra.mxu0 %v679
        %3150 = vmatpush.msra.mxu0 %v678
        %3151 = vmatpush.msra.mxu0 %v677
        %3152 = vmatpush.msra.mxu0 %v676
        %3153 = vmatpush.msra.mxu0 %v675
        %3154 = vmatpush.msra.mxu0 %v674
        %3155 = vmatpush.msra.mxu0 %v673
        %3156 = vmatpush.msra.mxu0 %v672
        %3157 = vmatmul.f32.gmra.mxu0 %v2386
        %v3158 = vpop.f32.mrf.mxu0
        %v3159 = vadd.f32 %v3139, %v3158
        %3160 = vdwg.mxu0
        %3161 = vmatpush.msra.mxu0 %v703
        %3162 = vmatpush.msra.mxu0 %v702
        %3163 = vmatpush.msra.mxu0 %v701
        %3164 = vmatpush.msra.mxu0 %v700
        %3165 = vmatpush.msra.mxu0 %v699
        %3166 = vmatpush.msra.mxu0 %v698
        %3167 = vmatpush.msra.mxu0 %v697
        %3168 = vmatpush.msra.mxu0 %v696
        %3169 = vmatpush.msra.mxu0 %v695
        %3170 = vmatpush.msra.mxu0 %v694
        %3171 = vmatpush.msra.mxu0 %v693
        %3172 = vmatpush.msra.mxu0 %v692
        %3173 = vmatpush.msra.mxu0 %v691
        %3174 = vmatpush.msra.mxu0 %v690
        %3175 = vmatpush.msra.mxu0 %v689
        %3176 = vmatpush.msra.mxu0 %v688
        %3177 = vmatmul.f32.gmra.mxu0 %v2387
        %v3178 = vpop.f32.mrf.mxu0
        %v3179 = vadd.f32 %v3159, %v3178
        %3180 = vdwg.mxu0
        %3181 = vmatpush.msra.mxu0 %v719
        %3182 = vmatpush.msra.mxu0 %v718
        %3183 = vmatpush.msra.mxu0 %v717
        %3184 = vmatpush.msra.mxu0 %v716
        %3185 = vmatpush.msra.mxu0 %v715
        %3186 = vmatpush.msra.mxu0 %v714
        %3187 = vmatpush.msra.mxu0 %v713
        %3188 = vmatpush.msra.mxu0 %v712
        %3189 = vmatpush.msra.mxu0 %v711
        %3190 = vmatpush.msra.mxu0 %v710
        %3191 = vmatpush.msra.mxu0 %v709
        %3192 = vmatpush.msra.mxu0 %v708
        %3193 = vmatpush.msra.mxu0 %v707
        %3194 = vmatpush.msra.mxu0 %v706
        %3195 = vmatpush.msra.mxu0 %v705
        %3196 = vmatpush.msra.mxu0 %v704
        %3197 = vmatmul.f32.gmra.mxu0 %v2388
        %v3198 = vpop.f32.mrf.mxu0
        %v3199 = vadd.f32 %v3179, %v3198
        %3200 = vdwg.mxu0
        %3201 = vmatpush.msra.mxu0 %v735
        %3202 = vmatpush.msra.mxu0 %v734
        %3203 = vmatpush.msra.mxu0 %v733
        %3204 = vmatpush.msra.mxu0 %v732
        %3205 = vmatpush.msra.mxu0 %v731
        %3206 = vmatpush.msra.mxu0 %v730
        %3207 = vmatpush.msra.mxu0 %v729
        %3208 = vmatpush.msra.mxu0 %v728
        %3209 = vmatpush.msra.mxu0 %v727
        %3210 = vmatpush.msra.mxu0 %v726
        %3211 = vmatpush.msra.mxu0 %v725
        %3212 = vmatpush.msra.mxu0 %v724
        %3213 = vmatpush.msra.mxu0 %v723
        %3214 = vmatpush.msra.mxu0 %v722
        %3215 = vmatpush.msra.mxu0 %v721
        %3216 = vmatpush.msra.mxu0 %v720
        %3217 = vmatmul.f32.gmra.mxu0 %v2389
        %v3218 = vpop.f32.mrf.mxu0
        %v3219 = vadd.f32 %v3199, %v3218
        %3220 = vdwg.mxu0
        %3221 = vmatpush.msra.mxu0 %v751
        %3222 = vmatpush.msra.mxu0 %v750
        %3223 = vmatpush.msra.mxu0 %v749
        %3224 = vmatpush.msra.mxu0 %v748
        %3225 = vmatpush.msra.mxu0 %v747
        %3226 = vmatpush.msra.mxu0 %v746
        %3227 = vmatpush.msra.mxu0 %v745
        %3228 = vmatpush.msra.mxu0 %v744
        %3229 = vmatpush.msra.mxu0 %v743
        %3230 = vmatpush.msra.mxu0 %v742
        %3231 = vmatpush.msra.mxu0 %v741
        %3232 = vmatpush.msra.mxu0 %v740
        %3233 = vmatpush.msra.mxu0 %v739
        %3234 = vmatpush.msra.mxu0 %v738
        %3235 = vmatpush.msra.mxu0 %v737
        %3236 = vmatpush.msra.mxu0 %v736
        %3237 = vmatmul.f32.gmra.mxu0 %v2390
        %v3238 = vpop.f32.mrf.mxu0
        %v3239 = vadd.f32 %v3219, %v3238
        %3240 = vdwg.mxu0
        %3241 = vmatpush.msra.mxu0 %v767
        %3242 = vmatpush.msra.mxu0 %v766
        %3243 = vmatpush.msra.mxu0 %v765
        %3244 = vmatpush.msra.mxu0 %v764
        %3245 = vmatpush.msra.mxu0 %v763
        %3246 = vmatpush.msra.mxu0 %v762
        %3247 = vmatpush.msra.mxu0 %v761
        %3248 = vmatpush.msra.mxu0 %v760
        %3249 = vmatpush.msra.mxu0 %v759
        %3250 = vmatpush.msra.mxu0 %v758
        %3251 = vmatpush.msra.mxu0 %v757
        %3252 = vmatpush.msra.mxu0 %v756
        %3253 = vmatpush.msra.mxu0 %v755
        %3254 = vmatpush.msra.mxu0 %v754
        %3255 = vmatpush.msra.mxu0 %v753
        %3256 = vmatpush.msra.mxu0 %v752
        %3257 = vmatmul.f32.gmra.mxu0 %v2391
        %v3258 = vpop.f32.mrf.mxu0
        %v3259 = vadd.f32 %v3239, %v3258
        %3260 = vdwg.mxu0
        %3261 = vmatpush.msra.mxu0 %v783
        %3262 = vmatpush.msra.mxu0 %v782
        %3263 = vmatpush.msra.mxu0 %v781
        %3264 = vmatpush.msra.mxu0 %v780
        %3265 = vmatpush.msra.mxu0 %v779
        %3266 = vmatpush.msra.mxu0 %v778
        %3267 = vmatpush.msra.mxu0 %v777
        %3268 = vmatpush.msra.mxu0 %v776
        %3269 = vmatpush.msra.mxu0 %v775
        %3270 = vmatpush.msra.mxu0 %v774
        %3271 = vmatpush.msra.mxu0 %v773
        %3272 = vmatpush.msra.mxu0 %v772
        %3273 = vmatpush.msra.mxu0 %v771
        %3274 = vmatpush.msra.mxu0 %v770
        %3275 = vmatpush.msra.mxu0 %v769
        %3276 = vmatpush.msra.mxu0 %v768
        %3277 = vmatmul.f32.gmra.mxu0 %v2392
        %v3278 = vpop.f32.mrf.mxu0
        %v3279 = vadd.f32 %v3259, %v3278
        %3280 = vdwg.mxu0
        %3281 = vmatpush.msra.mxu0 %v799
        %3282 = vmatpush.msra.mxu0 %v798
        %3283 = vmatpush.msra.mxu0 %v797
        %3284 = vmatpush.msra.mxu0 %v796
        %3285 = vmatpush.msra.mxu0 %v795
        %3286 = vmatpush.msra.mxu0 %v794
        %3287 = vmatpush.msra.mxu0 %v793
        %3288 = vmatpush.msra.mxu0 %v792
        %3289 = vmatpush.msra.mxu0 %v791
        %3290 = vmatpush.msra.mxu0 %v790
        %3291 = vmatpush.msra.mxu0 %v789
        %3292 = vmatpush.msra.mxu0 %v788
        %3293 = vmatpush.msra.mxu0 %v787
        %3294 = vmatpush.msra.mxu0 %v786
        %3295 = vmatpush.msra.mxu0 %v785
        %3296 = vmatpush.msra.mxu0 %v784
        %3297 = vmatmul.f32.gmra.mxu0 %v2395
        %v3298 = vpop.f32.mrf.mxu0
        %v3299 = vadd.f32 %v3279, %v3298
        %3300 = vdwg.mxu0
        %3301 = vmatpush.msra.mxu0 %v815
        %3302 = vmatpush.msra.mxu0 %v814
        %3303 = vmatpush.msra.mxu0 %v813
        %3304 = vmatpush.msra.mxu0 %v812
        %3305 = vmatpush.msra.mxu0 %v811
        %3306 = vmatpush.msra.mxu0 %v810
        %3307 = vmatpush.msra.mxu0 %v809
        %3308 = vmatpush.msra.mxu0 %v808
        %3309 = vmatpush.msra.mxu0 %v807
        %3310 = vmatpush.msra.mxu0 %v806
        %3311 = vmatpush.msra.mxu0 %v805
        %3312 = vmatpush.msra.mxu0 %v804
        %3313 = vmatpush.msra.mxu0 %v803
        %3314 = vmatpush.msra.mxu0 %v802
        %3315 = vmatpush.msra.mxu0 %v801
        %3316 = vmatpush.msra.mxu0 %v800
        %3317 = vmatmul.f32.gmra.mxu0 %v2396
        %v3318 = vpop.f32.mrf.mxu0
        %v3319 = vadd.f32 %v3299, %v3318
        %3320 = vdwg.mxu0
        %3321 = vmatpush.msra.mxu0 %v831
        %3322 = vmatpush.msra.mxu0 %v830
        %3323 = vmatpush.msra.mxu0 %v829
        %3324 = vmatpush.msra.mxu0 %v828
        %3325 = vmatpush.msra.mxu0 %v827
        %3326 = vmatpush.msra.mxu0 %v826
        %3327 = vmatpush.msra.mxu0 %v825
        %3328 = vmatpush.msra.mxu0 %v824
        %3329 = vmatpush.msra.mxu0 %v823
        %3330 = vmatpush.msra.mxu0 %v822
        %3331 = vmatpush.msra.mxu0 %v821
        %3332 = vmatpush.msra.mxu0 %v820
        %3333 = vmatpush.msra.mxu0 %v819
        %3334 = vmatpush.msra.mxu0 %v818
        %3335 = vmatpush.msra.mxu0 %v817
        %3336 = vmatpush.msra.mxu0 %v816
        %3337 = vmatmul.f32.gmra.mxu0 %v2397
        %v3338 = vpop.f32.mrf.mxu0
        %v3339 = vadd.f32 %v3319, %v3338
        %3340 = vdwg.mxu0
        %3341 = vmatpush.msra.mxu0 %v847
        %3342 = vmatpush.msra.mxu0 %v846
        %3343 = vmatpush.msra.mxu0 %v845
        %3344 = vmatpush.msra.mxu0 %v844
        %3345 = vmatpush.msra.mxu0 %v843
        %3346 = vmatpush.msra.mxu0 %v842
        %3347 = vmatpush.msra.mxu0 %v841
        %3348 = vmatpush.msra.mxu0 %v840
        %3349 = vmatpush.msra.mxu0 %v839
        %3350 = vmatpush.msra.mxu0 %v838
        %3351 = vmatpush.msra.mxu0 %v837
        %3352 = vmatpush.msra.mxu0 %v836
        %3353 = vmatpush.msra.mxu0 %v835
        %3354 = vmatpush.msra.mxu0 %v834
        %3355 = vmatpush.msra.mxu0 %v833
        %3356 = vmatpush.msra.mxu0 %v832
        %3357 = vmatmul.f32.gmra.mxu0 %v2398
        %v3358 = vpop.f32.mrf.mxu0
        %v3359 = vadd.f32 %v3339, %v3358
        %3360 = vdwg.mxu0
        %3361 = vmatpush.msra.mxu0 %v863
        %3362 = vmatpush.msra.mxu0 %v862
        %3363 = vmatpush.msra.mxu0 %v861
        %3364 = vmatpush.msra.mxu0 %v860
        %3365 = vmatpush.msra.mxu0 %v859
        %3366 = vmatpush.msra.mxu0 %v858
        %3367 = vmatpush.msra.mxu0 %v857
        %3368 = vmatpush.msra.mxu0 %v856
        %3369 = vmatpush.msra.mxu0 %v855
        %3370 = vmatpush.msra.mxu0 %v854
        %3371 = vmatpush.msra.mxu0 %v853
        %3372 = vmatpush.msra.mxu0 %v852
        %3373 = vmatpush.msra.mxu0 %v851
        %3374 = vmatpush.msra.mxu0 %v850
        %3375 = vmatpush.msra.mxu0 %v849
        %3376 = vmatpush.msra.mxu0 %v848
        %3377 = vmatmul.f32.gmra.mxu0 %v2399
        %v3378 = vpop.f32.mrf.mxu0
        %v3379 = vadd.f32 %v3359, %v3378
        %3380 = vdwg.mxu0
        %3381 = vmatpush.msra.mxu0 %v879
        %3382 = vmatpush.msra.mxu0 %v878
        %3383 = vmatpush.msra.mxu0 %v877
        %3384 = vmatpush.msra.mxu0 %v876
        %3385 = vmatpush.msra.mxu0 %v875
        %3386 = vmatpush.msra.mxu0 %v874
        %3387 = vmatpush.msra.mxu0 %v873
        %3388 = vmatpush.msra.mxu0 %v872
        %3389 = vmatpush.msra.mxu0 %v871
        %3390 = vmatpush.msra.mxu0 %v870
        %3391 = vmatpush.msra.mxu0 %v869
        %3392 = vmatpush.msra.mxu0 %v868
        %3393 = vmatpush.msra.mxu0 %v867
        %3394 = vmatpush.msra.mxu0 %v866
        %3395 = vmatpush.msra.mxu0 %v865
        %3396 = vmatpush.msra.mxu0 %v864
        %3397 = vmatmul.f32.gmra.mxu0 %v2400
        %v3398 = vpop.f32.mrf.mxu0
        %v3399 = vadd.f32 %v3379, %v3398
        %3400 = vdwg.mxu0
        %3401 = vmatpush.msra.mxu0 %v895
        %3402 = vmatpush.msra.mxu0 %v894
        %3403 = vmatpush.msra.mxu0 %v893
        %3404 = vmatpush.msra.mxu0 %v892
        %3405 = vmatpush.msra.mxu0 %v891
        %3406 = vmatpush.msra.mxu0 %v890
        %3407 = vmatpush.msra.mxu0 %v889
        %3408 = vmatpush.msra.mxu0 %v888
        %3409 = vmatpush.msra.mxu0 %v887
        %3410 = vmatpush.msra.mxu0 %v886
        %3411 = vmatpush.msra.mxu0 %v885
        %3412 = vmatpush.msra.mxu0 %v884
        %3413 = vmatpush.msra.mxu0 %v883
        %3414 = vmatpush.msra.mxu0 %v882
        %3415 = vmatpush.msra.mxu0 %v881
        %3416 = vmatpush.msra.mxu0 %v880
        %3417 = vmatmul.f32.gmra.mxu0 %v2401
        %v3418 = vpop.f32.mrf.mxu0
        %v3419 = vadd.f32 %v3399, %v3418
        %3420 = vdwg.mxu0
        %3421 = vmatpush.msra.mxu0 %v911
        %3422 = vmatpush.msra.mxu0 %v910
        %3423 = vmatpush.msra.mxu0 %v909
        %3424 = vmatpush.msra.mxu0 %v908
        %3425 = vmatpush.msra.mxu0 %v907
        %3426 = vmatpush.msra.mxu0 %v906
        %3427 = vmatpush.msra.mxu0 %v905
        %3428 = vmatpush.msra.mxu0 %v904
        %3429 = vmatpush.msra.mxu0 %v903
        %3430 = vmatpush.msra.mxu0 %v902
        %3431 = vmatpush.msra.mxu0 %v901
        %3432 = vmatpush.msra.mxu0 %v900
        %3433 = vmatpush.msra.mxu0 %v899
        %3434 = vmatpush.msra.mxu0 %v898
        %3435 = vmatpush.msra.mxu0 %v897
        %3436 = vmatpush.msra.mxu0 %v896
        %3437 = vmatmul.f32.gmra.mxu0 %v2402
        %v3438 = vpop.f32.mrf.mxu0
        %v3439 = vadd.f32 %v3419, %v3438
        %3440 = vdwg.mxu0
        %3441 = vmatpush.msra.mxu0 %v927
        %3442 = vmatpush.msra.mxu0 %v926
        %3443 = vmatpush.msra.mxu0 %v925
        %3444 = vmatpush.msra.mxu0 %v924
        %3445 = vmatpush.msra.mxu0 %v923
        %3446 = vmatpush.msra.mxu0 %v922
        %3447 = vmatpush.msra.mxu0 %v921
        %3448 = vmatpush.msra.mxu0 %v920
        %3449 = vmatpush.msra.mxu0 %v919
        %3450 = vmatpush.msra.mxu0 %v918
        %3451 = vmatpush.msra.mxu0 %v917
        %3452 = vmatpush.msra.mxu0 %v916
        %3453 = vmatpush.msra.mxu0 %v915
        %3454 = vmatpush.msra.mxu0 %v914
        %3455 = vmatpush.msra.mxu0 %v913
        %3456 = vmatpush.msra.mxu0 %v912
        %3457 = vmatmul.f32.gmra.mxu0 %v2405
        %v3458 = vpop.f32.mrf.mxu0
        %v3459 = vadd.f32 %v3439, %v3458
        %3460 = vdwg.mxu0
        %3461 = vmatpush.msra.mxu0 %v943
        %3462 = vmatpush.msra.mxu0 %v942
        %3463 = vmatpush.msra.mxu0 %v941
        %3464 = vmatpush.msra.mxu0 %v940
        %3465 = vmatpush.msra.mxu0 %v939
        %3466 = vmatpush.msra.mxu0 %v938
        %3467 = vmatpush.msra.mxu0 %v937
        %3468 = vmatpush.msra.mxu0 %v936
        %3469 = vmatpush.msra.mxu0 %v935
        %3470 = vmatpush.msra.mxu0 %v934
        %3471 = vmatpush.msra.mxu0 %v933
        %3472 = vmatpush.msra.mxu0 %v932
        %3473 = vmatpush.msra.mxu0 %v931
        %3474 = vmatpush.msra.mxu0 %v930
        %3475 = vmatpush.msra.mxu0 %v929
        %3476 = vmatpush.msra.mxu0 %v928
        %3477 = vmatmul.f32.gmra.mxu0 %v2406
        %v3478 = vpop.f32.mrf.mxu0
        %v3479 = vadd.f32 %v3459, %v3478
        %3480 = vdwg.mxu0
        %3481 = vmatpush.msra.mxu0 %v959
        %3482 = vmatpush.msra.mxu0 %v958
        %3483 = vmatpush.msra.mxu0 %v957
        %3484 = vmatpush.msra.mxu0 %v956
        %3485 = vmatpush.msra.mxu0 %v955
        %3486 = vmatpush.msra.mxu0 %v954
        %3487 = vmatpush.msra.mxu0 %v953
        %3488 = vmatpush.msra.mxu0 %v952
        %3489 = vmatpush.msra.mxu0 %v951
        %3490 = vmatpush.msra.mxu0 %v950
        %3491 = vmatpush.msra.mxu0 %v949
        %3492 = vmatpush.msra.mxu0 %v948
        %3493 = vmatpush.msra.mxu0 %v947
        %3494 = vmatpush.msra.mxu0 %v946
        %3495 = vmatpush.msra.mxu0 %v945
        %3496 = vmatpush.msra.mxu0 %v944
        %3497 = vmatmul.f32.gmra.mxu0 %v2407
        %v3498 = vpop.f32.mrf.mxu0
        %v3499 = vadd.f32 %v3479, %v3498
        %3500 = vdwg.mxu0
        %3501 = vmatpush.msra.mxu0 %v975
        %3502 = vmatpush.msra.mxu0 %v974
        %3503 = vmatpush.msra.mxu0 %v973
        %3504 = vmatpush.msra.mxu0 %v972
        %3505 = vmatpush.msra.mxu0 %v971
        %3506 = vmatpush.msra.mxu0 %v970
        %3507 = vmatpush.msra.mxu0 %v969
        %3508 = vmatpush.msra.mxu0 %v968
        %3509 = vmatpush.msra.mxu0 %v967
        %3510 = vmatpush.msra.mxu0 %v966
        %3511 = vmatpush.msra.mxu0 %v965
        %3512 = vmatpush.msra.mxu0 %v964
        %3513 = vmatpush.msra.mxu0 %v963
        %3514 = vmatpush.msra.mxu0 %v962
        %3515 = vmatpush.msra.mxu0 %v961
        %3516 = vmatpush.msra.mxu0 %v960
        %3517 = vmatmul.f32.gmra.mxu0 %v2408
        %v3518 = vpop.f32.mrf.mxu0
        %v3519 = vadd.f32 %v3499, %v3518
        %3520 = vdwg.mxu0
        %3521 = vmatpush.msra.mxu0 %v991
        %3522 = vmatpush.msra.mxu0 %v990
        %3523 = vmatpush.msra.mxu0 %v989
        %3524 = vmatpush.msra.mxu0 %v988
        %3525 = vmatpush.msra.mxu0 %v987
        %3526 = vmatpush.msra.mxu0 %v986
        %3527 = vmatpush.msra.mxu0 %v985
        %3528 = vmatpush.msra.mxu0 %v984
        %3529 = vmatpush.msra.mxu0 %v983
        %3530 = vmatpush.msra.mxu0 %v982
        %3531 = vmatpush.msra.mxu0 %v981
        %3532 = vmatpush.msra.mxu0 %v980
        %3533 = vmatpush.msra.mxu0 %v979
        %3534 = vmatpush.msra.mxu0 %v978
        %3535 = vmatpush.msra.mxu0 %v977
        %3536 = vmatpush.msra.mxu0 %v976
        %3537 = vmatmul.f32.gmra.mxu0 %v2409
        %v3538 = vpop.f32.mrf.mxu0
        %v3539 = vadd.f32 %v3519, %v3538
        %3540 = vdwg.mxu0
        %3541 = vmatpush.msra.mxu0 %v1007
        %3542 = vmatpush.msra.mxu0 %v1006
        %3543 = vmatpush.msra.mxu0 %v1005
        %3544 = vmatpush.msra.mxu0 %v1004
        %3545 = vmatpush.msra.mxu0 %v1003
        %3546 = vmatpush.msra.mxu0 %v1002
        %3547 = vmatpush.msra.mxu0 %v1001
        %3548 = vmatpush.msra.mxu0 %v1000
        %3549 = vmatpush.msra.mxu0 %v999
        %3550 = vmatpush.msra.mxu0 %v998
        %3551 = vmatpush.msra.mxu0 %v997
        %3552 = vmatpush.msra.mxu0 %v996
        %3553 = vmatpush.msra.mxu0 %v995
        %3554 = vmatpush.msra.mxu0 %v994
        %3555 = vmatpush.msra.mxu0 %v993
        %3556 = vmatpush.msra.mxu0 %v992
        %3557 = vmatmul.f32.gmra.mxu0 %v2410
        %v3558 = vpop.f32.mrf.mxu0
        %v3559 = vadd.f32 %v3539, %v3558
        %3560 = vdwg.mxu0
        %3561 = vmatpush.msra.mxu0 %v1023
        %3562 = vmatpush.msra.mxu0 %v1022
        %3563 = vmatpush.msra.mxu0 %v1021
        %3564 = vmatpush.msra.mxu0 %v1020
        %3565 = vmatpush.msra.mxu0 %v1019
        %3566 = vmatpush.msra.mxu0 %v1018
        %3567 = vmatpush.msra.mxu0 %v1017
        %3568 = vmatpush.msra.mxu0 %v1016
        %3569 = vmatpush.msra.mxu0 %v1015
        %3570 = vmatpush.msra.mxu0 %v1014
        %3571 = vmatpush.msra.mxu0 %v1013
        %3572 = vmatpush.msra.mxu0 %v1012
        %3573 = vmatpush.msra.mxu0 %v1011
        %3574 = vmatpush.msra.mxu0 %v1010
        %3575 = vmatpush.msra.mxu0 %v1009
        %3576 = vmatpush.msra.mxu0 %v1008
        %3577 = vmatmul.f32.gmra.mxu0 %v2411
        %v3578 = vpop.f32.mrf.mxu0
        %v3579 = vadd.f32 %v3559, %v3578
        %3580 = vdwg.mxu0
        %3581 = vmatpush.msra.mxu0 %v1039
        %3582 = vmatpush.msra.mxu0 %v1038
        %3583 = vmatpush.msra.mxu0 %v1037
        %3584 = vmatpush.msra.mxu0 %v1036
        %3585 = vmatpush.msra.mxu0 %v1035
        %3586 = vmatpush.msra.mxu0 %v1034
        %3587 = vmatpush.msra.mxu0 %v1033
        %3588 = vmatpush.msra.mxu0 %v1032
        %3589 = vmatpush.msra.mxu0 %v1031
        %3590 = vmatpush.msra.mxu0 %v1030
        %3591 = vmatpush.msra.mxu0 %v1029
        %3592 = vmatpush.msra.mxu0 %v1028
        %3593 = vmatpush.msra.mxu0 %v1027
        %3594 = vmatpush.msra.mxu0 %v1026
        %3595 = vmatpush.msra.mxu0 %v1025
        %3596 = vmatpush.msra.mxu0 %v1024
        %3597 = vmatmul.f32.gmra.mxu0 %v2412
        %v3598 = vpop.f32.mrf.mxu0
        %v3599 = vadd.f32 %v3579, %v3598
        %3600 = vdwg.mxu0
        %3601 = vmatpush.msra.mxu0 %v1055
        %3602 = vmatpush.msra.mxu0 %v1054
        %3603 = vmatpush.msra.mxu0 %v1053
        %3604 = vmatpush.msra.mxu0 %v1052
        %3605 = vmatpush.msra.mxu0 %v1051
        %3606 = vmatpush.msra.mxu0 %v1050
        %3607 = vmatpush.msra.mxu0 %v1049
        %3608 = vmatpush.msra.mxu0 %v1048
        %3609 = vmatpush.msra.mxu0 %v1047
        %3610 = vmatpush.msra.mxu0 %v1046
        %3611 = vmatpush.msra.mxu0 %v1045
        %3612 = vmatpush.msra.mxu0 %v1044
        %3613 = vmatpush.msra.mxu0 %v1043
        %3614 = vmatpush.msra.mxu0 %v1042
        %3615 = vmatpush.msra.mxu0 %v1041
        %3616 = vmatpush.msra.mxu0 %v1040
        %3617 = vmatmul.f32.gmra.mxu0 %v2415
        %v3618 = vpop.f32.mrf.mxu0
        %v3619 = vadd.f32 %v3599, %v3618
        %3620 = vdwg.mxu0
        %3621 = vmatpush.msra.mxu0 %v1071
        %3622 = vmatpush.msra.mxu0 %v1070
        %3623 = vmatpush.msra.mxu0 %v1069
        %3624 = vmatpush.msra.mxu0 %v1068
        %3625 = vmatpush.msra.mxu0 %v1067
        %3626 = vmatpush.msra.mxu0 %v1066
        %3627 = vmatpush.msra.mxu0 %v1065
        %3628 = vmatpush.msra.mxu0 %v1064
        %3629 = vmatpush.msra.mxu0 %v1063
        %3630 = vmatpush.msra.mxu0 %v1062
        %3631 = vmatpush.msra.mxu0 %v1061
        %3632 = vmatpush.msra.mxu0 %v1060
        %3633 = vmatpush.msra.mxu0 %v1059
        %3634 = vmatpush.msra.mxu0 %v1058
        %3635 = vmatpush.msra.mxu0 %v1057
        %3636 = vmatpush.msra.mxu0 %v1056
        %3637 = vmatmul.f32.gmra.mxu0 %v2416
        %v3638 = vpop.f32.mrf.mxu0
        %v3639 = vadd.f32 %v3619, %v3638
        %3640 = vdwg.mxu0
        %3641 = vmatpush.msra.mxu0 %v1087
        %3642 = vmatpush.msra.mxu0 %v1086
        %3643 = vmatpush.msra.mxu0 %v1085
        %3644 = vmatpush.msra.mxu0 %v1084
        %3645 = vmatpush.msra.mxu0 %v1083
        %3646 = vmatpush.msra.mxu0 %v1082
        %3647 = vmatpush.msra.mxu0 %v1081
        %3648 = vmatpush.msra.mxu0 %v1080
        %3649 = vmatpush.msra.mxu0 %v1079
        %3650 = vmatpush.msra.mxu0 %v1078
        %3651 = vmatpush.msra.mxu0 %v1077
        %3652 = vmatpush.msra.mxu0 %v1076
        %3653 = vmatpush.msra.mxu0 %v1075
        %3654 = vmatpush.msra.mxu0 %v1074
        %3655 = vmatpush.msra.mxu0 %v1073
        %3656 = vmatpush.msra.mxu0 %v1072
        %3657 = vmatmul.f32.gmra.mxu0 %v2417
        %v3658 = vpop.f32.mrf.mxu0
        %v3659 = vadd.f32 %v3639, %v3658
        %3660 = vdwg.mxu0
        %3661 = vmatpush.msra.mxu0 %v1103
        %3662 = vmatpush.msra.mxu0 %v1102
        %3663 = vmatpush.msra.mxu0 %v1101
        %3664 = vmatpush.msra.mxu0 %v1100
        %3665 = vmatpush.msra.mxu0 %v1099
        %3666 = vmatpush.msra.mxu0 %v1098
        %3667 = vmatpush.msra.mxu0 %v1097
        %3668 = vmatpush.msra.mxu0 %v1096
        %3669 = vmatpush.msra.mxu0 %v1095
        %3670 = vmatpush.msra.mxu0 %v1094
        %3671 = vmatpush.msra.mxu0 %v1093
        %3672 = vmatpush.msra.mxu0 %v1092
        %3673 = vmatpush.msra.mxu0 %v1091
        %3674 = vmatpush.msra.mxu0 %v1090
        %3675 = vmatpush.msra.mxu0 %v1089
        %3676 = vmatpush.msra.mxu0 %v1088
        %3677 = vmatmul.f32.gmra.mxu0 %v2418
        %v3678 = vpop.f32.mrf.mxu0
        %v3679 = vadd.f32 %v3659, %v3678
        %3680 = vdwg.mxu0
        %3681 = vmatpush.msra.mxu0 %v1119
        %3682 = vmatpush.msra.mxu0 %v1118
        %3683 = vmatpush.msra.mxu0 %v1117
        %3684 = vmatpush.msra.mxu0 %v1116
        %3685 = vmatpush.msra.mxu0 %v1115
        %3686 = vmatpush.msra.mxu0 %v1114
        %3687 = vmatpush.msra.mxu0 %v1113
        %3688 = vmatpush.msra.mxu0 %v1112
        %3689 = vmatpush.msra.mxu0 %v1111
        %3690 = vmatpush.msra.mxu0 %v1110
        %3691 = vmatpush.msra.mxu0 %v1109
        %3692 = vmatpush.msra.mxu0 %v1108
        %3693 = vmatpush.msra.mxu0 %v1107
        %3694 = vmatpush.msra.mxu0 %v1106
        %3695 = vmatpush.msra.mxu0 %v1105
        %3696 = vmatpush.msra.mxu0 %v1104
        %3697 = vmatmul.f32.gmra.mxu0 %v2419
        %v3698 = vpop.f32.mrf.mxu0
        %v3699 = vadd.f32 %v3679, %v3698
        %3700 = vdwg.mxu0
        %3701 = vmatpush.msra.mxu0 %v1135
        %3702 = vmatpush.msra.mxu0 %v1134
        %3703 = vmatpush.msra.mxu0 %v1133
        %3704 = vmatpush.msra.mxu0 %v1132
        %3705 = vmatpush.msra.mxu0 %v1131
        %3706 = vmatpush.msra.mxu0 %v1130
        %3707 = vmatpush.msra.mxu0 %v1129
        %3708 = vmatpush.msra.mxu0 %v1128
        %3709 = vmatpush.msra.mxu0 %v1127
        %3710 = vmatpush.msra.mxu0 %v1126
        %3711 = vmatpush.msra.mxu0 %v1125
        %3712 = vmatpush.msra.mxu0 %v1124
        %3713 = vmatpush.msra.mxu0 %v1123
        %3714 = vmatpush.msra.mxu0 %v1122
        %3715 = vmatpush.msra.mxu0 %v1121
        %3716 = vmatpush.msra.mxu0 %v1120
        %3717 = vmatmul.f32.gmra.mxu0 %v2420
        %v3718 = vpop.f32.mrf.mxu0
        %v3719 = vadd.f32 %v3699, %v3718
        %3720 = vdwg.mxu0
        %3721 = vmatpush.msra.mxu0 %v1151
        %3722 = vmatpush.msra.mxu0 %v1150
        %3723 = vmatpush.msra.mxu0 %v1149
        %3724 = vmatpush.msra.mxu0 %v1148
        %3725 = vmatpush.msra.mxu0 %v1147
        %3726 = vmatpush.msra.mxu0 %v1146
        %3727 = vmatpush.msra.mxu0 %v1145
        %3728 = vmatpush.msra.mxu0 %v1144
        %3729 = vmatpush.msra.mxu0 %v1143
        %3730 = vmatpush.msra.mxu0 %v1142
        %3731 = vmatpush.msra.mxu0 %v1141
        %3732 = vmatpush.msra.mxu0 %v1140
        %3733 = vmatpush.msra.mxu0 %v1139
        %3734 = vmatpush.msra.mxu0 %v1138
        %3735 = vmatpush.msra.mxu0 %v1137
        %3736 = vmatpush.msra.mxu0 %v1136
        %3737 = vmatmul.f32.gmra.mxu0 %v2421
        %v3738 = vpop.f32.mrf.mxu0
        %v3739 = vadd.f32 %v3719, %v3738
        %3740 = vdwg.mxu0
        %3741 = vmatpush.msra.mxu0 %v1167
        %3742 = vmatpush.msra.mxu0 %v1166
        %3743 = vmatpush.msra.mxu0 %v1165
        %3744 = vmatpush.msra.mxu0 %v1164
        %3745 = vmatpush.msra.mxu0 %v1163
        %3746 = vmatpush.msra.mxu0 %v1162
        %3747 = vmatpush.msra.mxu0 %v1161
        %3748 = vmatpush.msra.mxu0 %v1160
        %3749 = vmatpush.msra.mxu0 %v1159
        %3750 = vmatpush.msra.mxu0 %v1158
        %3751 = vmatpush.msra.mxu0 %v1157
        %3752 = vmatpush.msra.mxu0 %v1156
        %3753 = vmatpush.msra.mxu0 %v1155
        %3754 = vmatpush.msra.mxu0 %v1154
        %3755 = vmatpush.msra.mxu0 %v1153
        %3756 = vmatpush.msra.mxu0 %v1152
        %3757 = vmatmul.f32.gmra.mxu0 %v2422
        %v3758 = vpop.f32.mrf.mxu0
        %v3759 = vadd.f32 %v3739, %v3758
        %3760 = vdwg.mxu0
        %3761 = vmatpush.msra.mxu0 %v1183
        %3762 = vmatpush.msra.mxu0 %v1182
        %3763 = vmatpush.msra.mxu0 %v1181
        %3764 = vmatpush.msra.mxu0 %v1180
        %3765 = vmatpush.msra.mxu0 %v1179
        %3766 = vmatpush.msra.mxu0 %v1178
        %3767 = vmatpush.msra.mxu0 %v1177
        %3768 = vmatpush.msra.mxu0 %v1176
        %3769 = vmatpush.msra.mxu0 %v1175
        %3770 = vmatpush.msra.mxu0 %v1174
        %3771 = vmatpush.msra.mxu0 %v1173
        %3772 = vmatpush.msra.mxu0 %v1172
        %3773 = vmatpush.msra.mxu0 %v1171
        %3774 = vmatpush.msra.mxu0 %v1170
        %3775 = vmatpush.msra.mxu0 %v1169
        %3776 = vmatpush.msra.mxu0 %v1168
        %3777 = vmatmul.f32.gmra.mxu0 %v2425
        %v3778 = vpop.f32.mrf.mxu0
        %v3779 = vadd.f32 %v3759, %v3778
        %3780 = vdwg.mxu0
        %3781 = vmatpush.msra.mxu0 %v1199
        %3782 = vmatpush.msra.mxu0 %v1198
        %3783 = vmatpush.msra.mxu0 %v1197
        %3784 = vmatpush.msra.mxu0 %v1196
        %3785 = vmatpush.msra.mxu0 %v1195
        %3786 = vmatpush.msra.mxu0 %v1194
        %3787 = vmatpush.msra.mxu0 %v1193
        %3788 = vmatpush.msra.mxu0 %v1192
        %3789 = vmatpush.msra.mxu0 %v1191
        %3790 = vmatpush.msra.mxu0 %v1190
        %3791 = vmatpush.msra.mxu0 %v1189
        %3792 = vmatpush.msra.mxu0 %v1188
        %3793 = vmatpush.msra.mxu0 %v1187
        %3794 = vmatpush.msra.mxu0 %v1186
        %3795 = vmatpush.msra.mxu0 %v1185
        %3796 = vmatpush.msra.mxu0 %v1184
        %3797 = vmatmul.f32.gmra.mxu0 %v2426
        %v3798 = vpop.f32.mrf.mxu0
        %v3799 = vadd.f32 %v3779, %v3798
        %3800 = vdwg.mxu0
        %3801 = vmatpush.msra.mxu0 %v1215
        %3802 = vmatpush.msra.mxu0 %v1214
        %3803 = vmatpush.msra.mxu0 %v1213
        %3804 = vmatpush.msra.mxu0 %v1212
        %3805 = vmatpush.msra.mxu0 %v1211
        %3806 = vmatpush.msra.mxu0 %v1210
        %3807 = vmatpush.msra.mxu0 %v1209
        %3808 = vmatpush.msra.mxu0 %v1208
        %3809 = vmatpush.msra.mxu0 %v1207
        %3810 = vmatpush.msra.mxu0 %v1206
        %3811 = vmatpush.msra.mxu0 %v1205
        %3812 = vmatpush.msra.mxu0 %v1204
        %3813 = vmatpush.msra.mxu0 %v1203
        %3814 = vmatpush.msra.mxu0 %v1202
        %3815 = vmatpush.msra.mxu0 %v1201
        %3816 = vmatpush.msra.mxu0 %v1200
        %3817 = vmatmul.f32.gmra.mxu0 %v2427
        %v3818 = vpop.f32.mrf.mxu0
        %v3819 = vadd.f32 %v3799, %v3818
        %3820 = vdwg.mxu0
        %3821 = vmatpush.msra.mxu0 %v1231
        %3822 = vmatpush.msra.mxu0 %v1230
        %3823 = vmatpush.msra.mxu0 %v1229
        %3824 = vmatpush.msra.mxu0 %v1228
        %3825 = vmatpush.msra.mxu0 %v1227
        %3826 = vmatpush.msra.mxu0 %v1226
        %3827 = vmatpush.msra.mxu0 %v1225
        %3828 = vmatpush.msra.mxu0 %v1224
        %3829 = vmatpush.msra.mxu0 %v1223
        %3830 = vmatpush.msra.mxu0 %v1222
        %3831 = vmatpush.msra.mxu0 %v1221
        %3832 = vmatpush.msra.mxu0 %v1220
        %3833 = vmatpush.msra.mxu0 %v1219
        %3834 = vmatpush.msra.mxu0 %v1218
        %3835 = vmatpush.msra.mxu0 %v1217
        %3836 = vmatpush.msra.mxu0 %v1216
        %3837 = vmatmul.f32.gmra.mxu0 %v2428
        %v3838 = vpop.f32.mrf.mxu0
        %v3839 = vadd.f32 %v3819, %v3838
        %3840 = vdwg.mxu0
        %3841 = vmatpush.msra.mxu0 %v1247
        %3842 = vmatpush.msra.mxu0 %v1246
        %3843 = vmatpush.msra.mxu0 %v1245
        %3844 = vmatpush.msra.mxu0 %v1244
        %3845 = vmatpush.msra.mxu0 %v1243
        %3846 = vmatpush.msra.mxu0 %v1242
        %3847 = vmatpush.msra.mxu0 %v1241
        %3848 = vmatpush.msra.mxu0 %v1240
        %3849 = vmatpush.msra.mxu0 %v1239
        %3850 = vmatpush.msra.mxu0 %v1238
        %3851 = vmatpush.msra.mxu0 %v1237
        %3852 = vmatpush.msra.mxu0 %v1236
        %3853 = vmatpush.msra.mxu0 %v1235
        %3854 = vmatpush.msra.mxu0 %v1234
        %3855 = vmatpush.msra.mxu0 %v1233
        %3856 = vmatpush.msra.mxu0 %v1232
        %3857 = vmatmul.f32.gmra.mxu0 %v2429
        %v3858 = vpop.f32.mrf.mxu0
        %v3859 = vadd.f32 %v3839, %v3858
        %3860 = vdwg.mxu0
        %3861 = vmatpush.msra.mxu0 %v1263
        %3862 = vmatpush.msra.mxu0 %v1262
        %3863 = vmatpush.msra.mxu0 %v1261
        %3864 = vmatpush.msra.mxu0 %v1260
        %3865 = vmatpush.msra.mxu0 %v1259
        %3866 = vmatpush.msra.mxu0 %v1258
        %3867 = vmatpush.msra.mxu0 %v1257
        %3868 = vmatpush.msra.mxu0 %v1256
        %3869 = vmatpush.msra.mxu0 %v1255
        %3870 = vmatpush.msra.mxu0 %v1254
        %3871 = vmatpush.msra.mxu0 %v1253
        %3872 = vmatpush.msra.mxu0 %v1252
        %3873 = vmatpush.msra.mxu0 %v1251
        %3874 = vmatpush.msra.mxu0 %v1250
        %3875 = vmatpush.msra.mxu0 %v1249
        %3876 = vmatpush.msra.mxu0 %v1248
        %3877 = vmatmul.f32.gmra.mxu0 %v2430
        %v3878 = vpop.f32.mrf.mxu0
        %v3879 = vadd.f32 %v3859, %v3878
        %3880 = vdwg.mxu0
        %3881 = vmatpush.msra.mxu0 %v1279
        %3882 = vmatpush.msra.mxu0 %v1278
        %3883 = vmatpush.msra.mxu0 %v1277
        %3884 = vmatpush.msra.mxu0 %v1276
        %3885 = vmatpush.msra.mxu0 %v1275
        %3886 = vmatpush.msra.mxu0 %v1274
        %3887 = vmatpush.msra.mxu0 %v1273
        %3888 = vmatpush.msra.mxu0 %v1272
        %3889 = vmatpush.msra.mxu0 %v1271
        %3890 = vmatpush.msra.mxu0 %v1270
        %3891 = vmatpush.msra.mxu0 %v1269
        %3892 = vmatpush.msra.mxu0 %v1268
        %3893 = vmatpush.msra.mxu0 %v1267
        %3894 = vmatpush.msra.mxu0 %v1266
        %3895 = vmatpush.msra.mxu0 %v1265
        %3896 = vmatpush.msra.mxu0 %v1264
        %3897 = vmatmul.f32.gmra.mxu0 %v2431
        %v3898 = vpop.f32.mrf.mxu0
        %v3899 = vadd.f32 %v3879, %v3898
        %3900 = vdwg.mxu0
        %3901 = vmatpush.msra.mxu0 %v1295
        %3902 = vmatpush.msra.mxu0 %v1294
        %3903 = vmatpush.msra.mxu0 %v1293
        %3904 = vmatpush.msra.mxu0 %v1292
        %3905 = vmatpush.msra.mxu0 %v1291
        %3906 = vmatpush.msra.mxu0 %v1290
        %3907 = vmatpush.msra.mxu0 %v1289
        %3908 = vmatpush.msra.mxu0 %v1288
        %3909 = vmatpush.msra.mxu0 %v1287
        %3910 = vmatpush.msra.mxu0 %v1286
        %3911 = vmatpush.msra.mxu0 %v1285
        %3912 = vmatpush.msra.mxu0 %v1284
        %3913 = vmatpush.msra.mxu0 %v1283
        %3914 = vmatpush.msra.mxu0 %v1282
        %3915 = vmatpush.msra.mxu0 %v1281
        %3916 = vmatpush.msra.mxu0 %v1280
        %3917 = vmatmul.f32.gmra.mxu0 %v2432
        %v3918 = vpop.f32.mrf.mxu0
        %v3919 = vadd.f32 %v3899, %v3918
        %3920 = vdwg.mxu0
        %3921 = vmatpush.msra.mxu0 %v1311
        %3922 = vmatpush.msra.mxu0 %v1310
        %3923 = vmatpush.msra.mxu0 %v1309
        %3924 = vmatpush.msra.mxu0 %v1308
        %3925 = vmatpush.msra.mxu0 %v1307
        %3926 = vmatpush.msra.mxu0 %v1306
        %3927 = vmatpush.msra.mxu0 %v1305
        %3928 = vmatpush.msra.mxu0 %v1304
        %3929 = vmatpush.msra.mxu0 %v1303
        %3930 = vmatpush.msra.mxu0 %v1302
        %3931 = vmatpush.msra.mxu0 %v1301
        %3932 = vmatpush.msra.mxu0 %v1300
        %3933 = vmatpush.msra.mxu0 %v1299
        %3934 = vmatpush.msra.mxu0 %v1298
        %3935 = vmatpush.msra.mxu0 %v1297
        %3936 = vmatpush.msra.mxu0 %v1296
        %3937 = vmatmul.f32.gmra.mxu0 %v2435
        %v3938 = vpop.f32.mrf.mxu0
        %v3939 = vadd.f32 %v3919, %v3938
        %3940 = vdwg.mxu0
        %3941 = vmatpush.msra.mxu0 %v1327
        %3942 = vmatpush.msra.mxu0 %v1326
        %3943 = vmatpush.msra.mxu0 %v1325
        %3944 = vmatpush.msra.mxu0 %v1324
        %3945 = vmatpush.msra.mxu0 %v1323
        %3946 = vmatpush.msra.mxu0 %v1322
        %3947 = vmatpush.msra.mxu0 %v1321
        %3948 = vmatpush.msra.mxu0 %v1320
        %3949 = vmatpush.msra.mxu0 %v1319
        %3950 = vmatpush.msra.mxu0 %v1318
        %3951 = vmatpush.msra.mxu0 %v1317
        %3952 = vmatpush.msra.mxu0 %v1316
        %3953 = vmatpush.msra.mxu0 %v1315
        %3954 = vmatpush.msra.mxu0 %v1314
        %3955 = vmatpush.msra.mxu0 %v1313
        %3956 = vmatpush.msra.mxu0 %v1312
        %3957 = vmatmul.f32.gmra.mxu0 %v2436
        %v3958 = vpop.f32.mrf.mxu0
        %v3959 = vadd.f32 %v3939, %v3958
        %3960 = vdwg.mxu0
        %3961 = vmatpush.msra.mxu0 %v1343
        %3962 = vmatpush.msra.mxu0 %v1342
        %3963 = vmatpush.msra.mxu0 %v1341
        %3964 = vmatpush.msra.mxu0 %v1340
        %3965 = vmatpush.msra.mxu0 %v1339
        %3966 = vmatpush.msra.mxu0 %v1338
        %3967 = vmatpush.msra.mxu0 %v1337
        %3968 = vmatpush.msra.mxu0 %v1336
        %3969 = vmatpush.msra.mxu0 %v1335
        %3970 = vmatpush.msra.mxu0 %v1334
        %3971 = vmatpush.msra.mxu0 %v1333
        %3972 = vmatpush.msra.mxu0 %v1332
        %3973 = vmatpush.msra.mxu0 %v1331
        %3974 = vmatpush.msra.mxu0 %v1330
        %3975 = vmatpush.msra.mxu0 %v1329
        %3976 = vmatpush.msra.mxu0 %v1328
        %3977 = vmatmul.f32.gmra.mxu0 %v2437
        %v3978 = vpop.f32.mrf.mxu0
        %v3979 = vadd.f32 %v3959, %v3978
        %3980 = vdwg.mxu0
        %3981 = vmatpush.msra.mxu0 %v1359
        %3982 = vmatpush.msra.mxu0 %v1358
        %3983 = vmatpush.msra.mxu0 %v1357
        %3984 = vmatpush.msra.mxu0 %v1356
        %3985 = vmatpush.msra.mxu0 %v1355
        %3986 = vmatpush.msra.mxu0 %v1354
        %3987 = vmatpush.msra.mxu0 %v1353
        %3988 = vmatpush.msra.mxu0 %v1352
        %3989 = vmatpush.msra.mxu0 %v1351
        %3990 = vmatpush.msra.mxu0 %v1350
        %3991 = vmatpush.msra.mxu0 %v1349
        %3992 = vmatpush.msra.mxu0 %v1348
        %3993 = vmatpush.msra.mxu0 %v1347
        %3994 = vmatpush.msra.mxu0 %v1346
        %3995 = vmatpush.msra.mxu0 %v1345
        %3996 = vmatpush.msra.mxu0 %v1344
        %3997 = vmatmul.f32.gmra.mxu0 %v2438
        %v3998 = vpop.f32.mrf.mxu0
        %v3999 = vadd.f32 %v3979, %v3998
        %4000 = vdwg.mxu0
        %4001 = vmatpush.msra.mxu0 %v1375
        %4002 = vmatpush.msra.mxu0 %v1374
        %4003 = vmatpush.msra.mxu0 %v1373
        %4004 = vmatpush.msra.mxu0 %v1372
        %4005 = vmatpush.msra.mxu0 %v1371
        %4006 = vmatpush.msra.mxu0 %v1370
        %4007 = vmatpush.msra.mxu0 %v1369
        %4008 = vmatpush.msra.mxu0 %v1368
        %4009 = vmatpush.msra.mxu0 %v1367
        %4010 = vmatpush.msra.mxu0 %v1366
        %4011 = vmatpush.msra.mxu0 %v1365
        %4012 = vmatpush.msra.mxu0 %v1364
        %4013 = vmatpush.msra.mxu0 %v1363
        %4014 = vmatpush.msra.mxu0 %v1362
        %4015 = vmatpush.msra.mxu0 %v1361
        %4016 = vmatpush.msra.mxu0 %v1360
        %4017 = vmatmul.f32.gmra.mxu0 %v2439
        %v4018 = vpop.f32.mrf.mxu0
        %v4019 = vadd.f32 %v3999, %v4018
        %4020 = vdwg.mxu0
        %4021 = vmatpush.msra.mxu0 %v1391
        %4022 = vmatpush.msra.mxu0 %v1390
        %4023 = vmatpush.msra.mxu0 %v1389
        %4024 = vmatpush.msra.mxu0 %v1388
        %4025 = vmatpush.msra.mxu0 %v1387
        %4026 = vmatpush.msra.mxu0 %v1386
        %4027 = vmatpush.msra.mxu0 %v1385
        %4028 = vmatpush.msra.mxu0 %v1384
        %4029 = vmatpush.msra.mxu0 %v1383
        %4030 = vmatpush.msra.mxu0 %v1382
        %4031 = vmatpush.msra.mxu0 %v1381
        %4032 = vmatpush.msra.mxu0 %v1380
        %4033 = vmatpush.msra.mxu0 %v1379
        %4034 = vmatpush.msra.mxu0 %v1378
        %4035 = vmatpush.msra.mxu0 %v1377
        %4036 = vmatpush.msra.mxu0 %v1376
        %4037 = vmatmul.f32.gmra.mxu0 %v2440
        %v4038 = vpop.f32.mrf.mxu0
        %v4039 = vadd.f32 %v4019, %v4038
        %4040 = vdwg.mxu0
        %4041 = vmatpush.msra.mxu0 %v1407
        %4042 = vmatpush.msra.mxu0 %v1406
        %4043 = vmatpush.msra.mxu0 %v1405
        %4044 = vmatpush.msra.mxu0 %v1404
        %4045 = vmatpush.msra.mxu0 %v1403
        %4046 = vmatpush.msra.mxu0 %v1402
        %4047 = vmatpush.msra.mxu0 %v1401
        %4048 = vmatpush.msra.mxu0 %v1400
        %4049 = vmatpush.msra.mxu0 %v1399
        %4050 = vmatpush.msra.mxu0 %v1398
        %4051 = vmatpush.msra.mxu0 %v1397
        %4052 = vmatpush.msra.mxu0 %v1396
        %4053 = vmatpush.msra.mxu0 %v1395
        %4054 = vmatpush.msra.mxu0 %v1394
        %4055 = vmatpush.msra.mxu0 %v1393
        %4056 = vmatpush.msra.mxu0 %v1392
        %4057 = vmatmul.f32.gmra.mxu0 %v2441
        %v4058 = vpop.f32.mrf.mxu0
        %v4059 = vadd.f32 %v4039, %v4058
        %4060 = vdwg.mxu0
        %4061 = vmatpush.msra.mxu0 %v1423
        %4062 = vmatpush.msra.mxu0 %v1422
        %4063 = vmatpush.msra.mxu0 %v1421
        %4064 = vmatpush.msra.mxu0 %v1420
        %4065 = vmatpush.msra.mxu0 %v1419
        %4066 = vmatpush.msra.mxu0 %v1418
        %4067 = vmatpush.msra.mxu0 %v1417
        %4068 = vmatpush.msra.mxu0 %v1416
        %4069 = vmatpush.msra.mxu0 %v1415
        %4070 = vmatpush.msra.mxu0 %v1414
        %4071 = vmatpush.msra.mxu0 %v1413
        %4072 = vmatpush.msra.mxu0 %v1412
        %4073 = vmatpush.msra.mxu0 %v1411
        %4074 = vmatpush.msra.mxu0 %v1410
        %4075 = vmatpush.msra.mxu0 %v1409
        %4076 = vmatpush.msra.mxu0 %v1408
        %4077 = vmatmul.f32.gmra.mxu0 %v2442
        %v4078 = vpop.f32.mrf.mxu0
        %v4079 = vadd.f32 %v4059, %v4078
        %4080 = vdwg.mxu0
        %4081 = vmatpush.msra.mxu0 %v1439
        %4082 = vmatpush.msra.mxu0 %v1438
        %4083 = vmatpush.msra.mxu0 %v1437
        %4084 = vmatpush.msra.mxu0 %v1436
        %4085 = vmatpush.msra.mxu0 %v1435
        %4086 = vmatpush.msra.mxu0 %v1434
        %4087 = vmatpush.msra.mxu0 %v1433
        %4088 = vmatpush.msra.mxu0 %v1432
        %4089 = vmatpush.msra.mxu0 %v1431
        %4090 = vmatpush.msra.mxu0 %v1430
        %4091 = vmatpush.msra.mxu0 %v1429
        %4092 = vmatpush.msra.mxu0 %v1428
        %4093 = vmatpush.msra.mxu0 %v1427
        %4094 = vmatpush.msra.mxu0 %v1426
        %4095 = vmatpush.msra.mxu0 %v1425
        %4096 = vmatpush.msra.mxu0 %v1424
        %4097 = vmatmul.f32.gmra.mxu0 %v2445
        %v4098 = vpop.f32.mrf.mxu0
        %v4099 = vadd.f32 %v4079, %v4098
        %4100 = vdwg.mxu0
        %4101 = vmatpush.msra.mxu0 %v1455
        %4102 = vmatpush.msra.mxu0 %v1454
        %4103 = vmatpush.msra.mxu0 %v1453
        %4104 = vmatpush.msra.mxu0 %v1452
        %4105 = vmatpush.msra.mxu0 %v1451
        %4106 = vmatpush.msra.mxu0 %v1450
        %4107 = vmatpush.msra.mxu0 %v1449
        %4108 = vmatpush.msra.mxu0 %v1448
        %4109 = vmatpush.msra.mxu0 %v1447
        %4110 = vmatpush.msra.mxu0 %v1446
        %4111 = vmatpush.msra.mxu0 %v1445
        %4112 = vmatpush.msra.mxu0 %v1444
        %4113 = vmatpush.msra.mxu0 %v1443
        %4114 = vmatpush.msra.mxu0 %v1442
        %4115 = vmatpush.msra.mxu0 %v1441
        %4116 = vmatpush.msra.mxu0 %v1440
        %4117 = vmatmul.f32.gmra.mxu0 %v2446
        %v4118 = vpop.f32.mrf.mxu0
        %v4119 = vadd.f32 %v4099, %v4118
        %4120 = vdwg.mxu0
        %4121 = vmatpush.msra.mxu0 %v1471
        %4122 = vmatpush.msra.mxu0 %v1470
        %4123 = vmatpush.msra.mxu0 %v1469
        %4124 = vmatpush.msra.mxu0 %v1468
        %4125 = vmatpush.msra.mxu0 %v1467
        %4126 = vmatpush.msra.mxu0 %v1466
        %4127 = vmatpush.msra.mxu0 %v1465
        %4128 = vmatpush.msra.mxu0 %v1464
        %4129 = vmatpush.msra.mxu0 %v1463
        %4130 = vmatpush.msra.mxu0 %v1462
        %4131 = vmatpush.msra.mxu0 %v1461
        %4132 = vmatpush.msra.mxu0 %v1460
        %4133 = vmatpush.msra.mxu0 %v1459
        %4134 = vmatpush.msra.mxu0 %v1458
        %4135 = vmatpush.msra.mxu0 %v1457
        %4136 = vmatpush.msra.mxu0 %v1456
        %4137 = vmatmul.f32.gmra.mxu0 %v2447
        %v4138 = vpop.f32.mrf.mxu0
        %v4139 = vadd.f32 %v4119, %v4138
        %4140 = vdwg.mxu0
        %4141 = vmatpush.msra.mxu0 %v1487
        %4142 = vmatpush.msra.mxu0 %v1486
        %4143 = vmatpush.msra.mxu0 %v1485
        %4144 = vmatpush.msra.mxu0 %v1484
        %4145 = vmatpush.msra.mxu0 %v1483
        %4146 = vmatpush.msra.mxu0 %v1482
        %4147 = vmatpush.msra.mxu0 %v1481
        %4148 = vmatpush.msra.mxu0 %v1480
        %4149 = vmatpush.msra.mxu0 %v1479
        %4150 = vmatpush.msra.mxu0 %v1478
        %4151 = vmatpush.msra.mxu0 %v1477
        %4152 = vmatpush.msra.mxu0 %v1476
        %4153 = vmatpush.msra.mxu0 %v1475
        %4154 = vmatpush.msra.mxu0 %v1474
        %4155 = vmatpush.msra.mxu0 %v1473
        %4156 = vmatpush.msra.mxu0 %v1472
        %4157 = vmatmul.f32.gmra.mxu0 %v2448
        %v4158 = vpop.f32.mrf.mxu0
        %v4159 = vadd.f32 %v4139, %v4158
        %4160 = vdwg.mxu0
        %4161 = vmatpush.msra.mxu0 %v1503
        %4162 = vmatpush.msra.mxu0 %v1502
        %4163 = vmatpush.msra.mxu0 %v1501
        %4164 = vmatpush.msra.mxu0 %v1500
        %4165 = vmatpush.msra.mxu0 %v1499
        %4166 = vmatpush.msra.mxu0 %v1498
        %4167 = vmatpush.msra.mxu0 %v1497
        %4168 = vmatpush.msra.mxu0 %v1496
        %4169 = vmatpush.msra.mxu0 %v1495
        %4170 = vmatpush.msra.mxu0 %v1494
        %4171 = vmatpush.msra.mxu0 %v1493
        %4172 = vmatpush.msra.mxu0 %v1492
        %4173 = vmatpush.msra.mxu0 %v1491
        %4174 = vmatpush.msra.mxu0 %v1490
        %4175 = vmatpush.msra.mxu0 %v1489
        %4176 = vmatpush.msra.mxu0 %v1488
        %4177 = vmatmul.f32.gmra.mxu0 %v2449
        %v4178 = vpop.f32.mrf.mxu0
        %v4179 = vadd.f32 %v4159, %v4178
        %4180 = vdwg.mxu0
        %4181 = vmatpush.msra.mxu0 %v1519
        %4182 = vmatpush.msra.mxu0 %v1518
        %4183 = vmatpush.msra.mxu0 %v1517
        %4184 = vmatpush.msra.mxu0 %v1516
        %4185 = vmatpush.msra.mxu0 %v1515
        %4186 = vmatpush.msra.mxu0 %v1514
        %4187 = vmatpush.msra.mxu0 %v1513
        %4188 = vmatpush.msra.mxu0 %v1512
        %4189 = vmatpush.msra.mxu0 %v1511
        %4190 = vmatpush.msra.mxu0 %v1510
        %4191 = vmatpush.msra.mxu0 %v1509
        %4192 = vmatpush.msra.mxu0 %v1508
        %4193 = vmatpush.msra.mxu0 %v1507
        %4194 = vmatpush.msra.mxu0 %v1506
        %4195 = vmatpush.msra.mxu0 %v1505
        %4196 = vmatpush.msra.mxu0 %v1504
        %4197 = vmatmul.f32.gmra.mxu0 %v2450
        %v4198 = vpop.f32.mrf.mxu0
        %v4199 = vadd.f32 %v4179, %v4198
        %4200 = vdwg.mxu0
        %4201 = vmatpush.msra.mxu0 %v1535
        %4202 = vmatpush.msra.mxu0 %v1534
        %4203 = vmatpush.msra.mxu0 %v1533
        %4204 = vmatpush.msra.mxu0 %v1532
        %4205 = vmatpush.msra.mxu0 %v1531
        %4206 = vmatpush.msra.mxu0 %v1530
        %4207 = vmatpush.msra.mxu0 %v1529
        %4208 = vmatpush.msra.mxu0 %v1528
        %4209 = vmatpush.msra.mxu0 %v1527
        %4210 = vmatpush.msra.mxu0 %v1526
        %4211 = vmatpush.msra.mxu0 %v1525
        %4212 = vmatpush.msra.mxu0 %v1524
        %4213 = vmatpush.msra.mxu0 %v1523
        %4214 = vmatpush.msra.mxu0 %v1522
        %4215 = vmatpush.msra.mxu0 %v1521
        %4216 = vmatpush.msra.mxu0 %v1520
        %4217 = vmatmul.f32.gmra.mxu0 %v2451
        %v4218 = vpop.f32.mrf.mxu0
        %v4219 = vadd.f32 %v4199, %v4218
        %4220 = vdwg.mxu0
        %4221 = vmatpush.msra.mxu0 %v1551
        %4222 = vmatpush.msra.mxu0 %v1550
        %4223 = vmatpush.msra.mxu0 %v1549
        %4224 = vmatpush.msra.mxu0 %v1548
        %4225 = vmatpush.msra.mxu0 %v1547
        %4226 = vmatpush.msra.mxu0 %v1546
        %4227 = vmatpush.msra.mxu0 %v1545
        %4228 = vmatpush.msra.mxu0 %v1544
        %4229 = vmatpush.msra.mxu0 %v1543
        %4230 = vmatpush.msra.mxu0 %v1542
        %4231 = vmatpush.msra.mxu0 %v1541
        %4232 = vmatpush.msra.mxu0 %v1540
        %4233 = vmatpush.msra.mxu0 %v1539
        %4234 = vmatpush.msra.mxu0 %v1538
        %4235 = vmatpush.msra.mxu0 %v1537
        %4236 = vmatpush.msra.mxu0 %v1536
        %4237 = vmatmul.f32.gmra.mxu0 %v2452
        %v4238 = vpop.f32.mrf.mxu0
        %v4239 = vadd.f32 %v4219, %v4238
        %4240 = vdwg.mxu0
        %4241 = vmatpush.msra.mxu0 %v1567
        %4242 = vmatpush.msra.mxu0 %v1566
        %4243 = vmatpush.msra.mxu0 %v1565
        %4244 = vmatpush.msra.mxu0 %v1564
        %4245 = vmatpush.msra.mxu0 %v1563
        %4246 = vmatpush.msra.mxu0 %v1562
        %4247 = vmatpush.msra.mxu0 %v1561
        %4248 = vmatpush.msra.mxu0 %v1560
        %4249 = vmatpush.msra.mxu0 %v1559
        %4250 = vmatpush.msra.mxu0 %v1558
        %4251 = vmatpush.msra.mxu0 %v1557
        %4252 = vmatpush.msra.mxu0 %v1556
        %4253 = vmatpush.msra.mxu0 %v1555
        %4254 = vmatpush.msra.mxu0 %v1554
        %4255 = vmatpush.msra.mxu0 %v1553
        %4256 = vmatpush.msra.mxu0 %v1552
        %4257 = vmatmul.f32.gmra.mxu0 %v2455
        %v4258 = vpop.f32.mrf.mxu0
        %v4259 = vadd.f32 %v4239, %v4258
        %4260 = vdwg.mxu0
        %4261 = vmatpush.msra.mxu0 %v1583
        %4262 = vmatpush.msra.mxu0 %v1582
        %4263 = vmatpush.msra.mxu0 %v1581
        %4264 = vmatpush.msra.mxu0 %v1580
        %4265 = vmatpush.msra.mxu0 %v1579
        %4266 = vmatpush.msra.mxu0 %v1578
        %4267 = vmatpush.msra.mxu0 %v1577
        %4268 = vmatpush.msra.mxu0 %v1576
        %4269 = vmatpush.msra.mxu0 %v1575
        %4270 = vmatpush.msra.mxu0 %v1574
        %4271 = vmatpush.msra.mxu0 %v1573
        %4272 = vmatpush.msra.mxu0 %v1572
        %4273 = vmatpush.msra.mxu0 %v1571
        %4274 = vmatpush.msra.mxu0 %v1570
        %4275 = vmatpush.msra.mxu0 %v1569
        %4276 = vmatpush.msra.mxu0 %v1568
        %4277 = vmatmul.f32.gmra.mxu0 %v2456
        %v4278 = vpop.f32.mrf.mxu0
        %v4279 = vadd.f32 %v4259, %v4278
        %4280 = vdwg.mxu0
        %4281 = vmatpush.msra.mxu0 %v1599
        %4282 = vmatpush.msra.mxu0 %v1598
        %4283 = vmatpush.msra.mxu0 %v1597
        %4284 = vmatpush.msra.mxu0 %v1596
        %4285 = vmatpush.msra.mxu0 %v1595
        %4286 = vmatpush.msra.mxu0 %v1594
        %4287 = vmatpush.msra.mxu0 %v1593
        %4288 = vmatpush.msra.mxu0 %v1592
        %4289 = vmatpush.msra.mxu0 %v1591
        %4290 = vmatpush.msra.mxu0 %v1590
        %4291 = vmatpush.msra.mxu0 %v1589
        %4292 = vmatpush.msra.mxu0 %v1588
        %4293 = vmatpush.msra.mxu0 %v1587
        %4294 = vmatpush.msra.mxu0 %v1586
        %4295 = vmatpush.msra.mxu0 %v1585
        %4296 = vmatpush.msra.mxu0 %v1584
        %4297 = vmatmul.f32.gmra.mxu0 %v2457
        %v4298 = vpop.f32.mrf.mxu0
        %v4299 = vadd.f32 %v4279, %v4298
        %4300 = vdwg.mxu0
        %4301 = vmatpush.msra.mxu0 %v1615
        %4302 = vmatpush.msra.mxu0 %v1614
        %4303 = vmatpush.msra.mxu0 %v1613
        %4304 = vmatpush.msra.mxu0 %v1612
        %4305 = vmatpush.msra.mxu0 %v1611
        %4306 = vmatpush.msra.mxu0 %v1610
        %4307 = vmatpush.msra.mxu0 %v1609
        %4308 = vmatpush.msra.mxu0 %v1608
        %4309 = vmatpush.msra.mxu0 %v1607
        %4310 = vmatpush.msra.mxu0 %v1606
        %4311 = vmatpush.msra.mxu0 %v1605
        %4312 = vmatpush.msra.mxu0 %v1604
        %4313 = vmatpush.msra.mxu0 %v1603
        %4314 = vmatpush.msra.mxu0 %v1602
        %4315 = vmatpush.msra.mxu0 %v1601
        %4316 = vmatpush.msra.mxu0 %v1600
        %4317 = vmatmul.f32.gmra.mxu0 %v2458
        %v4318 = vpop.f32.mrf.mxu0
        %v4319 = vadd.f32 %v4299, %v4318
        %4320 = vdwg.mxu0
        %4321 = vmatpush.msra.mxu0 %v1631
        %4322 = vmatpush.msra.mxu0 %v1630
        %4323 = vmatpush.msra.mxu0 %v1629
        %4324 = vmatpush.msra.mxu0 %v1628
        %4325 = vmatpush.msra.mxu0 %v1627
        %4326 = vmatpush.msra.mxu0 %v1626
        %4327 = vmatpush.msra.mxu0 %v1625
        %4328 = vmatpush.msra.mxu0 %v1624
        %4329 = vmatpush.msra.mxu0 %v1623
        %4330 = vmatpush.msra.mxu0 %v1622
        %4331 = vmatpush.msra.mxu0 %v1621
        %4332 = vmatpush.msra.mxu0 %v1620
        %4333 = vmatpush.msra.mxu0 %v1619
        %4334 = vmatpush.msra.mxu0 %v1618
        %4335 = vmatpush.msra.mxu0 %v1617
        %4336 = vmatpush.msra.mxu0 %v1616
        %4337 = vmatmul.f32.gmra.mxu0 %v2459
        %v4338 = vpop.f32.mrf.mxu0
        %v4339 = vadd.f32 %v4319, %v4338
        %4340 = vdwg.mxu0
        %4341 = vmatpush.msra.mxu0 %v1647
        %4342 = vmatpush.msra.mxu0 %v1646
        %4343 = vmatpush.msra.mxu0 %v1645
        %4344 = vmatpush.msra.mxu0 %v1644
        %4345 = vmatpush.msra.mxu0 %v1643
        %4346 = vmatpush.msra.mxu0 %v1642
        %4347 = vmatpush.msra.mxu0 %v1641
        %4348 = vmatpush.msra.mxu0 %v1640
        %4349 = vmatpush.msra.mxu0 %v1639
        %4350 = vmatpush.msra.mxu0 %v1638
        %4351 = vmatpush.msra.mxu0 %v1637
        %4352 = vmatpush.msra.mxu0 %v1636
        %4353 = vmatpush.msra.mxu0 %v1635
        %4354 = vmatpush.msra.mxu0 %v1634
        %4355 = vmatpush.msra.mxu0 %v1633
        %4356 = vmatpush.msra.mxu0 %v1632
        %4357 = vmatmul.f32.gmra.mxu0 %v2460
        %v4358 = vpop.f32.mrf.mxu0
        %v4359 = vadd.f32 %v4339, %v4358
        %4360 = vdwg.mxu0
        %4361 = vmatpush.msra.mxu0 %v1663
        %4362 = vmatpush.msra.mxu0 %v1662
        %4363 = vmatpush.msra.mxu0 %v1661
        %4364 = vmatpush.msra.mxu0 %v1660
        %4365 = vmatpush.msra.mxu0 %v1659
        %4366 = vmatpush.msra.mxu0 %v1658
        %4367 = vmatpush.msra.mxu0 %v1657
        %4368 = vmatpush.msra.mxu0 %v1656
        %4369 = vmatpush.msra.mxu0 %v1655
        %4370 = vmatpush.msra.mxu0 %v1654
        %4371 = vmatpush.msra.mxu0 %v1653
        %4372 = vmatpush.msra.mxu0 %v1652
        %4373 = vmatpush.msra.mxu0 %v1651
        %4374 = vmatpush.msra.mxu0 %v1650
        %4375 = vmatpush.msra.mxu0 %v1649
        %4376 = vmatpush.msra.mxu0 %v1648
        %4377 = vmatmul.f32.gmra.mxu0 %v2461
        %v4378 = vpop.f32.mrf.mxu0
        %v4379 = vadd.f32 %v4359, %v4378
        %4380 = vdwg.mxu0
        %4381 = vmatpush.msra.mxu0 %v1679
        %4382 = vmatpush.msra.mxu0 %v1678
        %4383 = vmatpush.msra.mxu0 %v1677
        %4384 = vmatpush.msra.mxu0 %v1676
        %4385 = vmatpush.msra.mxu0 %v1675
        %4386 = vmatpush.msra.mxu0 %v1674
        %4387 = vmatpush.msra.mxu0 %v1673
        %4388 = vmatpush.msra.mxu0 %v1672
        %4389 = vmatpush.msra.mxu0 %v1671
        %4390 = vmatpush.msra.mxu0 %v1670
        %4391 = vmatpush.msra.mxu0 %v1669
        %4392 = vmatpush.msra.mxu0 %v1668
        %4393 = vmatpush.msra.mxu0 %v1667
        %4394 = vmatpush.msra.mxu0 %v1666
        %4395 = vmatpush.msra.mxu0 %v1665
        %4396 = vmatpush.msra.mxu0 %v1664
        %4397 = vmatmul.f32.gmra.mxu0 %v2462
        %v4398 = vpop.f32.mrf.mxu0
        %v4399 = vadd.f32 %v4379, %v4398
        %4400 = vdwg.mxu0
        %4401 = vmatpush.msra.mxu0 %v1695
        %4402 = vmatpush.msra.mxu0 %v1694
        %4403 = vmatpush.msra.mxu0 %v1693
        %4404 = vmatpush.msra.mxu0 %v1692
        %4405 = vmatpush.msra.mxu0 %v1691
        %4406 = vmatpush.msra.mxu0 %v1690
        %4407 = vmatpush.msra.mxu0 %v1689
        %4408 = vmatpush.msra.mxu0 %v1688
        %4409 = vmatpush.msra.mxu0 %v1687
        %4410 = vmatpush.msra.mxu0 %v1686
        %4411 = vmatpush.msra.mxu0 %v1685
        %4412 = vmatpush.msra.mxu0 %v1684
        %4413 = vmatpush.msra.mxu0 %v1683
        %4414 = vmatpush.msra.mxu0 %v1682
        %4415 = vmatpush.msra.mxu0 %v1681
        %4416 = vmatpush.msra.mxu0 %v1680
        %4417 = vmatmul.f32.gmra.mxu0 %v2465
        %v4418 = vpop.f32.mrf.mxu0
        %v4419 = vadd.f32 %v4399, %v4418
        %4420 = vdwg.mxu0
        %4421 = vmatpush.msra.mxu0 %v1711
        %4422 = vmatpush.msra.mxu0 %v1710
        %4423 = vmatpush.msra.mxu0 %v1709
        %4424 = vmatpush.msra.mxu0 %v1708
        %4425 = vmatpush.msra.mxu0 %v1707
        %4426 = vmatpush.msra.mxu0 %v1706
        %4427 = vmatpush.msra.mxu0 %v1705
        %4428 = vmatpush.msra.mxu0 %v1704
        %4429 = vmatpush.msra.mxu0 %v1703
        %4430 = vmatpush.msra.mxu0 %v1702
        %4431 = vmatpush.msra.mxu0 %v1701
        %4432 = vmatpush.msra.mxu0 %v1700
        %4433 = vmatpush.msra.mxu0 %v1699
        %4434 = vmatpush.msra.mxu0 %v1698
        %4435 = vmatpush.msra.mxu0 %v1697
        %4436 = vmatpush.msra.mxu0 %v1696
        %4437 = vmatmul.f32.gmra.mxu0 %v2466
        %v4438 = vpop.f32.mrf.mxu0
        %v4439 = vadd.f32 %v4419, %v4438
        %4440 = vdwg.mxu0
        %4441 = vmatpush.msra.mxu0 %v1727
        %4442 = vmatpush.msra.mxu0 %v1726
        %4443 = vmatpush.msra.mxu0 %v1725
        %4444 = vmatpush.msra.mxu0 %v1724
        %4445 = vmatpush.msra.mxu0 %v1723
        %4446 = vmatpush.msra.mxu0 %v1722
        %4447 = vmatpush.msra.mxu0 %v1721
        %4448 = vmatpush.msra.mxu0 %v1720
        %4449 = vmatpush.msra.mxu0 %v1719
        %4450 = vmatpush.msra.mxu0 %v1718
        %4451 = vmatpush.msra.mxu0 %v1717
        %4452 = vmatpush.msra.mxu0 %v1716
        %4453 = vmatpush.msra.mxu0 %v1715
        %4454 = vmatpush.msra.mxu0 %v1714
        %4455 = vmatpush.msra.mxu0 %v1713
        %4456 = vmatpush.msra.mxu0 %v1712
        %4457 = vmatmul.f32.gmra.mxu0 %v2467
        %v4458 = vpop.f32.mrf.mxu0
        %v4459 = vadd.f32 %v4439, %v4458
        %4460 = vdwg.mxu0
        %4461 = vmatpush.msra.mxu0 %v1743
        %4462 = vmatpush.msra.mxu0 %v1742
        %4463 = vmatpush.msra.mxu0 %v1741
        %4464 = vmatpush.msra.mxu0 %v1740
        %4465 = vmatpush.msra.mxu0 %v1739
        %4466 = vmatpush.msra.mxu0 %v1738
        %4467 = vmatpush.msra.mxu0 %v1737
        %4468 = vmatpush.msra.mxu0 %v1736
        %4469 = vmatpush.msra.mxu0 %v1735
        %4470 = vmatpush.msra.mxu0 %v1734
        %4471 = vmatpush.msra.mxu0 %v1733
        %4472 = vmatpush.msra.mxu0 %v1732
        %4473 = vmatpush.msra.mxu0 %v1731
        %4474 = vmatpush.msra.mxu0 %v1730
        %4475 = vmatpush.msra.mxu0 %v1729
        %4476 = vmatpush.msra.mxu0 %v1728
        %4477 = vmatmul.f32.gmra.mxu0 %v2468
        %v4478 = vpop.f32.mrf.mxu0
        %v4479 = vadd.f32 %v4459, %v4478
        %4480 = vdwg.mxu0
        %4481 = vmatpush.msra.mxu0 %v1759
        %4482 = vmatpush.msra.mxu0 %v1758
        %4483 = vmatpush.msra.mxu0 %v1757
        %4484 = vmatpush.msra.mxu0 %v1756
        %4485 = vmatpush.msra.mxu0 %v1755
        %4486 = vmatpush.msra.mxu0 %v1754
        %4487 = vmatpush.msra.mxu0 %v1753
        %4488 = vmatpush.msra.mxu0 %v1752
        %4489 = vmatpush.msra.mxu0 %v1751
        %4490 = vmatpush.msra.mxu0 %v1750
        %4491 = vmatpush.msra.mxu0 %v1749
        %4492 = vmatpush.msra.mxu0 %v1748
        %4493 = vmatpush.msra.mxu0 %v1747
        %4494 = vmatpush.msra.mxu0 %v1746
        %4495 = vmatpush.msra.mxu0 %v1745
        %4496 = vmatpush.msra.mxu0 %v1744
        %4497 = vmatmul.f32.gmra.mxu0 %v2469
        %v4498 = vpop.f32.mrf.mxu0
        %v4499 = vadd.f32 %v4479, %v4498
        %4500 = vdwg.mxu0
        %4501 = vmatpush.msra.mxu0 %v1775
        %4502 = vmatpush.msra.mxu0 %v1774
        %4503 = vmatpush.msra.mxu0 %v1773
        %4504 = vmatpush.msra.mxu0 %v1772
        %4505 = vmatpush.msra.mxu0 %v1771
        %4506 = vmatpush.msra.mxu0 %v1770
        %4507 = vmatpush.msra.mxu0 %v1769
        %4508 = vmatpush.msra.mxu0 %v1768
        %4509 = vmatpush.msra.mxu0 %v1767
        %4510 = vmatpush.msra.mxu0 %v1766
        %4511 = vmatpush.msra.mxu0 %v1765
        %4512 = vmatpush.msra.mxu0 %v1764
        %4513 = vmatpush.msra.mxu0 %v1763
        %4514 = vmatpush.msra.mxu0 %v1762
        %4515 = vmatpush.msra.mxu0 %v1761
        %4516 = vmatpush.msra.mxu0 %v1760
        %4517 = vmatmul.f32.gmra.mxu0 %v2470
        %v4518 = vpop.f32.mrf.mxu0
        %v4519 = vadd.f32 %v4499, %v4518
        %4520 = vdwg.mxu0
        %4521 = vmatpush.msra.mxu0 %v1791
        %4522 = vmatpush.msra.mxu0 %v1790
        %4523 = vmatpush.msra.mxu0 %v1789
        %4524 = vmatpush.msra.mxu0 %v1788
        %4525 = vmatpush.msra.mxu0 %v1787
        %4526 = vmatpush.msra.mxu0 %v1786
        %4527 = vmatpush.msra.mxu0 %v1785
        %4528 = vmatpush.msra.mxu0 %v1784
        %4529 = vmatpush.msra.mxu0 %v1783
        %4530 = vmatpush.msra.mxu0 %v1782
        %4531 = vmatpush.msra.mxu0 %v1781
        %4532 = vmatpush.msra.mxu0 %v1780
        %4533 = vmatpush.msra.mxu0 %v1779
        %4534 = vmatpush.msra.mxu0 %v1778
        %4535 = vmatpush.msra.mxu0 %v1777
        %4536 = vmatpush.msra.mxu0 %v1776
        %4537 = vmatmul.f32.gmra.mxu0 %v2471
        %v4538 = vpop.f32.mrf.mxu0
        %v4539 = vadd.f32 %v4519, %v4538
        %4540 = vdwg.mxu0
        %4541 = vmatpush.msra.mxu0 %v1807
        %4542 = vmatpush.msra.mxu0 %v1806
        %4543 = vmatpush.msra.mxu0 %v1805
        %4544 = vmatpush.msra.mxu0 %v1804
        %4545 = vmatpush.msra.mxu0 %v1803
        %4546 = vmatpush.msra.mxu0 %v1802
        %4547 = vmatpush.msra.mxu0 %v1801
        %4548 = vmatpush.msra.mxu0 %v1800
        %4549 = vmatpush.msra.mxu0 %v1799
        %4550 = vmatpush.msra.mxu0 %v1798
        %4551 = vmatpush.msra.mxu0 %v1797
        %4552 = vmatpush.msra.mxu0 %v1796
        %4553 = vmatpush.msra.mxu0 %v1795
        %4554 = vmatpush.msra.mxu0 %v1794
        %4555 = vmatpush.msra.mxu0 %v1793
        %4556 = vmatpush.msra.mxu0 %v1792
        %4557 = vmatmul.f32.gmra.mxu0 %v2472
        %v4558 = vpop.f32.mrf.mxu0
        %v4559 = vadd.f32 %v4539, %v4558
        %4560 = vdwg.mxu0
        %4561 = vmatpush.msra.mxu0 %v1823
        %4562 = vmatpush.msra.mxu0 %v1822
        %4563 = vmatpush.msra.mxu0 %v1821
        %4564 = vmatpush.msra.mxu0 %v1820
        %4565 = vmatpush.msra.mxu0 %v1819
        %4566 = vmatpush.msra.mxu0 %v1818
        %4567 = vmatpush.msra.mxu0 %v1817
        %4568 = vmatpush.msra.mxu0 %v1816
        %4569 = vmatpush.msra.mxu0 %v1815
        %4570 = vmatpush.msra.mxu0 %v1814
        %4571 = vmatpush.msra.mxu0 %v1813
        %4572 = vmatpush.msra.mxu0 %v1812
        %4573 = vmatpush.msra.mxu0 %v1811
        %4574 = vmatpush.msra.mxu0 %v1810
        %4575 = vmatpush.msra.mxu0 %v1809
        %4576 = vmatpush.msra.mxu0 %v1808
        %4577 = vmatmul.f32.gmra.mxu0 %v2475
        %v4578 = vpop.f32.mrf.mxu0
        %v4579 = vadd.f32 %v4559, %v4578
        %4580 = vdwg.mxu0
        %4581 = vmatpush.msra.mxu0 %v1839
        %4582 = vmatpush.msra.mxu0 %v1838
        %4583 = vmatpush.msra.mxu0 %v1837
        %4584 = vmatpush.msra.mxu0 %v1836
        %4585 = vmatpush.msra.mxu0 %v1835
        %4586 = vmatpush.msra.mxu0 %v1834
        %4587 = vmatpush.msra.mxu0 %v1833
        %4588 = vmatpush.msra.mxu0 %v1832
        %4589 = vmatpush.msra.mxu0 %v1831
        %4590 = vmatpush.msra.mxu0 %v1830
        %4591 = vmatpush.msra.mxu0 %v1829
        %4592 = vmatpush.msra.mxu0 %v1828
        %4593 = vmatpush.msra.mxu0 %v1827
        %4594 = vmatpush.msra.mxu0 %v1826
        %4595 = vmatpush.msra.mxu0 %v1825
        %4596 = vmatpush.msra.mxu0 %v1824
        %4597 = vmatmul.f32.gmra.mxu0 %v2476
        %v4598 = vpop.f32.mrf.mxu0
        %v4599 = vadd.f32 %v4579, %v4598
        %4600 = vdwg.mxu0
        %4601 = vmatpush.msra.mxu0 %v1855
        %4602 = vmatpush.msra.mxu0 %v1854
        %4603 = vmatpush.msra.mxu0 %v1853
        %4604 = vmatpush.msra.mxu0 %v1852
        %4605 = vmatpush.msra.mxu0 %v1851
        %4606 = vmatpush.msra.mxu0 %v1850
        %4607 = vmatpush.msra.mxu0 %v1849
        %4608 = vmatpush.msra.mxu0 %v1848
        %4609 = vmatpush.msra.mxu0 %v1847
        %4610 = vmatpush.msra.mxu0 %v1846
        %4611 = vmatpush.msra.mxu0 %v1845
        %4612 = vmatpush.msra.mxu0 %v1844
        %4613 = vmatpush.msra.mxu0 %v1843
        %4614 = vmatpush.msra.mxu0 %v1842
        %4615 = vmatpush.msra.mxu0 %v1841
        %4616 = vmatpush.msra.mxu0 %v1840
        %4617 = vmatmul.f32.gmra.mxu0 %v2477
        %v4618 = vpop.f32.mrf.mxu0
        %v4619 = vadd.f32 %v4599, %v4618
        %4620 = vdwg.mxu0
        %4621 = vmatpush.msra.mxu0 %v1871
        %4622 = vmatpush.msra.mxu0 %v1870
        %4623 = vmatpush.msra.mxu0 %v1869
        %4624 = vmatpush.msra.mxu0 %v1868
        %4625 = vmatpush.msra.mxu0 %v1867
        %4626 = vmatpush.msra.mxu0 %v1866
        %4627 = vmatpush.msra.mxu0 %v1865
        %4628 = vmatpush.msra.mxu0 %v1864
        %4629 = vmatpush.msra.mxu0 %v1863
        %4630 = vmatpush.msra.mxu0 %v1862
        %4631 = vmatpush.msra.mxu0 %v1861
        %4632 = vmatpush.msra.mxu0 %v1860
        %4633 = vmatpush.msra.mxu0 %v1859
        %4634 = vmatpush.msra.mxu0 %v1858
        %4635 = vmatpush.msra.mxu0 %v1857
        %4636 = vmatpush.msra.mxu0 %v1856
        %4637 = vmatmul.f32.gmra.mxu0 %v2478
        %v4638 = vpop.f32.mrf.mxu0
        %v4639 = vadd.f32 %v4619, %v4638
        %4640 = vdwg.mxu0
        %4641 = vmatpush.msra.mxu0 %v1887
        %4642 = vmatpush.msra.mxu0 %v1886
        %4643 = vmatpush.msra.mxu0 %v1885
        %4644 = vmatpush.msra.mxu0 %v1884
        %4645 = vmatpush.msra.mxu0 %v1883
        %4646 = vmatpush.msra.mxu0 %v1882
        %4647 = vmatpush.msra.mxu0 %v1881
        %4648 = vmatpush.msra.mxu0 %v1880
        %4649 = vmatpush.msra.mxu0 %v1879
        %4650 = vmatpush.msra.mxu0 %v1878
        %4651 = vmatpush.msra.mxu0 %v1877
        %4652 = vmatpush.msra.mxu0 %v1876
        %4653 = vmatpush.msra.mxu0 %v1875
        %4654 = vmatpush.msra.mxu0 %v1874
        %4655 = vmatpush.msra.mxu0 %v1873
        %4656 = vmatpush.msra.mxu0 %v1872
        %4657 = vmatmul.f32.gmra.mxu0 %v2479
        %v4658 = vpop.f32.mrf.mxu0
        %v4659 = vadd.f32 %v4639, %v4658
        %4660 = vdwg.mxu0
        %4661 = vmatpush.msra.mxu0 %v1903
        %4662 = vmatpush.msra.mxu0 %v1902
        %4663 = vmatpush.msra.mxu0 %v1901
        %4664 = vmatpush.msra.mxu0 %v1900
        %4665 = vmatpush.msra.mxu0 %v1899
        %4666 = vmatpush.msra.mxu0 %v1898
        %4667 = vmatpush.msra.mxu0 %v1897
        %4668 = vmatpush.msra.mxu0 %v1896
        %4669 = vmatpush.msra.mxu0 %v1895
        %4670 = vmatpush.msra.mxu0 %v1894
        %4671 = vmatpush.msra.mxu0 %v1893
        %4672 = vmatpush.msra.mxu0 %v1892
        %4673 = vmatpush.msra.mxu0 %v1891
        %4674 = vmatpush.msra.mxu0 %v1890
        %4675 = vmatpush.msra.mxu0 %v1889
        %4676 = vmatpush.msra.mxu0 %v1888
        %4677 = vmatmul.f32.gmra.mxu0 %v2480
        %v4678 = vpop.f32.mrf.mxu0
        %v4679 = vadd.f32 %v4659, %v4678
        %4680 = vdwg.mxu0
        %4681 = vmatpush.msra.mxu0 %v1919
        %4682 = vmatpush.msra.mxu0 %v1918
        %4683 = vmatpush.msra.mxu0 %v1917
        %4684 = vmatpush.msra.mxu0 %v1916
        %4685 = vmatpush.msra.mxu0 %v1915
        %4686 = vmatpush.msra.mxu0 %v1914
        %4687 = vmatpush.msra.mxu0 %v1913
        %4688 = vmatpush.msra.mxu0 %v1912
        %4689 = vmatpush.msra.mxu0 %v1911
        %4690 = vmatpush.msra.mxu0 %v1910
        %4691 = vmatpush.msra.mxu0 %v1909
        %4692 = vmatpush.msra.mxu0 %v1908
        %4693 = vmatpush.msra.mxu0 %v1907
        %4694 = vmatpush.msra.mxu0 %v1906
        %4695 = vmatpush.msra.mxu0 %v1905
        %4696 = vmatpush.msra.mxu0 %v1904
        %4697 = vmatmul.f32.gmra.mxu0 %v2481
        %v4698 = vpop.f32.mrf.mxu0
        %v4699 = vadd.f32 %v4679, %v4698
        %4700 = vdwg.mxu0
        %4701 = vmatpush.msra.mxu0 %v1935
        %4702 = vmatpush.msra.mxu0 %v1934
        %4703 = vmatpush.msra.mxu0 %v1933
        %4704 = vmatpush.msra.mxu0 %v1932
        %4705 = vmatpush.msra.mxu0 %v1931
        %4706 = vmatpush.msra.mxu0 %v1930
        %4707 = vmatpush.msra.mxu0 %v1929
        %4708 = vmatpush.msra.mxu0 %v1928
        %4709 = vmatpush.msra.mxu0 %v1927
        %4710 = vmatpush.msra.mxu0 %v1926
        %4711 = vmatpush.msra.mxu0 %v1925
        %4712 = vmatpush.msra.mxu0 %v1924
        %4713 = vmatpush.msra.mxu0 %v1923
        %4714 = vmatpush.msra.mxu0 %v1922
        %4715 = vmatpush.msra.mxu0 %v1921
        %4716 = vmatpush.msra.mxu0 %v1920
        %4717 = vmatmul.f32.gmra.mxu0 %v2482
        %v4718 = vpop.f32.mrf.mxu0
        %v4719 = vadd.f32 %v4699, %v4718
        %4720 = vdwg.mxu0
        %4721 = vmatpush.msra.mxu0 %v1951
        %4722 = vmatpush.msra.mxu0 %v1950
        %4723 = vmatpush.msra.mxu0 %v1949
        %4724 = vmatpush.msra.mxu0 %v1948
        %4725 = vmatpush.msra.mxu0 %v1947
        %4726 = vmatpush.msra.mxu0 %v1946
        %4727 = vmatpush.msra.mxu0 %v1945
        %4728 = vmatpush.msra.mxu0 %v1944
        %4729 = vmatpush.msra.mxu0 %v1943
        %4730 = vmatpush.msra.mxu0 %v1942
        %4731 = vmatpush.msra.mxu0 %v1941
        %4732 = vmatpush.msra.mxu0 %v1940
        %4733 = vmatpush.msra.mxu0 %v1939
        %4734 = vmatpush.msra.mxu0 %v1938
        %4735 = vmatpush.msra.mxu0 %v1937
        %4736 = vmatpush.msra.mxu0 %v1936
        %4737 = vmatmul.f32.gmra.mxu0 %v2485
        %v4738 = vpop.f32.mrf.mxu0
        %v4739 = vadd.f32 %v4719, %v4738
        %4740 = vdwg.mxu0
        %4741 = vmatpush.msra.mxu0 %v1967
        %4742 = vmatpush.msra.mxu0 %v1966
        %4743 = vmatpush.msra.mxu0 %v1965
        %4744 = vmatpush.msra.mxu0 %v1964
        %4745 = vmatpush.msra.mxu0 %v1963
        %4746 = vmatpush.msra.mxu0 %v1962
        %4747 = vmatpush.msra.mxu0 %v1961
        %4748 = vmatpush.msra.mxu0 %v1960
        %4749 = vmatpush.msra.mxu0 %v1959
        %4750 = vmatpush.msra.mxu0 %v1958
        %4751 = vmatpush.msra.mxu0 %v1957
        %4752 = vmatpush.msra.mxu0 %v1956
        %4753 = vmatpush.msra.mxu0 %v1955
        %4754 = vmatpush.msra.mxu0 %v1954
        %4755 = vmatpush.msra.mxu0 %v1953
        %4756 = vmatpush.msra.mxu0 %v1952
        %4757 = vmatmul.f32.gmra.mxu0 %v2486
        %v4758 = vpop.f32.mrf.mxu0
        %v4759 = vadd.f32 %v4739, %v4758
        %4760 = vdwg.mxu0
        %4761 = vmatpush.msra.mxu0 %v1983
        %4762 = vmatpush.msra.mxu0 %v1982
        %4763 = vmatpush.msra.mxu0 %v1981
        %4764 = vmatpush.msra.mxu0 %v1980
        %4765 = vmatpush.msra.mxu0 %v1979
        %4766 = vmatpush.msra.mxu0 %v1978
        %4767 = vmatpush.msra.mxu0 %v1977
        %4768 = vmatpush.msra.mxu0 %v1976
        %4769 = vmatpush.msra.mxu0 %v1975
        %4770 = vmatpush.msra.mxu0 %v1974
        %4771 = vmatpush.msra.mxu0 %v1973
        %4772 = vmatpush.msra.mxu0 %v1972
        %4773 = vmatpush.msra.mxu0 %v1971
        %4774 = vmatpush.msra.mxu0 %v1970
        %4775 = vmatpush.msra.mxu0 %v1969
        %4776 = vmatpush.msra.mxu0 %v1968
        %4777 = vmatmul.f32.gmra.mxu0 %v2487
        %v4778 = vpop.f32.mrf.mxu0
        %v4779 = vadd.f32 %v4759, %v4778
        %4780 = vdwg.mxu0
        %4781 = vmatpush.msra.mxu0 %v1999
        %4782 = vmatpush.msra.mxu0 %v1998
        %4783 = vmatpush.msra.mxu0 %v1997
        %4784 = vmatpush.msra.mxu0 %v1996
        %4785 = vmatpush.msra.mxu0 %v1995
        %4786 = vmatpush.msra.mxu0 %v1994
        %4787 = vmatpush.msra.mxu0 %v1993
        %4788 = vmatpush.msra.mxu0 %v1992
        %4789 = vmatpush.msra.mxu0 %v1991
        %4790 = vmatpush.msra.mxu0 %v1990
        %4791 = vmatpush.msra.mxu0 %v1989
        %4792 = vmatpush.msra.mxu0 %v1988
        %4793 = vmatpush.msra.mxu0 %v1987
        %4794 = vmatpush.msra.mxu0 %v1986
        %4795 = vmatpush.msra.mxu0 %v1985
        %4796 = vmatpush.msra.mxu0 %v1984
        %4797 = vmatmul.f32.gmra.mxu0 %v2488
        %v4798 = vpop.f32.mrf.mxu0
        %v4799 = vadd.f32 %v4779, %v4798
        %4800 = vdwg.mxu0
        %4801 = vmatpush.msra.mxu0 %v2015
        %4802 = vmatpush.msra.mxu0 %v2014
        %4803 = vmatpush.msra.mxu0 %v2013
        %4804 = vmatpush.msra.mxu0 %v2012
        %4805 = vmatpush.msra.mxu0 %v2011
        %4806 = vmatpush.msra.mxu0 %v2010
        %4807 = vmatpush.msra.mxu0 %v2009
        %4808 = vmatpush.msra.mxu0 %v2008
        %4809 = vmatpush.msra.mxu0 %v2007
        %4810 = vmatpush.msra.mxu0 %v2006
        %4811 = vmatpush.msra.mxu0 %v2005
        %4812 = vmatpush.msra.mxu0 %v2004
        %4813 = vmatpush.msra.mxu0 %v2003
        %4814 = vmatpush.msra.mxu0 %v2002
        %4815 = vmatpush.msra.mxu0 %v2001
        %4816 = vmatpush.msra.mxu0 %v2000
        %4817 = vmatmul.f32.gmra.mxu0 %v2489
        %v4818 = vpop.f32.mrf.mxu0
        %v4819 = vadd.f32 %v4799, %v4818
        %4820 = vdwg.mxu0
        %4821 = vmatpush.msra.mxu0 %v2031
        %4822 = vmatpush.msra.mxu0 %v2030
        %4823 = vmatpush.msra.mxu0 %v2029
        %4824 = vmatpush.msra.mxu0 %v2028
        %4825 = vmatpush.msra.mxu0 %v2027
        %4826 = vmatpush.msra.mxu0 %v2026
        %4827 = vmatpush.msra.mxu0 %v2025
        %4828 = vmatpush.msra.mxu0 %v2024
        %4829 = vmatpush.msra.mxu0 %v2023
        %4830 = vmatpush.msra.mxu0 %v2022
        %4831 = vmatpush.msra.mxu0 %v2021
        %4832 = vmatpush.msra.mxu0 %v2020
        %4833 = vmatpush.msra.mxu0 %v2019
        %4834 = vmatpush.msra.mxu0 %v2018
        %4835 = vmatpush.msra.mxu0 %v2017
        %4836 = vmatpush.msra.mxu0 %v2016
        %4837 = vmatmul.f32.gmra.mxu0 %v2490
        %v4838 = vpop.f32.mrf.mxu0
        %v4839 = vadd.f32 %v4819, %v4838
        %4840 = vdwg.mxu0
        %4841 = vmatpush.msra.mxu0 %v2047
        %4842 = vmatpush.msra.mxu0 %v2046
        %4843 = vmatpush.msra.mxu0 %v2045
        %4844 = vmatpush.msra.mxu0 %v2044
        %4845 = vmatpush.msra.mxu0 %v2043
        %4846 = vmatpush.msra.mxu0 %v2042
        %4847 = vmatpush.msra.mxu0 %v2041
        %4848 = vmatpush.msra.mxu0 %v2040
        %4849 = vmatpush.msra.mxu0 %v2039
        %4850 = vmatpush.msra.mxu0 %v2038
        %4851 = vmatpush.msra.mxu0 %v2037
        %4852 = vmatpush.msra.mxu0 %v2036
        %4853 = vmatpush.msra.mxu0 %v2035
        %4854 = vmatpush.msra.mxu0 %v2034
        %4855 = vmatpush.msra.mxu0 %v2033
        %4856 = vmatpush.msra.mxu0 %v2032
        %4857 = vmatmul.f32.gmra.mxu0 %v2491
        %v4858 = vpop.f32.mrf.mxu0
        %v4859 = vadd.f32 %v4839, %v4858
        %4860 = vdwg.mxu0
        %4861 = vmatpush.msra.mxu0 %v2063
        %4862 = vmatpush.msra.mxu0 %v2062
        %4863 = vmatpush.msra.mxu0 %v2061
        %4864 = vmatpush.msra.mxu0 %v2060
        %4865 = vmatpush.msra.mxu0 %v2059
        %4866 = vmatpush.msra.mxu0 %v2058
        %4867 = vmatpush.msra.mxu0 %v2057
        %4868 = vmatpush.msra.mxu0 %v2056
        %4869 = vmatpush.msra.mxu0 %v2055
        %4870 = vmatpush.msra.mxu0 %v2054
        %4871 = vmatpush.msra.mxu0 %v2053
        %4872 = vmatpush.msra.mxu0 %v2052
        %4873 = vmatpush.msra.mxu0 %v2051
        %4874 = vmatpush.msra.mxu0 %v2050
        %4875 = vmatpush.msra.mxu0 %v2049
        %4876 = vmatpush.msra.mxu0 %v2048
        %4877 = vmatmul.f32.gmra.mxu0 %v2492
        %v4878 = vpop.f32.mrf.mxu0
        %v4879 = vadd.f32 %v4859, %v4878
        %4880 = vdwg.mxu0
        %4881 = vmatpush.msra.mxu0 %v2079
        %4882 = vmatpush.msra.mxu0 %v2078
        %4883 = vmatpush.msra.mxu0 %v2077
        %4884 = vmatpush.msra.mxu0 %v2076
        %4885 = vmatpush.msra.mxu0 %v2075
        %4886 = vmatpush.msra.mxu0 %v2074
        %4887 = vmatpush.msra.mxu0 %v2073
        %4888 = vmatpush.msra.mxu0 %v2072
        %4889 = vmatpush.msra.mxu0 %v2071
        %4890 = vmatpush.msra.mxu0 %v2070
        %4891 = vmatpush.msra.mxu0 %v2069
        %4892 = vmatpush.msra.mxu0 %v2068
        %4893 = vmatpush.msra.mxu0 %v2067
        %4894 = vmatpush.msra.mxu0 %v2066
        %4895 = vmatpush.msra.mxu0 %v2065
        %4896 = vmatpush.msra.mxu0 %v2064
        %4897 = vmatmul.f32.gmra.mxu0 %v2495
        %v4898 = vpop.f32.mrf.mxu0
        %v4899 = vadd.f32 %v4879, %v4898
        %4900 = vdwg.mxu0
        %4901 = vmatpush.msra.mxu0 %v2095
        %4902 = vmatpush.msra.mxu0 %v2094
        %4903 = vmatpush.msra.mxu0 %v2093
        %4904 = vmatpush.msra.mxu0 %v2092
        %4905 = vmatpush.msra.mxu0 %v2091
        %4906 = vmatpush.msra.mxu0 %v2090
        %4907 = vmatpush.msra.mxu0 %v2089
        %4908 = vmatpush.msra.mxu0 %v2088
        %4909 = vmatpush.msra.mxu0 %v2087
        %4910 = vmatpush.msra.mxu0 %v2086
        %4911 = vmatpush.msra.mxu0 %v2085
        %4912 = vmatpush.msra.mxu0 %v2084
        %4913 = vmatpush.msra.mxu0 %v2083
        %4914 = vmatpush.msra.mxu0 %v2082
        %4915 = vmatpush.msra.mxu0 %v2081
        %4916 = vmatpush.msra.mxu0 %v2080
        %4917 = vmatmul.f32.gmra.mxu0 %v2496
        %v4918 = vpop.f32.mrf.mxu0
        %v4919 = vadd.f32 %v4899, %v4918
        %4920 = vdwg.mxu0
        %4921 = vmatpush.msra.mxu0 %v2111
        %4922 = vmatpush.msra.mxu0 %v2110
        %4923 = vmatpush.msra.mxu0 %v2109
        %4924 = vmatpush.msra.mxu0 %v2108
        %4925 = vmatpush.msra.mxu0 %v2107
        %4926 = vmatpush.msra.mxu0 %v2106
        %4927 = vmatpush.msra.mxu0 %v2105
        %4928 = vmatpush.msra.mxu0 %v2104
        %4929 = vmatpush.msra.mxu0 %v2103
        %4930 = vmatpush.msra.mxu0 %v2102
        %4931 = vmatpush.msra.mxu0 %v2101
        %4932 = vmatpush.msra.mxu0 %v2100
        %4933 = vmatpush.msra.mxu0 %v2099
        %4934 = vmatpush.msra.mxu0 %v2098
        %4935 = vmatpush.msra.mxu0 %v2097
        %4936 = vmatpush.msra.mxu0 %v2096
        %4937 = vmatmul.f32.gmra.mxu0 %v2497
        %v4938 = vpop.f32.mrf.mxu0
        %v4939 = vadd.f32 %v4919, %v4938
        %4940 = vdwg.mxu0
        %4941 = vmatpush.msra.mxu0 %v2127
        %4942 = vmatpush.msra.mxu0 %v2126
        %4943 = vmatpush.msra.mxu0 %v2125
        %4944 = vmatpush.msra.mxu0 %v2124
        %4945 = vmatpush.msra.mxu0 %v2123
        %4946 = vmatpush.msra.mxu0 %v2122
        %4947 = vmatpush.msra.mxu0 %v2121
        %4948 = vmatpush.msra.mxu0 %v2120
        %4949 = vmatpush.msra.mxu0 %v2119
        %4950 = vmatpush.msra.mxu0 %v2118
        %4951 = vmatpush.msra.mxu0 %v2117
        %4952 = vmatpush.msra.mxu0 %v2116
        %4953 = vmatpush.msra.mxu0 %v2115
        %4954 = vmatpush.msra.mxu0 %v2114
        %4955 = vmatpush.msra.mxu0 %v2113
        %4956 = vmatpush.msra.mxu0 %v2112
        %4957 = vmatmul.f32.gmra.mxu0 %v2498
        %v4958 = vpop.f32.mrf.mxu0
        %v4959 = vadd.f32 %v4939, %v4958
        %4960 = vdwg.mxu0
        %4961 = vmatpush.msra.mxu0 %v2143
        %4962 = vmatpush.msra.mxu0 %v2142
        %4963 = vmatpush.msra.mxu0 %v2141
        %4964 = vmatpush.msra.mxu0 %v2140
        %4965 = vmatpush.msra.mxu0 %v2139
        %4966 = vmatpush.msra.mxu0 %v2138
        %4967 = vmatpush.msra.mxu0 %v2137
        %4968 = vmatpush.msra.mxu0 %v2136
        %4969 = vmatpush.msra.mxu0 %v2135
        %4970 = vmatpush.msra.mxu0 %v2134
        %4971 = vmatpush.msra.mxu0 %v2133
        %4972 = vmatpush.msra.mxu0 %v2132
        %4973 = vmatpush.msra.mxu0 %v2131
        %4974 = vmatpush.msra.mxu0 %v2130
        %4975 = vmatpush.msra.mxu0 %v2129
        %4976 = vmatpush.msra.mxu0 %v2128
        %4977 = vmatmul.f32.gmra.mxu0 %v2499
        %v4978 = vpop.f32.mrf.mxu0
        %v4979 = vadd.f32 %v4959, %v4978
        %4980 = vdwg.mxu0
        %4981 = vmatpush.msra.mxu0 %v2159
        %4982 = vmatpush.msra.mxu0 %v2158
        %4983 = vmatpush.msra.mxu0 %v2157
        %4984 = vmatpush.msra.mxu0 %v2156
        %4985 = vmatpush.msra.mxu0 %v2155
        %4986 = vmatpush.msra.mxu0 %v2154
        %4987 = vmatpush.msra.mxu0 %v2153
        %4988 = vmatpush.msra.mxu0 %v2152
        %4989 = vmatpush.msra.mxu0 %v2151
        %4990 = vmatpush.msra.mxu0 %v2150
        %4991 = vmatpush.msra.mxu0 %v2149
        %4992 = vmatpush.msra.mxu0 %v2148
        %4993 = vmatpush.msra.mxu0 %v2147
        %4994 = vmatpush.msra.mxu0 %v2146
        %4995 = vmatpush.msra.mxu0 %v2145
        %4996 = vmatpush.msra.mxu0 %v2144
        %4997 = vmatmul.f32.gmra.mxu0 %v2500
        %v4998 = vpop.f32.mrf.mxu0
        %v4999 = vadd.f32 %v4979, %v4998
        %5000 = vdwg.mxu0
        %5001 = vmatpush.msra.mxu0 %v2175
        %5002 = vmatpush.msra.mxu0 %v2174
        %5003 = vmatpush.msra.mxu0 %v2173
        %5004 = vmatpush.msra.mxu0 %v2172
        %5005 = vmatpush.msra.mxu0 %v2171
        %5006 = vmatpush.msra.mxu0 %v2170
        %5007 = vmatpush.msra.mxu0 %v2169
        %5008 = vmatpush.msra.mxu0 %v2168
        %5009 = vmatpush.msra.mxu0 %v2167
        %5010 = vmatpush.msra.mxu0 %v2166
        %5011 = vmatpush.msra.mxu0 %v2165
        %5012 = vmatpush.msra.mxu0 %v2164
        %5013 = vmatpush.msra.mxu0 %v2163
        %5014 = vmatpush.msra.mxu0 %v2162
        %5015 = vmatpush.msra.mxu0 %v2161
        %5016 = vmatpush.msra.mxu0 %v2160
        %5017 = vmatmul.f32.gmra.mxu0 %v2501
        %v5018 = vpop.f32.mrf.mxu0
        %v5019 = vadd.f32 %v4999, %v5018
        %5020 = vdwg.mxu0
        %5021 = vmatpush.msra.mxu0 %v2191
        %5022 = vmatpush.msra.mxu0 %v2190
        %5023 = vmatpush.msra.mxu0 %v2189
        %5024 = vmatpush.msra.mxu0 %v2188
        %5025 = vmatpush.msra.mxu0 %v2187
        %5026 = vmatpush.msra.mxu0 %v2186
        %5027 = vmatpush.msra.mxu0 %v2185
        %5028 = vmatpush.msra.mxu0 %v2184
        %5029 = vmatpush.msra.mxu0 %v2183
        %5030 = vmatpush.msra.mxu0 %v2182
        %5031 = vmatpush.msra.mxu0 %v2181
        %5032 = vmatpush.msra.mxu0 %v2180
        %5033 = vmatpush.msra.mxu0 %v2179
        %5034 = vmatpush.msra.mxu0 %v2178
        %5035 = vmatpush.msra.mxu0 %v2177
        %5036 = vmatpush.msra.mxu0 %v2176
        %5037 = vmatmul.f32.gmra.mxu0 %v2502
        %v5038 = vpop.f32.mrf.mxu0
        %v5039 = vadd.f32 %v5019, %v5038
        %5040 = vdwg.mxu0
        %5041 = vmatpush.msra.mxu0 %v2207
        %5042 = vmatpush.msra.mxu0 %v2206
        %5043 = vmatpush.msra.mxu0 %v2205
        %5044 = vmatpush.msra.mxu0 %v2204
        %5045 = vmatpush.msra.mxu0 %v2203
        %5046 = vmatpush.msra.mxu0 %v2202
        %5047 = vmatpush.msra.mxu0 %v2201
        %5048 = vmatpush.msra.mxu0 %v2200
        %5049 = vmatpush.msra.mxu0 %v2199
        %5050 = vmatpush.msra.mxu0 %v2198
        %5051 = vmatpush.msra.mxu0 %v2197
        %5052 = vmatpush.msra.mxu0 %v2196
        %5053 = vmatpush.msra.mxu0 %v2195
        %5054 = vmatpush.msra.mxu0 %v2194
        %5055 = vmatpush.msra.mxu0 %v2193
        %5056 = vmatpush.msra.mxu0 %v2192
        %5057 = vmatmul.f32.gmra.mxu0 %v2505
        %v5058 = vpop.f32.mrf.mxu0
        %v5059 = vadd.f32 %v5039, %v5058
        %5060 = vdwg.mxu0
        %5061 = vmatpush.msra.mxu0 %v2223
        %5062 = vmatpush.msra.mxu0 %v2222
        %5063 = vmatpush.msra.mxu0 %v2221
        %5064 = vmatpush.msra.mxu0 %v2220
        %5065 = vmatpush.msra.mxu0 %v2219
        %5066 = vmatpush.msra.mxu0 %v2218
        %5067 = vmatpush.msra.mxu0 %v2217
        %5068 = vmatpush.msra.mxu0 %v2216
        %5069 = vmatpush.msra.mxu0 %v2215
        %5070 = vmatpush.msra.mxu0 %v2214
        %5071 = vmatpush.msra.mxu0 %v2213
        %5072 = vmatpush.msra.mxu0 %v2212
        %5073 = vmatpush.msra.mxu0 %v2211
        %5074 = vmatpush.msra.mxu0 %v2210
        %5075 = vmatpush.msra.mxu0 %v2209
        %5076 = vmatpush.msra.mxu0 %v2208
        %5077 = vmatmul.f32.gmra.mxu0 %v2506
        %v5078 = vpop.f32.mrf.mxu0
        %v5079 = vadd.f32 %v5059, %v5078
        %5080 = vdwg.mxu0
        %5081 = vmatpush.msra.mxu0 %v2239
        %5082 = vmatpush.msra.mxu0 %v2238
        %5083 = vmatpush.msra.mxu0 %v2237
        %5084 = vmatpush.msra.mxu0 %v2236
        %5085 = vmatpush.msra.mxu0 %v2235
        %5086 = vmatpush.msra.mxu0 %v2234
        %5087 = vmatpush.msra.mxu0 %v2233
        %5088 = vmatpush.msra.mxu0 %v2232
        %5089 = vmatpush.msra.mxu0 %v2231
        %5090 = vmatpush.msra.mxu0 %v2230
        %5091 = vmatpush.msra.mxu0 %v2229
        %5092 = vmatpush.msra.mxu0 %v2228
        %5093 = vmatpush.msra.mxu0 %v2227
        %5094 = vmatpush.msra.mxu0 %v2226
        %5095 = vmatpush.msra.mxu0 %v2225
        %5096 = vmatpush.msra.mxu0 %v2224
        %5097 = vmatmul.f32.gmra.mxu0 %v2507
        %v5098 = vpop.f32.mrf.mxu0
        %v5099 = vadd.f32 %v5079, %v5098
        %5100 = vdwg.mxu0
        %5101 = vmatpush.msra.mxu0 %v2255
        %5102 = vmatpush.msra.mxu0 %v2254
        %5103 = vmatpush.msra.mxu0 %v2253
        %5104 = vmatpush.msra.mxu0 %v2252
        %5105 = vmatpush.msra.mxu0 %v2251
        %5106 = vmatpush.msra.mxu0 %v2250
        %5107 = vmatpush.msra.mxu0 %v2249
        %5108 = vmatpush.msra.mxu0 %v2248
        %5109 = vmatpush.msra.mxu0 %v2247
        %5110 = vmatpush.msra.mxu0 %v2246
        %5111 = vmatpush.msra.mxu0 %v2245
        %5112 = vmatpush.msra.mxu0 %v2244
        %5113 = vmatpush.msra.mxu0 %v2243
        %5114 = vmatpush.msra.mxu0 %v2242
        %5115 = vmatpush.msra.mxu0 %v2241
        %5116 = vmatpush.msra.mxu0 %v2240
        %5117 = vmatmul.f32.gmra.mxu0 %v2508
        %v5118 = vpop.f32.mrf.mxu0
        %v5119 = vadd.f32 %v5099, %v5118
        %5120 = vdwg.mxu0
        %5121 = vmatpush.msra.mxu0 %v2271
        %5122 = vmatpush.msra.mxu0 %v2270
        %5123 = vmatpush.msra.mxu0 %v2269
        %5124 = vmatpush.msra.mxu0 %v2268
        %5125 = vmatpush.msra.mxu0 %v2267
        %5126 = vmatpush.msra.mxu0 %v2266
        %5127 = vmatpush.msra.mxu0 %v2265
        %5128 = vmatpush.msra.mxu0 %v2264
        %5129 = vmatpush.msra.mxu0 %v2263
        %5130 = vmatpush.msra.mxu0 %v2262
        %5131 = vmatpush.msra.mxu0 %v2261
        %5132 = vmatpush.msra.mxu0 %v2260
        %5133 = vmatpush.msra.mxu0 %v2259
        %5134 = vmatpush.msra.mxu0 %v2258
        %5135 = vmatpush.msra.mxu0 %v2257
        %5136 = vmatpush.msra.mxu0 %v2256
        %5137 = vmatmul.f32.gmra.mxu0 %v2509
        %v5138 = vpop.f32.mrf.mxu0
        %v5139 = vadd.f32 %v5119, %v5138
        %5140 = vdwg.mxu0
        %5141 = vmatpush.msra.mxu0 %v2287
        %5142 = vmatpush.msra.mxu0 %v2286
        %5143 = vmatpush.msra.mxu0 %v2285
        %5144 = vmatpush.msra.mxu0 %v2284
        %5145 = vmatpush.msra.mxu0 %v2283
        %5146 = vmatpush.msra.mxu0 %v2282
        %5147 = vmatpush.msra.mxu0 %v2281
        %5148 = vmatpush.msra.mxu0 %v2280
        %5149 = vmatpush.msra.mxu0 %v2279
        %5150 = vmatpush.msra.mxu0 %v2278
        %5151 = vmatpush.msra.mxu0 %v2277
        %5152 = vmatpush.msra.mxu0 %v2276
        %5153 = vmatpush.msra.mxu0 %v2275
        %5154 = vmatpush.msra.mxu0 %v2274
        %5155 = vmatpush.msra.mxu0 %v2273
        %5156 = vmatpush.msra.mxu0 %v2272
        %5157 = vmatmul.f32.gmra.mxu0 %v2510
        %v5158 = vpop.f32.mrf.mxu0
        %v5159 = vadd.f32 %v5139, %v5158
        %5160 = vdwg.mxu0
        %5161 = vmatpush.msra.mxu0 %v2303
        %5162 = vmatpush.msra.mxu0 %v2302
        %5163 = vmatpush.msra.mxu0 %v2301
        %5164 = vmatpush.msra.mxu0 %v2300
        %5165 = vmatpush.msra.mxu0 %v2299
        %5166 = vmatpush.msra.mxu0 %v2298
        %5167 = vmatpush.msra.mxu0 %v2297
        %5168 = vmatpush.msra.mxu0 %v2296
        %5169 = vmatpush.msra.mxu0 %v2295
        %5170 = vmatpush.msra.mxu0 %v2294
        %5171 = vmatpush.msra.mxu0 %v2293
        %5172 = vmatpush.msra.mxu0 %v2292
        %5173 = vmatpush.msra.mxu0 %v2291
        %5174 = vmatpush.msra.mxu0 %v2290
        %5175 = vmatpush.msra.mxu0 %v2289
        %5176 = vmatpush.msra.mxu0 %v2288
        %5177 = vmatmul.f32.gmra.mxu0 %v2511
        %v5178 = vpop.f32.mrf.mxu0
        %v5179 = vadd.f32 %v5159, %v5178
        %5180 = vdwg.mxu0
        %5181 = vmatpush.msra.mxu0 %v2319
        %5182 = vmatpush.msra.mxu0 %v2318
        %5183 = vmatpush.msra.mxu0 %v2317
        %5184 = vmatpush.msra.mxu0 %v2316
        %5185 = vmatpush.msra.mxu0 %v2315
        %5186 = vmatpush.msra.mxu0 %v2314
        %5187 = vmatpush.msra.mxu0 %v2313
        %5188 = vmatpush.msra.mxu0 %v2312
        %5189 = vmatpush.msra.mxu0 %v2311
        %5190 = vmatpush.msra.mxu0 %v2310
        %5191 = vmatpush.msra.mxu0 %v2309
        %5192 = vmatpush.msra.mxu0 %v2308
        %5193 = vmatpush.msra.mxu0 %v2307
        %5194 = vmatpush.msra.mxu0 %v2306
        %5195 = vmatpush.msra.mxu0 %v2305
        %5196 = vmatpush.msra.mxu0 %v2304
        %5197 = vmatmul.f32.gmra.mxu0 %v2512
        %v5198 = vpop.f32.mrf.mxu0
        %v5199 = vadd.f32 %v5179, %v5198
        %5200 = vdwg.mxu0
        %v5201 = vadd.f32 %v239, %v5199
        %5202 = vst [vmem:[#allocation2] sm:$0x3] %v5201
        %p5203 = scmp.eq.s32.totalorder %s27, 1
        // Predicated region
        $region41: #{tpu_custom_call.1} parent=27 // pred_check
          %p5204 = pneg %p5203
        $region42: #{tpu_custom_call.1} parent=27 // pred_check_branch
          %5206 = sbr.rel (%p5204) target = $region44
        $region43: #{tpu_custom_call.1} parent=27 // pred_region
          %v5207 = vld [vmem:[#allocation2] sm:$0x3]
          %5208 = vst [vmem:[%s227] sm:$0x3] %v5207
        $region44: #{tpu_custom_call.1} parent=27 // pred_fallthru
          _
        %s5209 = sand.u32 %s102, 1
        %s5210 = scalar_lea.sflag [#allocation5], %s5209
        %s5211 = sand.u32 %s102, 1
        %s5212 = smul.addr %s5211, 2
        %s5213 = scalar_lea.vmem [#allocation8], %s5212
        // Predicated region
        $region45: #{tpu_custom_call.1} parent=27 // pred_check
          %p5214 = pneg %p112
        $region46: #{tpu_custom_call.1} parent=27 // pred_check_branch
          %5216 = sbr.rel (%p5214) target = $region48
        $region47: #{tpu_custom_call.1} parent=27 // pred_region
          %5218 = vsyncadd %s5210, 0
          %s5219 = smul.addr %s26, 2
          %s5220 = scalar_lea.hbm %s2, %s5219
          %s5222 = sshll.u32 %s5213, 4
          %s5223 = int_to_ptr.vmem [resolvable:$true] %s5222
          %s5224 = sshll.u32 %s5220, 4
          %s5225 = int_to_ptr.hbm [resolvable:$true] %s5224
          %5227 = dma.vmem_to_hbm [thread:$0]  %s5223, 32, %s5225, %s5210
        $region48: #{tpu_custom_call.1} parent=27 // pred_fallthru
          _
      $region28: #{tpu_custom_call.1} parent=5 // pred_fallthru
        _
      %p5228 = scmp.le.s32.totalorder 2, %s17
      // Predicated region
      $region49: #{tpu_custom_call.1} parent=5 // pred_check
        %p5229 = pneg %p5228
      $region50: #{tpu_custom_call.1} parent=5 // pred_check_branch
        %5231 = sbr.rel (%p5229) target = $region52
      $region51: #{tpu_custom_call.1} parent=5 // pred_region
        %s5232 = ssub.s32 %s17, 2
        // Predicated region
        $region53: #{tpu_custom_call.1} parent=51 // pred_check
          %p5233 = pneg %p118
        $region54: #{tpu_custom_call.1} parent=51 // pred_check_branch
          %5235 = sbr.rel (%p5233) target = $region56
        $region55: #{tpu_custom_call.1} parent=51 // pred_region
          %s5236 = sand.u32 %s103, 1
          %s5237 = scalar_lea.sflag [#allocation5], %s5236
          %s5238 = sand.u32 %s103, 1
          %s5239 = smul.addr %s5238, 2
          %s5240 = scalar_lea.vmem [#allocation8], %s5239
          %5242 = dma.done %s5237, 32
        $region56: #{tpu_custom_call.1} parent=51 // pred_fallthru
          _
      $region52: #{tpu_custom_call.1} parent=5 // pred_fallthru
        _
    $region6: #{tpu_custom_call.1} parent=1 // loop_footer
      %s21 = sadd.s32 1, %s17
    $region7: #{tpu_custom_call.1} parent=1 // loop_footer_branch
      %16 = sbr.rel target = $region3
    $region8: #{tpu_custom_call.1} parent=1 // loop_exit
      _
    %5243 = vsyncpa [#allocation4], 1
    %s5244 = scalar_lea.sflag [#allocation4], 1
    %5245 = vsyncpa %s5244, 1
    %5246 = vsyncpa [#allocation7], 1
    %s5247 = scalar_lea.sflag [#allocation7], 1
    %5248 = vsyncpa %s5247, 1
    %5249 = vsyncpa [#allocation5], 1
    %s5250 = scalar_lea.sflag [#allocation5], 1
    %5251 = vsyncpa %s5250, 1

</llo_original>
